<compile_context>
chip_gen: v5e
topology: v5e:2x2
jax: 0.10.0
libtpu: 0.0.40
codegen_flags: <defaults>
</compile_context>

<pallas_src>
import functools
import math

import numpy as np
import jax
import jax.numpy as jnp
from jax.experimental import pallas as pl
from jax.experimental.pallas import tpu as pltpu


def _round_up(a, b):
    return (a + b - 1) // b * b


def _pick_tile(M, tile_m):
    # Big tiles amortize per-step overhead; keep >= 2 grid steps when possible
    # so a "parallel" 1-D grid can be sharded across both v7x TensorCores.
    half = max(8, _round_up((M + 1) // 2, 8))
    return min(tile_m, half, _round_up(M, 8))


# ---------------------------------------------------------------------------
# Kernel 1: fused Q/K/V projection (three Linear layers over the feature dim)
# ---------------------------------------------------------------------------
def _qkv_kernel(x_ref, wq_ref, wk_ref, wv_ref, bq_ref, bk_ref, bv_ref,
                q_ref, k_ref, v_ref):
    x = x_ref[...].astype(jnp.float32)
    q_ref[...] = (jnp.dot(x, wq_ref[...], preferred_element_type=jnp.float32)
                  + bq_ref[...]).astype(q_ref.dtype)
    k_ref[...] = (jnp.dot(x, wk_ref[...], preferred_element_type=jnp.float32)
                  + bk_ref[...]).astype(k_ref.dtype)
    v_ref[...] = (jnp.dot(x, wv_ref[...], preferred_element_type=jnp.float32)
                  + bv_ref[...]).astype(v_ref.dtype)


def qkv_projection(x2, wq, bq, wk, bk, wv, bv, *, tile_m=1024):
    M, F = x2.shape
    tile_m = _pick_tile(M, tile_m)
    Mp = _round_up(M, tile_m)
    if Mp != M:
        x2 = jnp.pad(x2, ((0, Mp - M), (0, 0)))
    grid = (Mp // tile_m,)

    row_spec = pl.BlockSpec((tile_m, F), lambda i: (i, 0))
    w_spec = pl.BlockSpec((F, F), lambda i: (0, 0))
    b_spec = pl.BlockSpec((1, F), lambda i: (0, 0))
    cost = pl.CostEstimate(
        flops=2 * Mp * F * F * 3,
        transcendentals=0,
        bytes_accessed=4 * Mp * F * 4 + 3 * F * F * 4 + 3 * F * 4)

    outs = pl.pallas_call(
        _qkv_kernel,
        out_shape=[jax.ShapeDtypeStruct((Mp, F), x2.dtype) for _ in range(3)],
        grid=grid,
        in_specs=[row_spec, w_spec, w_spec, w_spec, b_spec, b_spec, b_spec],
        out_specs=[row_spec, row_spec, row_spec],
        compiler_params=pltpu.CompilerParams(dimension_semantics=("parallel",)),
        cost_estimate=cost,
    )(x2, wq, wk, wv, bq.reshape(1, F), bk.reshape(1, F), bv.reshape(1, F))
    q, k, v = outs
    if Mp != M:
        q, k, v = q[:M], k[:M], v[:M]
    return q, k, v


# ---------------------------------------------------------------------------
# Kernel 2: sampled attention core, one (head*batch) slice per grid step.
#   scores = Q_reduce @ K^T / sqrt(d); attn = softmax(scores)
#   out_s  = attn @ V
#   cp[n]  = argmax_s attn[s, n]; value[n] = out_s[cp[n]]  (one-hot matmul)
# ---------------------------------------------------------------------------
def _attn_core_kernel(qr_ref, k_ref, v_ref, o_ref, *, scale):
    q = qr_ref[0].astype(jnp.float32)      # (T, S, d)
    k = k_ref[0].astype(jnp.float32)       # (T, N, d)
    v = v_ref[0].astype(jnp.float32)       # (T, N, d)
    T, S, _ = q.shape
    N = k.shape[1]

    s = jnp.einsum('tsd,tnd->tsn', q, k,
                   preferred_element_type=jnp.float32) * scale        # (T,S,N)
    m = jnp.max(s, axis=-1, keepdims=True)
    p = jnp.exp(s - m)
    attn = p / jnp.sum(p, axis=-1, keepdims=True)                     # softmax over keys
    out_s = jnp.einsum('tsn,tnd->tsd', attn, v,
                       preferred_element_type=jnp.float32)            # (T,S,d)

    # argmax over the sampled-query axis (first max index), as a one-hot gather
    col_max = jnp.max(attn, axis=1, keepdims=True)                    # (T,1,N)
    iota_s = jax.lax.broadcasted_iota(jnp.float32, (T, S, N), 1)
    first = jnp.min(jnp.where(attn == col_max, iota_s, float(S)), axis=1)   # (T,N)
    sel = jax.lax.broadcasted_iota(jnp.float32, (T, N, S), 2)
    onehot = (sel == first[:, :, None]).astype(jnp.float32)           # (T,N,S)
    o_ref[0] = jnp.einsum('tns,tsd->tnd', onehot, out_s,
                          preferred_element_type=jnp.float32).astype(o_ref.dtype)


def sparse_attention_core(q_reduce, k, v, *, scale):
    Bh, T, S, d = q_reduce.shape
    N = k.shape[2]
    kernel = functools.partial(_attn_core_kernel, scale=scale)
    cost = pl.CostEstimate(
        flops=2 * Bh * T * (2 * S * N * d + N * S * d),
        transcendentals=Bh * T * S * N,
        bytes_accessed=4 * (q_reduce.size + k.size + v.size + Bh * T * N * d))
    return pl.pallas_call(
        kernel,
        out_shape=jax.ShapeDtypeStruct((Bh, T, N, d), q_reduce.dtype),
        grid=(Bh,),
        in_specs=[pl.BlockSpec((1, T, S, d), lambda i: (i, 0, 0, 0)),
                  pl.BlockSpec((1, T, N, d), lambda i: (i, 0, 0, 0)),
                  pl.BlockSpec((1, T, N, d), lambda i: (i, 0, 0, 0))],
        out_specs=pl.BlockSpec((1, T, N, d), lambda i: (i, 0, 0, 0)),
        compiler_params=pltpu.CompilerParams(dimension_semantics=("parallel",)),
        cost_estimate=cost,
    )(q_reduce, k, v)


# ---------------------------------------------------------------------------
# Kernel 3: fused output stack
#   ofc Linear -> affine LayerNorm -> (Linear -> ReLU -> Linear) + residual
#   -> non-affine LayerNorm        (FeedForward([F,F,F], res_ln=True))
# ---------------------------------------------------------------------------
def _out_ffn_kernel(x_ref, wo_ref, bo_ref, g_ref, be_ref,
                    w1_ref, b1_ref, w2_ref, b2_ref, o_ref, *, eps):
    x = x_ref[...].astype(jnp.float32)
    v = jnp.dot(x, wo_ref[...], preferred_element_type=jnp.float32) + bo_ref[...]
    # affine LayerNorm (single-pass statistics)
    mu = jnp.mean(v, axis=-1, keepdims=True)
    var = jnp.mean(v * v, axis=-1, keepdims=True) - mu * mu
    v = (v - mu) * jax.lax.rsqrt(var + eps) * g_ref[...] + be_ref[...]
    # FeedForward([F,F,F], res_ln=True)
    h = jnp.maximum(jnp.dot(v, w1_ref[...], preferred_element_type=jnp.float32)
                    + b1_ref[...], 0.0)
    h = jnp.dot(h, w2_ref[...], preferred_element_type=jnp.float32) + b2_ref[...]
    h = h + v
    mu2 = jnp.mean(h, axis=-1, keepdims=True)
    var2 = jnp.mean(h * h, axis=-1, keepdims=True) - mu2 * mu2
    o_ref[...] = ((h - mu2) * jax.lax.rsqrt(var2 + eps)).astype(o_ref.dtype)


def out_ffn(x2, wo, bo, gamma, beta, w1, b1, w2, b2, *, eps=1e-5, tile_m=1024):
    M, F = x2.shape
    tile_m = _pick_tile(M, tile_m)
    Mp = _round_up(M, tile_m)
    if Mp != M:
        x2 = jnp.pad(x2, ((0, Mp - M), (0, 0)))
    grid = (Mp // tile_m,)

    row_spec = pl.BlockSpec((tile_m, F), lambda i: (i, 0))
    w_spec = pl.BlockSpec((F, F), lambda i: (0, 0))
    vec_spec = pl.BlockSpec((1, F), lambda i: (0, 0))
    kernel = functools.partial(_out_ffn_kernel, eps=eps)
    cost = pl.CostEstimate(
        flops=2 * Mp * F * F * 3 + 12 * Mp * F,
        transcendentals=2 * Mp,
        bytes_accessed=2 * Mp * F * 4 + 3 * F * F * 4 + 6 * F * 4)

    out = pl.pallas_call(
        kernel,
        out_shape=jax.ShapeDtypeStruct((Mp, F), x2.dtype),
        grid=grid,
        in_specs=[row_spec, w_spec, vec_spec, vec_spec, vec_spec,
                  w_spec, vec_spec, w_spec, vec_spec],
        out_specs=row_spec,
        compiler_params=pltpu.CompilerParams(dimension_semantics=("parallel",)),
        cost_estimate=cost,
    )(x2, wo, bo.reshape(1, F), gamma.reshape(1, F), beta.reshape(1, F),
      w1, b1.reshape(1, F), w2, b2.reshape(1, F))
    if Mp != M:
        out = out[:M]
    return out


# ---------------------------------------------------------------------------
# Full Sparse_Spatial_Attention forward
# ---------------------------------------------------------------------------
def sparse_spatial_attention_forward(x, spa_eigvalue, spa_eigvec,
                                     tem_eigvalue, tem_eigvec, params, *,
                                     heads, dims, samples, localadj,
                                     eps=1e-5, tile_m=1024):
    B, T, N, F = x.shape
    h, d = heads, dims
    assert F == h * d

    # spectral positional term: eigvec @ diag(eigvalue)
    tmp = spa_eigvec * spa_eigvalue[None, :] + tem_eigvec * tem_eigvalue[None, :]
    x_ = x + tmp[None, None]

    # fused Q/K/V projections (Pallas)
    q2, k2, v2 = qkv_projection(
        x_.reshape(-1, F),
        params['wq'], params['bq'], params['wk'], params['bk'],
        params['wv'], params['bv'], tile_m=tile_m)
    Q = q2.reshape(B, T, N, F)
    K = k2.reshape(B, T, N, F)
    V = v2.reshape(B, T, N, F)

    def split_heads(a):  # (B,T,N,h*d) -> (h*B,T,N,d), head index slow (torch.cat(split,0))
        return a.reshape(B, T, N, h, d).transpose(3, 0, 1, 2, 4).reshape(h * B, T, N, d)

    Q, K, V = split_heads(Q), split_heads(K), split_heads(V)

    # --- query sampling ---
    # TODO(synk): localadj gather + proj(n_la->1) + top-k kept in plain JAX; data-dependent
    # top-k/gather has no clean Pallas TPU equivalent.
    K_sample = K[:, :, localadj, :]                                  # (hB,T,N,n_la,d)
    qk_sample = jnp.einsum('btnd,btnjd->btnj', Q, K_sample)
    m_score = jnp.einsum('btnj,j->btn', qk_sample, params['w_proj']) + params['b_proj']
    n_sample = max(1, int(samples * math.log2(N)))
    _, m_top = jax.lax.top_k(m_score, n_sample)                      # (hB,T,S)
    q_reduce = jnp.take_along_axis(Q, m_top[..., None], axis=2)      # (hB,T,S,d)

    # --- sampled attention core (Pallas) ---
    value_nodes = sparse_attention_core(q_reduce, K, V, scale=1.0 / math.sqrt(d))

    # merge heads back: (h*B,T,N,d) -> (B,T,N,h*d)
    value = value_nodes.reshape(h, B, T, N, d).transpose(1, 2, 3, 0, 4).reshape(B, T, N, F)

    # --- ofc + LayerNorm + FeedForward([F,F,F], res_ln=True) (fused Pallas) ---
    out2 = out_ffn(value.reshape(-1, F),
                   params['wo'], params['bo'], params['ln_g'], params['ln_b'],
                   params['wf1'], params['bf1'], params['wf2'], params['bf2'],
                   eps=eps, tile_m=tile_m)
    return out2.reshape(B, T, N, F)


# ---------------------------------------------------------------------------
# Pure-JAX reference (mirrors the PyTorch module)
# ---------------------------------------------------------------------------
def _layernorm(x, eps=1e-5, gamma=None, beta=None):
    mu = jnp.mean(x, -1, keepdims=True)
    var = jnp.mean((x - mu) ** 2, -1, keepdims=True)
    y = (x - mu) / jnp.sqrt(var + eps)
    if gamma is not None:
        y = y * gamma + beta
    return y


def sparse_spatial_attention_ref(x, spa_eigvalue, spa_eigvec, tem_eigvalue, tem_eigvec,
                                 params, *, heads, dims, samples, localadj, eps=1e-5):
    B, T, N, F = x.shape
    h, d = heads, dims
    tmp = spa_eigvec * spa_eigvalue[None, :] + tem_eigvec * tem_eigvalue[None, :]
    x_ = x + tmp[None, None]
    Q = x_ @ params['wq'] + params['bq']
    K = x_ @ params['wk'] + params['bk']
    V = x_ @ params['wv'] + params['bv']

    def split_heads(a):
        return a.reshape(B, T, N, h, d).transpose(3, 0, 1, 2, 4).reshape(h * B, T, N, d)

    Q, K, V = split_heads(Q), split_heads(K), split_heads(V)
    K_sample = K[:, :, localadj, :]
    qk_sample = jnp.einsum('btnd,btnjd->btnj', Q, K_sample)
    m_score = jnp.einsum('btnj,j->btn', qk_sample, params['w_proj']) + params['b_proj']
    n_sample = max(1, int(samples * math.log2(N)))
    _, m_top = jax.lax.top_k(m_score, n_sample)
    q_reduce = jnp.take_along_axis(Q, m_top[..., None], axis=2)
    scores = jnp.einsum('btsd,btnd->btsn', q_reduce, K) / math.sqrt(d)
    attn = jax.nn.softmax(scores, axis=-1)
    value_s = jnp.einsum('btsn,btnd->btsd', attn, V)
    cp = jnp.argmax(attn, axis=-2)                                   # (hB,T,N)
    value_nodes = jnp.take_along_axis(value_s, cp[..., None], axis=2)
    value = value_nodes.reshape(h, B, T, N, d).transpose(1, 2, 3, 0, 4).reshape(B, T, N, F)
    v1 = value @ params['wo'] + params['bo']
    v1 = _layernorm(v1, eps, params['ln_g'], params['ln_b'])
    hh = jnp.maximum(v1 @ params['wf1'] + params['bf1'], 0.0)
    hh = hh @ params['wf2'] + params['bf2']
    hh = hh + v1
    return _layernorm(hh, eps)


if __name__ == "__main__":
    jax.config.update("jax_default_matmul_precision", "highest")

    heads, dims, samples = 4, 32, 1
    F = heads * dims            # 128 -> lane-dense feature width
    B, T, N = 2, 8, 16
    n_la = 4                    # neighbors per node in localadj

    key = jax.random.PRNGKey(0)
    keys = jax.random.split(key, 16)
    kit = iter(keys)

    def linear_init(k, fan_in, fan_out):
        k1, k2 = jax.random.split(k)
        bound = 1.0 / np.sqrt(fan_in)
        w = jax.random.uniform(k1, (fan_in, fan_out), jnp.float32, -bound, bound)
        b = jax.random.uniform(k2, (fan_out,), jnp.float32, -bound, bound)
        return w, b

    params = {}
    for name in ('q', 'k', 'v', 'o'):
        w, b = linear_init(next(kit), F, F)
        params[f'w{name}'] = w
        params[f'b{name}'] = b
    params['ln_g'] = 1.0 + 0.1 * jax.random.normal(next(kit), (F,), jnp.float32)
    params['ln_b'] = 0.1 * jax.random.normal(next(kit), (F,), jnp.float32)
    params['wf1'], params['bf1'] = linear_init(next(kit), F, F)
    params['wf2'], params['bf2'] = linear_init(next(kit), F, F)
    wp, bp = linear_init(next(kit), n_la, 1)
    params['w_proj'] = wp[:, 0]
    params['b_proj'] = bp[0]

    x = jax.random.normal(next(kit), (B, T, N, F), jnp.float32)
    spa_eigvalue = 0.1 * jax.random.normal(next(kit), (F,), jnp.float32)
    tem_eigvalue = 0.1 * jax.random.normal(next(kit), (F,), jnp.float32)
    spa_eigvec = jax.random.normal(next(kit), (N, F), jnp.float32)
    tem_eigvec = jax.random.normal(next(kit), (N, F), jnp.float32)
    localadj = jnp.asarray(
        (np.arange(N)[:, None] + np.arange(n_la)[None, :]) % N, dtype=jnp.int32)

    y = sparse_spatial_attention_forward(
        x, spa_eigvalue, spa_eigvec, tem_eigvalue, tem_eigvec, params,
        heads=heads, dims=dims, samples=samples, localadj=localadj)
    y = jax.block_until_ready(y)

    y_ref = sparse_spatial_attention_ref(
        x, spa_eigvalue, spa_eigvec, tem_eigvalue, tem_eigvec, params,
        heads=heads, dims=dims, samples=samples, localadj=localadj)
    y_ref = jax.block_until_ready(y_ref)

    assert y.shape == y_ref.shape == (B, T, N, F)
    assert bool(jnp.all(jnp.isfinite(y)))
    # Discrete top-k / argmax selections may flip on numerically near-tied scores,
    # which would change whole 128-wide rows; require the overwhelming majority of
    # elements to match tightly instead of a brittle exact allclose.
    close = jnp.abs(y - y_ref) <= (1e-3 + 1e-3 * jnp.abs(y_ref))
    frac = float(jnp.mean(close.astype(jnp.float32)))
    if frac < 0.99:
        raise AssertionError(f"only {frac:.4f} of outputs match the reference")

    print("KERNEL_OK")
</pallas_src>

<mosaic_0001>
module attributes {stable_mosaic.version = 11 : i64} {
  func.func @_qkv_kernel(%arg0: i32, %arg1: memref<128x128xf32, #tpu.memory_space<vmem>>, %arg2: memref<128x128xf32, #tpu.memory_space<vmem>>, %arg3: memref<128x128xf32, #tpu.memory_space<vmem>>, %arg4: memref<128x128xf32, #tpu.memory_space<vmem>>, %arg5: memref<1x128xf32, #tpu.memory_space<vmem>>, %arg6: memref<1x128xf32, #tpu.memory_space<vmem>>, %arg7: memref<1x128xf32, #tpu.memory_space<vmem>>, %arg8: memref<128x128xf32, #tpu.memory_space<vmem>>, %arg9: memref<128x128xf32, #tpu.memory_space<vmem>>, %arg10: memref<128x128xf32, #tpu.memory_space<vmem>>) attributes {dimension_semantics = [#tpu.dimension_semantics<parallel>], iteration_bounds = array<i64: 2>, scalar_prefetch = 0 : i64, scratch_operands = 0 : i64, tpu.core_type = #tpu.core_type<tc>, window_params = [{transform_indices = @transform_0, window_bounds = array<i64: 128, 128>}, {pipeline_mode = #tpu.pipeline_mode<synchronous>, transform_indices = @transform_1, window_bounds = array<i64: 128, 128>}, {pipeline_mode = #tpu.pipeline_mode<synchronous>, transform_indices = @transform_2, window_bounds = array<i64: 128, 128>}, {pipeline_mode = #tpu.pipeline_mode<synchronous>, transform_indices = @transform_3, window_bounds = array<i64: 128, 128>}, {pipeline_mode = #tpu.pipeline_mode<synchronous>, transform_indices = @transform_4, window_bounds = array<i64: 1, 128>}, {pipeline_mode = #tpu.pipeline_mode<synchronous>, transform_indices = @transform_5, window_bounds = array<i64: 1, 128>}, {pipeline_mode = #tpu.pipeline_mode<synchronous>, transform_indices = @transform_6, window_bounds = array<i64: 1, 128>}, {transform_indices = @transform_7, window_bounds = array<i64: 128, 128>}, {transform_indices = @transform_8, window_bounds = array<i64: 128, 128>}, {transform_indices = @transform_9, window_bounds = array<i64: 128, 128>}]} {
    %c0 = arith.constant 0 : index
    %c0_0 = arith.constant 0 : index
    %0 = vector.load %arg1[%c0, %c0_0] : memref<128x128xf32, #tpu.memory_space<vmem>>, vector<128x128xf32>
    %c0_1 = arith.constant 0 : index
    %c0_2 = arith.constant 0 : index
    %1 = vector.load %arg2[%c0_1, %c0_2] : memref<128x128xf32, #tpu.memory_space<vmem>>, vector<128x128xf32>
    %cst = arith.constant dense<0.000000e+00> : vector<128x128xf32>
    %2 = tpu.matmul %0, %1, %cst {dimension_numbers = #tpu.dot_dimension_numbers<[1], [0], [0], [1], [0, 0, 1, 1], [], []>, precision = #tpu.contract_precision<fp32>} : vector<128x128xf32>, vector<128x128xf32>, vector<128x128xf32> -> vector<128x128xf32>
    %c0_3 = arith.constant 0 : index
    %c0_4 = arith.constant 0 : index
    %3 = vector.load %arg5[%c0_3, %c0_4] : memref<1x128xf32, #tpu.memory_space<vmem>>, vector<1x128xf32>
    %4 = vector.broadcast %3 : vector<1x128xf32> to vector<128x128xf32>
    %5 = arith.addf %2, %4 : vector<128x128xf32>
    %c0_5 = arith.constant 0 : index
    %c0_6 = arith.constant 0 : index
    %6 = vector.load %arg8[%c0_5, %c0_6] : memref<128x128xf32, #tpu.memory_space<vmem>>, vector<128x128xf32>
    tpu.vector_store %arg8[%c0_5, %c0_6], %5 {strides = array<i32>} : memref<128x128xf32, #tpu.memory_space<vmem>>, vector<128x128xf32>,
    %c0_7 = arith.constant 0 : index
    %c0_8 = arith.constant 0 : index
    %7 = vector.load %arg3[%c0_7, %c0_8] : memref<128x128xf32, #tpu.memory_space<vmem>>, vector<128x128xf32>
    %cst_9 = arith.constant dense<0.000000e+00> : vector<128x128xf32>
    %8 = tpu.matmul %0, %7, %cst_9 {dimension_numbers = #tpu.dot_dimension_numbers<[1], [0], [0], [1], [0, 0, 1, 1], [], []>, precision = #tpu.contract_precision<fp32>} : vector<128x128xf32>, vector<128x128xf32>, vector<128x128xf32> -> vector<128x128xf32>
    %c0_10 = arith.constant 0 : index
    %c0_11 = arith.constant 0 : index
    %9 = vector.load %arg6[%c0_10, %c0_11] : memref<1x128xf32, #tpu.memory_space<vmem>>, vector<1x128xf32>
    %10 = vector.broadcast %9 : vector<1x128xf32> to vector<128x128xf32>
    %11 = arith.addf %8, %10 : vector<128x128xf32>
    %c0_12 = arith.constant 0 : index
    %c0_13 = arith.constant 0 : index
    %12 = vector.load %arg9[%c0_12, %c0_13] : memref<128x128xf32, #tpu.memory_space<vmem>>, vector<128x128xf32>
    tpu.vector_store %arg9[%c0_12, %c0_13], %11 {strides = array<i32>} : memref<128x128xf32, #tpu.memory_space<vmem>>, vector<128x128xf32>,
    %c0_14 = arith.constant 0 : index
    %c0_15 = arith.constant 0 : index
    %13 = vector.load %arg4[%c0_14, %c0_15] : memref<128x128xf32, #tpu.memory_space<vmem>>, vector<128x128xf32>
    %cst_16 = arith.constant dense<0.000000e+00> : vector<128x128xf32>
    %14 = tpu.matmul %0, %13, %cst_16 {dimension_numbers = #tpu.dot_dimension_numbers<[1], [0], [0], [1], [0, 0, 1, 1], [], []>, precision = #tpu.contract_precision<fp32>} : vector<128x128xf32>, vector<128x128xf32>, vector<128x128xf32> -> vector<128x128xf32>
    %c0_17 = arith.constant 0 : index
    %c0_18 = arith.constant 0 : index
    %15 = vector.load %arg7[%c0_17, %c0_18] : memref<1x128xf32, #tpu.memory_space<vmem>>, vector<1x128xf32>
    %16 = vector.broadcast %15 : vector<1x128xf32> to vector<128x128xf32>
    %17 = arith.addf %14, %16 : vector<128x128xf32>
    %c0_19 = arith.constant 0 : index
    %c0_20 = arith.constant 0 : index
    %18 = vector.load %arg10[%c0_19, %c0_20] : memref<128x128xf32, #tpu.memory_space<vmem>>, vector<128x128xf32>
    tpu.vector_store %arg10[%c0_19, %c0_20], %17 {strides = array<i32>} : memref<128x128xf32, #tpu.memory_space<vmem>>, vector<128x128xf32>,
    return
  }
  func.func @transform_0(%arg0: i32) -> (i32, i32) {
    %c0_i32 = arith.constant 0 : i32
    %c0_i32_0 = arith.constant 0 : i32
    return %arg0, %c0_i32 : i32, i32
  }
  func.func @transform_1(%arg0: i32) -> (i32, i32) {
    %c0_i32 = arith.constant 0 : i32
    %c0_i32_0 = arith.constant 0 : i32
    %c0_i32_1 = arith.constant 0 : i32
    return %c0_i32, %c0_i32_0 : i32, i32
  }
  func.func @transform_2(%arg0: i32) -> (i32, i32) {
    %c0_i32 = arith.constant 0 : i32
    %c0_i32_0 = arith.constant 0 : i32
    %c0_i32_1 = arith.constant 0 : i32
    return %c0_i32, %c0_i32_0 : i32, i32
  }
  func.func @transform_3(%arg0: i32) -> (i32, i32) {
    %c0_i32 = arith.constant 0 : i32
    %c0_i32_0 = arith.constant 0 : i32
    %c0_i32_1 = arith.constant 0 : i32
    return %c0_i32, %c0_i32_0 : i32, i32
  }
  func.func @transform_4(%arg0: i32) -> (i32, i32) {
    %c0_i32 = arith.constant 0 : i32
    %c0_i32_0 = arith.constant 0 : i32
    %c0_i32_1 = arith.constant 0 : i32
    return %c0_i32, %c0_i32_0 : i32, i32
  }
  func.func @transform_5(%arg0: i32) -> (i32, i32) {
    %c0_i32 = arith.constant 0 : i32
    %c0_i32_0 = arith.constant 0 : i32
    %c0_i32_1 = arith.constant 0 : i32
    return %c0_i32, %c0_i32_0 : i32, i32
  }
  func.func @transform_6(%arg0: i32) -> (i32, i32) {
    %c0_i32 = arith.constant 0 : i32
    %c0_i32_0 = arith.constant 0 : i32
    %c0_i32_1 = arith.constant 0 : i32
    return %c0_i32, %c0_i32_0 : i32, i32
  }
  func.func @transform_7(%arg0: i32) -> (i32, i32) {
    %c0_i32 = arith.constant 0 : i32
    %c0_i32_0 = arith.constant 0 : i32
    return %arg0, %c0_i32 : i32, i32
  }
  func.func @transform_8(%arg0: i32) -> (i32, i32) {
    %c0_i32 = arith.constant 0 : i32
    %c0_i32_0 = arith.constant 0 : i32
    return %arg0, %c0_i32 : i32, i32
  }
  func.func @transform_9(%arg0: i32) -> (i32, i32) {
    %c0_i32 = arith.constant 0 : i32
    %c0_i32_0 = arith.constant 0 : i32
    return %arg0, %c0_i32 : i32, i32
  }
}

</mosaic_0001>

<llo_original>
// kernel: tpu_custom_call.1
$region0: #{tpu_custom_call.1}
  #allocation0 [shape = 'u32[]', space=smem, size = 0x4, offset = 0x4, fixed_abs, tag = 'smem constant byte address 0x4 - core index']
  #allocation1 [shape = 'u32[72,128]{1,0:T(1,128)}', space=vmem, size = 0x9000, scoped, tag = 'internal scratch']
  %s0 = inlined_call_operand.hbm [shape: f32[256,128], index: 0, kind: input, shape index: {}]
  %s1 = inlined_call_operand.hbm [shape: f32[128,128], index: 1, kind: input, shape index: {}]
  %s2 = inlined_call_operand.hbm [shape: f32[128,128], index: 2, kind: input, shape index: {}]
  %s3 = inlined_call_operand.hbm [shape: f32[128,128], index: 3, kind: input, shape index: {}]
  %s4 = inlined_call_operand.vmem [shape: f32[1,128], index: 4, kind: input, shape index: {}]
  %s5 = inlined_call_operand.vmem [shape: f32[1,128], index: 5, kind: input, shape index: {}]
  %s6 = inlined_call_operand.vmem [shape: f32[1,128], index: 6, kind: input, shape index: {}]
  %s7 = inlined_call_operand.hbm [shape: f32[256,128], index: 7, kind: output, shape index: {0}]
  %s8 = inlined_call_operand.hbm [shape: f32[256,128], index: 8, kind: output, shape index: {1}]
  %s9 = inlined_call_operand.hbm [shape: f32[256,128], index: 9, kind: output, shape index: {2}]
  %10 = xla_tuple %s7, %s8, %s9
  %s11 = sld [smem:[#allocation0]]
  $region93: #{tpu_custom_call.1} parent=0
    _
  %s13 = ssub.s32 1, %s11
  %s14 = scalar_select 0, %s13, %s11
  $region1: #{tpu_custom_call.1} parent=0
    #allocation2 [shape = 'u8[131072]{0}', space=vmem, size = 0x20000, scoped, tag = 'input window, operand 0']
    #allocation3 [shape = 's32[2]{0}', space=sflag, size = 0x8, scoped, tag = 'scoped memory for tpu_custom_call.1']
    #allocation4 [shape = 's32[2]{0}', space=sflag, size = 0x8, scoped, tag = 'scoped memory for tpu_custom_call.1']
    #allocation5 [shape = 'u8[65536]{0}', space=vmem, size = 0x10000, scoped, tag = 'input window, operand 1, single buffered']
    #allocation6 [shape = 's32[1]{0}', space=sflag, size = 0x4, scoped, tag = 'scoped memory for tpu_custom_call.1']
    #allocation7 [shape = 'u8[65536]{0}', space=vmem, size = 0x10000, scoped, tag = 'input window, operand 2, single buffered']
    #allocation8 [shape = 'u8[65536]{0}', space=vmem, size = 0x10000, scoped, tag = 'input window, operand 3, single buffered']
    #allocation9 [shape = 's32[1]{0}', space=sflag, size = 0x4, scoped, tag = 'scoped memory for tpu_custom_call.1']
    #allocation10 [shape = 'u8[131072]{0}', space=vmem, size = 0x20000, scoped, tag = 'output window, operand 0']
    #allocation11 [shape = 'u8[131072]{0}', space=vmem, size = 0x20000, scoped, tag = 'output window, operand 1']
    #allocation12 [shape = 's32[2]{0}', space=sflag, size = 0x8, scoped, tag = 'scoped memory for tpu_custom_call.1']
    #allocation13 [shape = 'u8[131072]{0}', space=vmem, size = 0x20000, scoped, tag = 'output window, operand 2']
    %15 = vsyncpa [#allocation3], 0
    %s16 = scalar_lea.sflag [#allocation3], 1
    %17 = vsyncpa %s16, 0
    %18 = vsyncpa [#allocation6], 0
    %19 = vsyncpa [#allocation9], 0
    %20 = vsyncpa [#allocation4], 0
    %s21 = scalar_lea.sflag [#allocation4], 1
    %22 = vsyncpa %s21, 0
    %23 = vsyncpa [#allocation12], 0
    %s24 = scalar_lea.sflag [#allocation12], 1
    %25 = vsyncpa %s24, 0
    loop: start=0, step=1, limit=4
    $region2: #{tpu_custom_call.1} parent=1 // loop_pre_header
      _
    $region3: #{tpu_custom_call.1} parent=1 // loop_header
      %s27 = sphi 0, %s31
      %p28 = scmp.ge.s32.totalorder %s27, 4
      %s37 = sphi 0, %s39
      %s40 = sphi 0, %s37
      %s41 = sphi 0, %s40
      %s57 = sphi 0, %s41
      %s61 = sphi 0, %s61
      %s63 = sphi 0, %s61
      %s64 = sphi 0, %s63
      %s78 = sphi 0, %s64
      %s82 = sphi 0, %s82
      %s84 = sphi 0, %s82
      %s85 = sphi 0, %s84
      %s99 = sphi 0, %s85
      %s103 = sphi 0, %s103
      %s105 = sphi 0, %s103
      %s106 = sphi 0, %s105
      %s120 = sphi 0, %s106
      %s124 = sphi 0, %s124
      %s126 = sphi 0, %s124
      %s127 = sphi 0, %s126
      %s141 = sphi 0, %s127
      %s145 = sphi 0, %s145
      %s147 = sphi 0, %s145
      %s148 = sphi 0, %s147
      %s162 = sphi 0, %s148
      %s166 = sphi 0, %s166
      %s168 = sphi 0, %s166
      %s169 = sphi 0, %s168
      %s183 = sphi 0, %s169
      %s189 = sphi 0, %s191
      %s192 = sphi 0, %s189
      %s193 = sphi 0, %s192
      %s209 = sphi 0, %s193
      %s215 = sphi 0, %s217
      %s218 = sphi 0, %s215
      %s219 = sphi 0, %s218
      %s235 = sphi 0, %s219
      %s241 = sphi 0, %s243
      %s244 = sphi 0, %s241
      %s245 = sphi 0, %s244
      %s261 = sphi 0, %s245
    $region4: #{tpu_custom_call.1} parent=1 // loop_header_branch
      %30 = sbr.rel (%p28) target = $region8
    $region5: #{tpu_custom_call.1} parent=1 // loop_body
      %s32 = ssub.s32 %s27, 1
      %s33 = ssub.s32 %s27, 2
      %s34 = sadd.s32 %s27, 1
      %s35 = ssub.s32 %s27, %s34
      %p36 = scmp.eq.s32.totalorder %s35, 0
      %s38 = sadd.s32 %s37, 1
      %s39 = scalar_select %p36, %s37, %s38
      %p42 = pneg %p36
      %p43 = scmp.eq.s32.totalorder %s27, 1
      %p44 = por %p42, %p43
      %p45 = scmp.ne.s32.totalorder %s37, %s40
      %p46 = scmp.eq.s32.totalorder %s27, 0
      %p47 = por %p45, %p46
      %p48 = scmp.ne.s32.totalorder %s37, %s40
      %p49 = scmp.eq.s32.totalorder %s32, 1
      %p50 = por %p48, %p49
      %p51 = scmp.ne.s32.totalorder %s40, %s41
      %p52 = scmp.eq.s32.totalorder %s32, 0
      %p53 = por %p51, %p52
      %p54 = scmp.ne.s32.totalorder %s40, %s41
      %p55 = scmp.eq.s32.totalorder %s33, 1
      %p56 = por %p54, %p55
      %p58 = scmp.ne.s32.totalorder %s41, %s57
      %p59 = scmp.eq.s32.totalorder %s33, 0
      %p60 = por %p58, %p59
      %s62 = sadd.s32 %s61, 1
      %p65 = scmp.eq.s32.totalorder %s27, 1
      %p66 = scmp.ne.s32.totalorder %s61, %s63
      %p67 = scmp.eq.s32.totalorder %s27, 0
      %p68 = por %p66, %p67
      %p69 = scmp.ne.s32.totalorder %s61, %s63
      %p70 = scmp.eq.s32.totalorder %s32, 1
      %p71 = por %p69, %p70
      %p72 = scmp.ne.s32.totalorder %s63, %s64
      %p73 = scmp.eq.s32.totalorder %s32, 0
      %p74 = por %p72, %p73
      %p75 = scmp.ne.s32.totalorder %s63, %s64
      %p76 = scmp.eq.s32.totalorder %s33, 1
      %p77 = por %p75, %p76
      %p79 = scmp.ne.s32.totalorder %s64, %s78
      %p80 = scmp.eq.s32.totalorder %s33, 0
      %p81 = por %p79, %p80
      %s83 = sadd.s32 %s82, 1
      %p86 = scmp.eq.s32.totalorder %s27, 1
      %p87 = scmp.ne.s32.totalorder %s82, %s84
      %p88 = scmp.eq.s32.totalorder %s27, 0
      %p89 = por %p87, %p88
      %p90 = scmp.ne.s32.totalorder %s82, %s84
      %p91 = scmp.eq.s32.totalorder %s32, 1
      %p92 = por %p90, %p91
      %p93 = scmp.ne.s32.totalorder %s84, %s85
      %p94 = scmp.eq.s32.totalorder %s32, 0
      %p95 = por %p93, %p94
      %p96 = scmp.ne.s32.totalorder %s84, %s85
      %p97 = scmp.eq.s32.totalorder %s33, 1
      %p98 = por %p96, %p97
      %p100 = scmp.ne.s32.totalorder %s85, %s99
      %p101 = scmp.eq.s32.totalorder %s33, 0
      %p102 = por %p100, %p101
      %s104 = sadd.s32 %s103, 1
      %p107 = scmp.eq.s32.totalorder %s27, 1
      %p108 = scmp.ne.s32.totalorder %s103, %s105
      %p109 = scmp.eq.s32.totalorder %s27, 0
      %p110 = por %p108, %p109
      %p111 = scmp.ne.s32.totalorder %s103, %s105
      %p112 = scmp.eq.s32.totalorder %s32, 1
      %p113 = por %p111, %p112
      %p114 = scmp.ne.s32.totalorder %s105, %s106
      %p115 = scmp.eq.s32.totalorder %s32, 0
      %p116 = por %p114, %p115
      %p117 = scmp.ne.s32.totalorder %s105, %s106
      %p118 = scmp.eq.s32.totalorder %s33, 1
      %p119 = por %p117, %p118
      %p121 = scmp.ne.s32.totalorder %s106, %s120
      %p122 = scmp.eq.s32.totalorder %s33, 0
      %p123 = por %p121, %p122
      %s125 = sadd.s32 %s124, 1
      %p128 = scmp.eq.s32.totalorder %s27, 1
      %p129 = scmp.ne.s32.totalorder %s124, %s126
      %p130 = scmp.eq.s32.totalorder %s27, 0
      %p131 = por %p129, %p130
      %p132 = scmp.ne.s32.totalorder %s124, %s126
      %p133 = scmp.eq.s32.totalorder %s32, 1
      %p134 = por %p132, %p133
      %p135 = scmp.ne.s32.totalorder %s126, %s127
      %p136 = scmp.eq.s32.totalorder %s32, 0
      %p137 = por %p135, %p136
      %p138 = scmp.ne.s32.totalorder %s126, %s127
      %p139 = scmp.eq.s32.totalorder %s33, 1
      %p140 = por %p138, %p139
      %p142 = scmp.ne.s32.totalorder %s127, %s141
      %p143 = scmp.eq.s32.totalorder %s33, 0
      %p144 = por %p142, %p143
      %s146 = sadd.s32 %s145, 1
      %p149 = scmp.eq.s32.totalorder %s27, 1
      %p150 = scmp.ne.s32.totalorder %s145, %s147
      %p151 = scmp.eq.s32.totalorder %s27, 0
      %p152 = por %p150, %p151
      %p153 = scmp.ne.s32.totalorder %s145, %s147
      %p154 = scmp.eq.s32.totalorder %s32, 1
      %p155 = por %p153, %p154
      %p156 = scmp.ne.s32.totalorder %s147, %s148
      %p157 = scmp.eq.s32.totalorder %s32, 0
      %p158 = por %p156, %p157
      %p159 = scmp.ne.s32.totalorder %s147, %s148
      %p160 = scmp.eq.s32.totalorder %s33, 1
      %p161 = por %p159, %p160
      %p163 = scmp.ne.s32.totalorder %s148, %s162
      %p164 = scmp.eq.s32.totalorder %s33, 0
      %p165 = por %p163, %p164
      %s167 = sadd.s32 %s166, 1
      %p170 = scmp.eq.s32.totalorder %s27, 1
      %p171 = scmp.ne.s32.totalorder %s166, %s168
      %p172 = scmp.eq.s32.totalorder %s27, 0
      %p173 = por %p171, %p172
      %p174 = scmp.ne.s32.totalorder %s166, %s168
      %p175 = scmp.eq.s32.totalorder %s32, 1
      %p176 = por %p174, %p175
      %p177 = scmp.ne.s32.totalorder %s168, %s169
      %p178 = scmp.eq.s32.totalorder %s32, 0
      %p179 = por %p177, %p178
      %p180 = scmp.ne.s32.totalorder %s168, %s169
      %p181 = scmp.eq.s32.totalorder %s33, 1
      %p182 = por %p180, %p181
      %p184 = scmp.ne.s32.totalorder %s169, %s183
      %p185 = scmp.eq.s32.totalorder %s33, 0
      %p186 = por %p184, %p185
      %s187 = ssub.s32 %s27, %s34
      %p188 = scmp.eq.s32.totalorder %s187, 0
      %s190 = sadd.s32 %s189, 1
      %s191 = scalar_select %p188, %s189, %s190
      %p194 = pneg %p188
      %p195 = scmp.eq.s32.totalorder %s27, 1
      %p196 = por %p194, %p195
      %p197 = scmp.ne.s32.totalorder %s189, %s192
      %p198 = scmp.eq.s32.totalorder %s27, 0
      %p199 = por %p197, %p198
      %p200 = scmp.ne.s32.totalorder %s189, %s192
      %p201 = scmp.eq.s32.totalorder %s32, 1
      %p202 = por %p200, %p201
      %p203 = scmp.ne.s32.totalorder %s192, %s193
      %p204 = scmp.eq.s32.totalorder %s32, 0
      %p205 = por %p203, %p204
      %p206 = scmp.ne.s32.totalorder %s192, %s193
      %p207 = scmp.eq.s32.totalorder %s33, 1
      %p208 = por %p206, %p207
      %p210 = scmp.ne.s32.totalorder %s193, %s209
      %p211 = scmp.eq.s32.totalorder %s33, 0
      %p212 = por %p210, %p211
      %s213 = ssub.s32 %s27, %s34
      %p214 = scmp.eq.s32.totalorder %s213, 0
      %s216 = sadd.s32 %s215, 1
      %s217 = scalar_select %p214, %s215, %s216
      %p220 = pneg %p214
      %p221 = scmp.eq.s32.totalorder %s27, 1
      %p222 = por %p220, %p221
      %p223 = scmp.ne.s32.totalorder %s215, %s218
      %p224 = scmp.eq.s32.totalorder %s27, 0
      %p225 = por %p223, %p224
      %p226 = scmp.ne.s32.totalorder %s215, %s218
      %p227 = scmp.eq.s32.totalorder %s32, 1
      %p228 = por %p226, %p227
      %p229 = scmp.ne.s32.totalorder %s218, %s219
      %p230 = scmp.eq.s32.totalorder %s32, 0
      %p231 = por %p229, %p230
      %p232 = scmp.ne.s32.totalorder %s218, %s219
      %p233 = scmp.eq.s32.totalorder %s33, 1
      %p234 = por %p232, %p233
      %p236 = scmp.ne.s32.totalorder %s219, %s235
      %p237 = scmp.eq.s32.totalorder %s33, 0
      %p238 = por %p236, %p237
      %s239 = ssub.s32 %s27, %s34
      %p240 = scmp.eq.s32.totalorder %s239, 0
      %s242 = sadd.s32 %s241, 1
      %s243 = scalar_select %p240, %s241, %s242
      %p246 = pneg %p240
      %p247 = scmp.eq.s32.totalorder %s27, 1
      %p248 = por %p246, %p247
      %p249 = scmp.ne.s32.totalorder %s241, %s244
      %p250 = scmp.eq.s32.totalorder %s27, 0
      %p251 = por %p249, %p250
      %p252 = scmp.ne.s32.totalorder %s241, %s244
      %p253 = scmp.eq.s32.totalorder %s32, 1
      %p254 = por %p252, %p253
      %p255 = scmp.ne.s32.totalorder %s244, %s245
      %p256 = scmp.eq.s32.totalorder %s32, 0
      %p257 = por %p255, %p256
      %p258 = scmp.ne.s32.totalorder %s244, %s245
      %p259 = scmp.eq.s32.totalorder %s33, 1
      %p260 = por %p258, %p259
      %p262 = scmp.ne.s32.totalorder %s245, %s261
      %p263 = scmp.eq.s32.totalorder %s33, 0
      %p264 = por %p262, %p263
      %p265 = scmp.le.s32.totalorder 1, %s27
      %p266 = scmp.lt.s32.totalorder %s27, 3
      %p267 = pnand %p265, %p266
      %p268 = pneg %p267
      // Predicated region
      $region9: #{tpu_custom_call.1} parent=5 // pred_check
        _
      $region10: #{tpu_custom_call.1} parent=5 // pred_check_branch
        %270 = sbr.rel (%p267) target = $region12
      $region11: #{tpu_custom_call.1} parent=5 // pred_region
        %s271 = ssub.s32 %s27, 1
        // Predicated region
        $region13: #{tpu_custom_call.1} parent=11 // pred_check
          %p272 = pneg %p74
        $region14: #{tpu_custom_call.1} parent=11 // pred_check_branch
          %274 = sbr.rel (%p272) target = $region16
        $region15: #{tpu_custom_call.1} parent=11 // pred_region
          %276 = vsyncadd [#allocation6], 0
          %s277 = sshll.u32 %s1, 4
          %s278 = int_to_ptr.hbm [resolvable:$true] %s277
          %s279 = sshll.u32 [#allocation5], 4
          %s280 = int_to_ptr.vmem [resolvable:$true] %s279
          %285 = dma.hbm_to_vmem [thread:$0]  %s278, 2048, %s280, [#allocation6], 128, 128, 8
        $region16: #{tpu_custom_call.1} parent=11 // pred_fallthru
          _
        // Predicated region
        $region17: #{tpu_custom_call.1} parent=11 // pred_check
          %p286 = pneg %p95
        $region18: #{tpu_custom_call.1} parent=11 // pred_check_branch
          %288 = sbr.rel (%p286) target = $region20
        $region19: #{tpu_custom_call.1} parent=11 // pred_region
          %290 = vsyncadd [#allocation6], 0
          %s291 = sshll.u32 %s2, 4
          %s292 = int_to_ptr.hbm [resolvable:$true] %s291
          %s293 = sshll.u32 [#allocation7], 4
          %s294 = int_to_ptr.vmem [resolvable:$true] %s293
          %299 = dma.hbm_to_vmem [thread:$0]  %s292, 2048, %s294, [#allocation6], 128, 128, 8
        $region20: #{tpu_custom_call.1} parent=11 // pred_fallthru
          _
        // Predicated region
        $region21: #{tpu_custom_call.1} parent=11 // pred_check
          %p300 = pneg %p116
        $region22: #{tpu_custom_call.1} parent=11 // pred_check_branch
          %302 = sbr.rel (%p300) target = $region24
        $region23: #{tpu_custom_call.1} parent=11 // pred_region
          %304 = vsyncadd [#allocation9], 0
          %s305 = sshll.u32 %s3, 4
          %s306 = int_to_ptr.hbm [resolvable:$true] %s305
          %s307 = sshll.u32 [#allocation8], 4
          %s308 = int_to_ptr.vmem [resolvable:$true] %s307
          %313 = dma.hbm_to_vmem [thread:$0]  %s306, 2048, %s308, [#allocation9], 128, 128, 8
        $region24: #{tpu_custom_call.1} parent=11 // pred_fallthru
          _
        // Predicated region
        $region25: #{tpu_custom_call.1} parent=11 // pred_check
          %p314 = pneg %p137
        $region26: #{tpu_custom_call.1} parent=11 // pred_check_branch
          %316 = sbr.rel (%p314) target = $region28
        $region27: #{tpu_custom_call.1} parent=11 // pred_region
          _
        $region28: #{tpu_custom_call.1} parent=11 // pred_fallthru
          _
        // Predicated region
        $region29: #{tpu_custom_call.1} parent=11 // pred_check
          %p317 = pneg %p158
        $region30: #{tpu_custom_call.1} parent=11 // pred_check_branch
          %319 = sbr.rel (%p317) target = $region32
        $region31: #{tpu_custom_call.1} parent=11 // pred_region
          _
        $region32: #{tpu_custom_call.1} parent=11 // pred_fallthru
          _
        // Predicated region
        $region33: #{tpu_custom_call.1} parent=11 // pred_check
          %p320 = pneg %p179
        $region34: #{tpu_custom_call.1} parent=11 // pred_check_branch
          %322 = sbr.rel (%p320) target = $region36
        $region35: #{tpu_custom_call.1} parent=11 // pred_region
          _
        $region36: #{tpu_custom_call.1} parent=11 // pred_fallthru
          _
      $region12: #{tpu_custom_call.1} parent=5 // pred_fallthru
        _
      %p323 = scmp.lt.s32.totalorder %s27, 2
      // Predicated region
      $region37: #{tpu_custom_call.1} parent=5 // pred_check
        %p324 = pneg %p323
      $region38: #{tpu_custom_call.1} parent=5 // pred_check_branch
        %326 = sbr.rel (%p324) target = $region40
      $region39: #{tpu_custom_call.1} parent=5 // pred_region
        // Predicated region
        $region41: #{tpu_custom_call.1} parent=39 // pred_check
          %p327 = pneg %p47
        $region42: #{tpu_custom_call.1} parent=39 // pred_check_branch
          %329 = sbr.rel (%p327) target = $region44
        $region43: #{tpu_custom_call.1} parent=39 // pred_region
          %s330 = sand.u32 %s37, 1
          %s331 = scalar_lea.sflag [#allocation3], %s330
          %s332 = sand.u32 %s37, 1
          %s333 = smul.addr %s332, 128
          %s334 = scalar_lea.vmem [#allocation2], %s333
          %s335 = smul.u32 16, %s27
          %337 = vsyncadd %s331, 0
          %s338 = smul.addr %s335, 8
          %s339 = scalar_lea.hbm %s0, %s338
          %s340 = sshll.u32 %s339, 4
          %s341 = int_to_ptr.hbm [resolvable:$true] %s340
          %s342 = sshll.u32 %s334, 4
          %s343 = int_to_ptr.vmem [resolvable:$true] %s342
          %348 = dma.hbm_to_vmem [thread:$0]  %s341, 2048, %s343, %s331, 128, 128, 8
        $region44: #{tpu_custom_call.1} parent=39 // pred_fallthru
          _
      $region40: #{tpu_custom_call.1} parent=5 // pred_fallthru
        _
      %p349 = scmp.le.s32.totalorder 1, %s27
      %p350 = scmp.lt.s32.totalorder %s27, 3
      %p351 = pnand %p349, %p350
      %p352 = pneg %p351
      // Predicated region
      $region45: #{tpu_custom_call.1} parent=5 // pred_check
        _
      $region46: #{tpu_custom_call.1} parent=5 // pred_check_branch
        %354 = sbr.rel (%p351) target = $region48
      $region47: #{tpu_custom_call.1} parent=5 // pred_region
        %s355 = ssub.s32 %s27, 1
        %s356 = sand.u32 %s40, 1
        %s357 = scalar_lea.sflag [#allocation3], %s356
        %s358 = sand.u32 %s40, 1
        %s359 = smul.addr %s358, 128
        %s360 = scalar_lea.vmem [#allocation2], %s359
        // Predicated region
        $region49: #{tpu_custom_call.1} parent=47 // pred_check
          %p361 = pneg %p53
        $region50: #{tpu_custom_call.1} parent=47 // pred_check_branch
          %363 = sbr.rel (%p361) target = $region52
        $region51: #{tpu_custom_call.1} parent=47 // pred_region
          %365 = dma.done %s357, 2048
        $region52: #{tpu_custom_call.1} parent=47 // pred_fallthru
          _
        // Predicated region
        $region53: #{tpu_custom_call.1} parent=47 // pred_check
          %p366 = pneg %p74
        $region54: #{tpu_custom_call.1} parent=47 // pred_check_branch
          %368 = sbr.rel (%p366) target = $region56
        $region55: #{tpu_custom_call.1} parent=47 // pred_region
          %370 = dma.done [#allocation6], 2048
        $region56: #{tpu_custom_call.1} parent=47 // pred_fallthru
          _
        // Predicated region
        $region57: #{tpu_custom_call.1} parent=47 // pred_check
          %p371 = pneg %p95
        $region58: #{tpu_custom_call.1} parent=47 // pred_check_branch
          %373 = sbr.rel (%p371) target = $region60
        $region59: #{tpu_custom_call.1} parent=47 // pred_region
          %375 = dma.done [#allocation6], 2048
        $region60: #{tpu_custom_call.1} parent=47 // pred_fallthru
          _
        // Predicated region
        $region61: #{tpu_custom_call.1} parent=47 // pred_check
          %p376 = pneg %p116
        $region62: #{tpu_custom_call.1} parent=47 // pred_check_branch
          %378 = sbr.rel (%p376) target = $region64
        $region63: #{tpu_custom_call.1} parent=47 // pred_region
          %380 = dma.done [#allocation9], 2048
        $region64: #{tpu_custom_call.1} parent=47 // pred_fallthru
          _
        %s381 = sand.u32 %s40, 1
        %s382 = scalar_lea.sflag [#allocation3], %s381
        %s383 = sand.u32 %s40, 1
        %s384 = smul.addr %s383, 128
        %s385 = scalar_lea.vmem [#allocation2], %s384
        %p386 = pneg %p53
        %p387 = pneg %p50
        %p388 = pneg %p74
        %p389 = pneg %p71
        %p390 = pneg %p95
        %p391 = pneg %p92
        %p392 = pneg %p116
        %p393 = pneg %p113
        %p394 = pneg %p137
        %p395 = pneg %p134
        %p396 = pneg %p158
        %p397 = pneg %p155
        %p398 = pneg %p179
        %p399 = pneg %p176
        %p400 = pneg %p205
        %p401 = pneg %p202
        %s402 = sand.u32 %s192, 1
        %s403 = scalar_lea.sflag [#allocation4], %s402
        %s404 = sand.u32 %s192, 1
        %s405 = smul.addr %s404, 128
        %s406 = scalar_lea.vmem [#allocation10], %s405
        %p407 = pneg %p231
        %p408 = pneg %p228
        %s409 = sand.u32 %s32, 1
        %s410 = scalar_lea.sflag [#allocation12], %s409
        %s411 = sand.u32 %s218, 1
        %s412 = smul.addr %s411, 128
        %s413 = scalar_lea.vmem [#allocation11], %s412
        %p414 = pneg %p257
        %p415 = pneg %p254
        %s416 = sand.u32 %s32, 1
        %s417 = scalar_lea.sflag [#allocation12], %s416
        %s418 = sand.u32 %s244, 1
        %s419 = smul.addr %s418, 128
        %s420 = scalar_lea.vmem [#allocation13], %s419
        %s421 = smul.u32 16, %s32
        %s422 = smul.u32 16, %s32
        %s423 = smul.u32 16, %s32
        %s424 = smul.u32 16, %s32
        %v425 = vld [vmem:[%s360] sm:$0xff]
        %v426 = vld [vmem:[%s360 + $0x8] sm:$0xff]
        %v427 = vld [vmem:[%s360 + $0x10] sm:$0xff]
        %v428 = vld [vmem:[%s360 + $0x18] sm:$0xff]
        %v429 = vld [vmem:[%s360 + $0x20] sm:$0xff]
        %v430 = vld [vmem:[%s360 + $0x28] sm:$0xff]
        %v431 = vld [vmem:[%s360 + $0x30] sm:$0xff]
        %v432 = vld [vmem:[%s360 + $0x38] sm:$0xff]
        %v433 = vld [vmem:[%s360 + $0x40] sm:$0xff]
        %v434 = vld [vmem:[%s360 + $0x48] sm:$0xff]
        %v435 = vld [vmem:[%s360 + $0x50] sm:$0xff]
        %v436 = vld [vmem:[%s360 + $0x58] sm:$0xff]
        %v437 = vld [vmem:[%s360 + $0x60] sm:$0xff]
        %v438 = vld [vmem:[%s360 + $0x68] sm:$0xff]
        %v439 = vld [vmem:[%s360 + $0x70] sm:$0xff]
        %v440 = vld [vmem:[%s360 + $0x78] sm:$0xff]
        %v441 = vld [vmem:[#allocation5] sm:$0xff]
        %v442 = vld [vmem:[#allocation5 + $0x8] sm:$0xff]
        %v443 = vld [vmem:[#allocation5 + $0x10] sm:$0xff]
        %v444 = vld [vmem:[#allocation5 + $0x18] sm:$0xff]
        %v445 = vld [vmem:[#allocation5 + $0x20] sm:$0xff]
        %v446 = vld [vmem:[#allocation5 + $0x28] sm:$0xff]
        %v447 = vld [vmem:[#allocation5 + $0x30] sm:$0xff]
        %v448 = vld [vmem:[#allocation5 + $0x38] sm:$0xff]
        %v449 = vld [vmem:[#allocation5 + $0x40] sm:$0xff]
        %v450 = vld [vmem:[#allocation5 + $0x48] sm:$0xff]
        %v451 = vld [vmem:[#allocation5 + $0x50] sm:$0xff]
        %v452 = vld [vmem:[#allocation5 + $0x58] sm:$0xff]
        %v453 = vld [vmem:[#allocation5 + $0x60] sm:$0xff]
        %v454 = vld [vmem:[#allocation5 + $0x68] sm:$0xff]
        %v455 = vld [vmem:[#allocation5 + $0x70] sm:$0xff]
        %v456 = vld [vmem:[#allocation5 + $0x78] sm:$0xff]
        %v457 = vld [vmem:[%s4] sm:$0x1]
        %v459 = vperm.slane %v457, 0
        %v461 = vand.u32 %v456, 4294901760
        %462 = vmatpush.msra.mxu0 %v461
        %v463 = vand.u32 %v455, 4294901760
        %464 = vmatpush.msra.mxu0 %v463
        %v465 = vand.u32 %v454, 4294901760
        %466 = vmatpush.msra.mxu0 %v465
        %v467 = vand.u32 %v453, 4294901760
        %468 = vmatpush.msra.mxu0 %v467
        %v469 = vand.u32 %v452, 4294901760
        %470 = vmatpush.msra.mxu0 %v469
        %v471 = vand.u32 %v451, 4294901760
        %472 = vmatpush.msra.mxu0 %v471
        %v473 = vand.u32 %v450, 4294901760
        %474 = vmatpush.msra.mxu0 %v473
        %v475 = vand.u32 %v449, 4294901760
        %476 = vmatpush.msra.mxu0 %v475
        %v477 = vand.u32 %v448, 4294901760
        %478 = vmatpush.msra.mxu0 %v477
        %v479 = vand.u32 %v447, 4294901760
        %480 = vmatpush.msra.mxu0 %v479
        %v481 = vand.u32 %v446, 4294901760
        %482 = vmatpush.msra.mxu0 %v481
        %v483 = vand.u32 %v445, 4294901760
        %484 = vmatpush.msra.mxu0 %v483
        %v485 = vand.u32 %v444, 4294901760
        %486 = vmatpush.msra.mxu0 %v485
        %v487 = vand.u32 %v443, 4294901760
        %488 = vmatpush.msra.mxu0 %v487
        %v489 = vand.u32 %v442, 4294901760
        %490 = vmatpush.msra.mxu0 %v489
        %v491 = vand.u32 %v441, 4294901760
        %492 = vmatpush.msra.mxu0 %v491
        %v493 = vand.u32 %v425, 4294901760
        %v494 = vsub.f32 %v425, %v493
        %v495 = vand.u32 %v494, 4294901760
        %v496 = vsub.f32 %v494, %v495
        %v497 = vand.u32 %v496, 4294901760
        %498 = vmatmul.f32.gmra.mxu0 %v497
        %v499 = vpop.f32.mrf.mxu0
        %v500 = vadd.f32 %v459, %v499
        %v501 = vand.u32 %v426, 4294901760
        %v502 = vsub.f32 %v426, %v501
        %v503 = vand.u32 %v502, 4294901760
        %v504 = vsub.f32 %v502, %v503
        %v505 = vand.u32 %v504, 4294901760
        %506 = vmatmul.f32.gmra.mxu0 %v505
        %v507 = vpop.f32.mrf.mxu0
        %v508 = vadd.f32 %v459, %v507
        %v509 = vand.u32 %v427, 4294901760
        %v510 = vsub.f32 %v427, %v509
        %v511 = vand.u32 %v510, 4294901760
        %v512 = vsub.f32 %v510, %v511
        %v513 = vand.u32 %v512, 4294901760
        %514 = vmatmul.f32.gmra.mxu0 %v513
        %v515 = vpop.f32.mrf.mxu0
        %v516 = vadd.f32 %v459, %v515
        %v517 = vand.u32 %v428, 4294901760
        %v518 = vsub.f32 %v428, %v517
        %v519 = vand.u32 %v518, 4294901760
        %v520 = vsub.f32 %v518, %v519
        %v521 = vand.u32 %v520, 4294901760
        %522 = vmatmul.f32.gmra.mxu0 %v521
        %v523 = vpop.f32.mrf.mxu0
        %v524 = vadd.f32 %v459, %v523
        %v525 = vand.u32 %v429, 4294901760
        %v526 = vsub.f32 %v429, %v525
        %v527 = vand.u32 %v526, 4294901760
        %v528 = vsub.f32 %v526, %v527
        %v529 = vand.u32 %v528, 4294901760
        %530 = vmatmul.f32.gmra.mxu0 %v529
        %v531 = vpop.f32.mrf.mxu0
        %v532 = vadd.f32 %v459, %v531
        %v533 = vand.u32 %v430, 4294901760
        %v534 = vsub.f32 %v430, %v533
        %v535 = vand.u32 %v534, 4294901760
        %v536 = vsub.f32 %v534, %v535
        %v537 = vand.u32 %v536, 4294901760
        %538 = vmatmul.f32.gmra.mxu0 %v537
        %v539 = vpop.f32.mrf.mxu0
        %v540 = vadd.f32 %v459, %v539
        %v541 = vand.u32 %v431, 4294901760
        %v542 = vsub.f32 %v431, %v541
        %v543 = vand.u32 %v542, 4294901760
        %v544 = vsub.f32 %v542, %v543
        %v545 = vand.u32 %v544, 4294901760
        %546 = vmatmul.f32.gmra.mxu0 %v545
        %v547 = vpop.f32.mrf.mxu0
        %v548 = vadd.f32 %v459, %v547
        %v549 = vand.u32 %v432, 4294901760
        %v550 = vsub.f32 %v432, %v549
        %v551 = vand.u32 %v550, 4294901760
        %v552 = vsub.f32 %v550, %v551
        %v553 = vand.u32 %v552, 4294901760
        %554 = vmatmul.f32.gmra.mxu0 %v553
        %v555 = vpop.f32.mrf.mxu0
        %v556 = vadd.f32 %v459, %v555
        %v557 = vand.u32 %v433, 4294901760
        %v558 = vsub.f32 %v433, %v557
        %v559 = vand.u32 %v558, 4294901760
        %v560 = vsub.f32 %v558, %v559
        %v561 = vand.u32 %v560, 4294901760
        %562 = vmatmul.f32.gmra.mxu0 %v561
        %v563 = vpop.f32.mrf.mxu0
        %v564 = vadd.f32 %v459, %v563
        %v565 = vand.u32 %v434, 4294901760
        %v566 = vsub.f32 %v434, %v565
        %v567 = vand.u32 %v566, 4294901760
        %v568 = vsub.f32 %v566, %v567
        %v569 = vand.u32 %v568, 4294901760
        %570 = vmatmul.f32.gmra.mxu0 %v569
        %v571 = vpop.f32.mrf.mxu0
        %v572 = vadd.f32 %v459, %v571
        %v573 = vand.u32 %v435, 4294901760
        %v574 = vsub.f32 %v435, %v573
        %v575 = vand.u32 %v574, 4294901760
        %v576 = vsub.f32 %v574, %v575
        %v577 = vand.u32 %v576, 4294901760
        %578 = vmatmul.f32.gmra.mxu0 %v577
        %v579 = vpop.f32.mrf.mxu0
        %v580 = vadd.f32 %v459, %v579
        %v581 = vand.u32 %v436, 4294901760
        %v582 = vsub.f32 %v436, %v581
        %v583 = vand.u32 %v582, 4294901760
        %v584 = vsub.f32 %v582, %v583
        %v585 = vand.u32 %v584, 4294901760
        %586 = vmatmul.f32.gmra.mxu0 %v585
        %v587 = vpop.f32.mrf.mxu0
        %v588 = vadd.f32 %v459, %v587
        %v589 = vand.u32 %v437, 4294901760
        %v590 = vsub.f32 %v437, %v589
        %v591 = vand.u32 %v590, 4294901760
        %v592 = vsub.f32 %v590, %v591
        %v593 = vand.u32 %v592, 4294901760
        %594 = vmatmul.f32.gmra.mxu0 %v593
        %v595 = vpop.f32.mrf.mxu0
        %v596 = vadd.f32 %v459, %v595
        %v597 = vand.u32 %v438, 4294901760
        %v598 = vsub.f32 %v438, %v597
        %v599 = vand.u32 %v598, 4294901760
        %v600 = vsub.f32 %v598, %v599
        %v601 = vand.u32 %v600, 4294901760
        %602 = vmatmul.f32.gmra.mxu0 %v601
        %v603 = vpop.f32.mrf.mxu0
        %v604 = vadd.f32 %v459, %v603
        %v605 = vand.u32 %v439, 4294901760
        %v606 = vsub.f32 %v439, %v605
        %v607 = vand.u32 %v606, 4294901760
        %v608 = vsub.f32 %v606, %v607
        %v609 = vand.u32 %v608, 4294901760
        %610 = vmatmul.f32.gmra.mxu0 %v609
        %v611 = vpop.f32.mrf.mxu0
        %v612 = vadd.f32 %v459, %v611
        %v613 = vand.u32 %v440, 4294901760
        %v614 = vsub.f32 %v440, %v613
        %v615 = vand.u32 %v614, 4294901760
        %v616 = vsub.f32 %v614, %v615
        %v617 = vand.u32 %v616, 4294901760
        %618 = vmatmul.f32.gmra.mxu0 %v617
        %v619 = vpop.f32.mrf.mxu0
        %v620 = vadd.f32 %v459, %v619
        %621 = vdwg.mxu0
        %v622 = vand.u32 %v456, 4294901760
        %v623 = vsub.f32 %v456, %v622
        %v624 = vand.u32 %v623, 4294901760
        %v625 = vsub.f32 %v623, %v624
        %v626 = vand.u32 %v625, 4294901760
        %627 = vmatpush.msra.mxu0 %v626
        %v628 = vand.u32 %v455, 4294901760
        %v629 = vsub.f32 %v455, %v628
        %v630 = vand.u32 %v629, 4294901760
        %v631 = vsub.f32 %v629, %v630
        %v632 = vand.u32 %v631, 4294901760
        %633 = vmatpush.msra.mxu0 %v632
        %v634 = vand.u32 %v454, 4294901760
        %v635 = vsub.f32 %v454, %v634
        %v636 = vand.u32 %v635, 4294901760
        %v637 = vsub.f32 %v635, %v636
        %v638 = vand.u32 %v637, 4294901760
        %639 = vmatpush.msra.mxu0 %v638
        %v640 = vand.u32 %v453, 4294901760
        %v641 = vsub.f32 %v453, %v640
        %v642 = vand.u32 %v641, 4294901760
        %v643 = vsub.f32 %v641, %v642
        %v644 = vand.u32 %v643, 4294901760
        %645 = vmatpush.msra.mxu0 %v644
        %v646 = vand.u32 %v452, 4294901760
        %v647 = vsub.f32 %v452, %v646
        %v648 = vand.u32 %v647, 4294901760
        %v649 = vsub.f32 %v647, %v648
        %v650 = vand.u32 %v649, 4294901760
        %651 = vmatpush.msra.mxu0 %v650
        %v652 = vand.u32 %v451, 4294901760
        %v653 = vsub.f32 %v451, %v652
        %v654 = vand.u32 %v653, 4294901760
        %v655 = vsub.f32 %v653, %v654
        %v656 = vand.u32 %v655, 4294901760
        %657 = vmatpush.msra.mxu0 %v656
        %v658 = vand.u32 %v450, 4294901760
        %v659 = vsub.f32 %v450, %v658
        %v660 = vand.u32 %v659, 4294901760
        %v661 = vsub.f32 %v659, %v660
        %v662 = vand.u32 %v661, 4294901760
        %663 = vmatpush.msra.mxu0 %v662
        %v664 = vand.u32 %v449, 4294901760
        %v665 = vsub.f32 %v449, %v664
        %v666 = vand.u32 %v665, 4294901760
        %v667 = vsub.f32 %v665, %v666
        %v668 = vand.u32 %v667, 4294901760
        %669 = vmatpush.msra.mxu0 %v668
        %v670 = vand.u32 %v448, 4294901760
        %v671 = vsub.f32 %v448, %v670
        %v672 = vand.u32 %v671, 4294901760
        %v673 = vsub.f32 %v671, %v672
        %v674 = vand.u32 %v673, 4294901760
        %675 = vmatpush.msra.mxu0 %v674
        %v676 = vand.u32 %v447, 4294901760
        %v677 = vsub.f32 %v447, %v676
        %v678 = vand.u32 %v677, 4294901760
        %v679 = vsub.f32 %v677, %v678
        %v680 = vand.u32 %v679, 4294901760
        %681 = vmatpush.msra.mxu0 %v680
        %v682 = vand.u32 %v446, 4294901760
        %v683 = vsub.f32 %v446, %v682
        %v684 = vand.u32 %v683, 4294901760
        %v685 = vsub.f32 %v683, %v684
        %v686 = vand.u32 %v685, 4294901760
        %687 = vmatpush.msra.mxu0 %v686
        %v688 = vand.u32 %v445, 4294901760
        %v689 = vsub.f32 %v445, %v688
        %v690 = vand.u32 %v689, 4294901760
        %v691 = vsub.f32 %v689, %v690
        %v692 = vand.u32 %v691, 4294901760
        %693 = vmatpush.msra.mxu0 %v692
        %v694 = vand.u32 %v444, 4294901760
        %v695 = vsub.f32 %v444, %v694
        %v696 = vand.u32 %v695, 4294901760
        %v697 = vsub.f32 %v695, %v696
        %v698 = vand.u32 %v697, 4294901760
        %699 = vmatpush.msra.mxu0 %v698
        %v700 = vand.u32 %v443, 4294901760
        %v701 = vsub.f32 %v443, %v700
        %v702 = vand.u32 %v701, 4294901760
        %v703 = vsub.f32 %v701, %v702
        %v704 = vand.u32 %v703, 4294901760
        %705 = vmatpush.msra.mxu0 %v704
        %v706 = vand.u32 %v442, 4294901760
        %v707 = vsub.f32 %v442, %v706
        %v708 = vand.u32 %v707, 4294901760
        %v709 = vsub.f32 %v707, %v708
        %v710 = vand.u32 %v709, 4294901760
        %711 = vmatpush.msra.mxu0 %v710
        %v712 = vand.u32 %v441, 4294901760
        %v713 = vsub.f32 %v441, %v712
        %v714 = vand.u32 %v713, 4294901760
        %v715 = vsub.f32 %v713, %v714
        %v716 = vand.u32 %v715, 4294901760
        %717 = vmatpush.msra.mxu0 %v716
        %v718 = vand.u32 %v425, 4294901760
        %719 = vmatmul.f32.gmra.mxu0 %v718
        %v720 = vpop.f32.mrf.mxu0
        %v721 = vadd.f32 %v500, %v720
        %v722 = vand.u32 %v426, 4294901760
        %723 = vmatmul.f32.gmra.mxu0 %v722
        %v724 = vpop.f32.mrf.mxu0
        %v725 = vadd.f32 %v508, %v724
        %v726 = vand.u32 %v427, 4294901760
        %727 = vmatmul.f32.gmra.mxu0 %v726
        %v728 = vpop.f32.mrf.mxu0
        %v729 = vadd.f32 %v516, %v728
        %v730 = vand.u32 %v428, 4294901760
        %731 = vmatmul.f32.gmra.mxu0 %v730
        %v732 = vpop.f32.mrf.mxu0
        %v733 = vadd.f32 %v524, %v732
        %v734 = vand.u32 %v429, 4294901760
        %735 = vmatmul.f32.gmra.mxu0 %v734
        %v736 = vpop.f32.mrf.mxu0
        %v737 = vadd.f32 %v532, %v736
        %v738 = vand.u32 %v430, 4294901760
        %739 = vmatmul.f32.gmra.mxu0 %v738
        %v740 = vpop.f32.mrf.mxu0
        %v741 = vadd.f32 %v540, %v740
        %v742 = vand.u32 %v431, 4294901760
        %743 = vmatmul.f32.gmra.mxu0 %v742
        %v744 = vpop.f32.mrf.mxu0
        %v745 = vadd.f32 %v548, %v744
        %v746 = vand.u32 %v432, 4294901760
        %747 = vmatmul.f32.gmra.mxu0 %v746
        %v748 = vpop.f32.mrf.mxu0
        %v749 = vadd.f32 %v556, %v748
        %v750 = vand.u32 %v433, 4294901760
        %751 = vmatmul.f32.gmra.mxu0 %v750
        %v752 = vpop.f32.mrf.mxu0
        %v753 = vadd.f32 %v564, %v752
        %v754 = vand.u32 %v434, 4294901760
        %755 = vmatmul.f32.gmra.mxu0 %v754
        %v756 = vpop.f32.mrf.mxu0
        %v757 = vadd.f32 %v572, %v756
        %v758 = vand.u32 %v435, 4294901760
        %759 = vmatmul.f32.gmra.mxu0 %v758
        %v760 = vpop.f32.mrf.mxu0
        %v761 = vadd.f32 %v580, %v760
        %v762 = vand.u32 %v436, 4294901760
        %763 = vmatmul.f32.gmra.mxu0 %v762
        %v764 = vpop.f32.mrf.mxu0
        %v765 = vadd.f32 %v588, %v764
        %v766 = vand.u32 %v437, 4294901760
        %767 = vmatmul.f32.gmra.mxu0 %v766
        %v768 = vpop.f32.mrf.mxu0
        %v769 = vadd.f32 %v596, %v768
        %v770 = vand.u32 %v438, 4294901760
        %771 = vmatmul.f32.gmra.mxu0 %v770
        %v772 = vpop.f32.mrf.mxu0
        %v773 = vadd.f32 %v604, %v772
        %v774 = vand.u32 %v439, 4294901760
        %775 = vmatmul.f32.gmra.mxu0 %v774
        %v776 = vpop.f32.mrf.mxu0
        %v777 = vadd.f32 %v612, %v776
        %v778 = vand.u32 %v440, 4294901760
        %779 = vmatmul.f32.gmra.mxu0 %v778
        %v780 = vpop.f32.mrf.mxu0
        %v781 = vadd.f32 %v620, %v780
        %782 = vdwg.mxu0
        %v783 = vand.u32 %v456, 4294901760
        %v784 = vsub.f32 %v456, %v783
        %785 = vmatpush.msra.mxu0 %v784
        %v786 = vand.u32 %v455, 4294901760
        %v787 = vsub.f32 %v455, %v786
        %788 = vmatpush.msra.mxu0 %v787
        %v789 = vand.u32 %v454, 4294901760
        %v790 = vsub.f32 %v454, %v789
        %791 = vmatpush.msra.mxu0 %v790
        %v792 = vand.u32 %v453, 4294901760
        %v793 = vsub.f32 %v453, %v792
        %794 = vmatpush.msra.mxu0 %v793
        %v795 = vand.u32 %v452, 4294901760
        %v796 = vsub.f32 %v452, %v795
        %797 = vmatpush.msra.mxu0 %v796
        %v798 = vand.u32 %v451, 4294901760
        %v799 = vsub.f32 %v451, %v798
        %800 = vmatpush.msra.mxu0 %v799
        %v801 = vand.u32 %v450, 4294901760
        %v802 = vsub.f32 %v450, %v801
        %803 = vmatpush.msra.mxu0 %v802
        %v804 = vand.u32 %v449, 4294901760
        %v805 = vsub.f32 %v449, %v804
        %806 = vmatpush.msra.mxu0 %v805
        %v807 = vand.u32 %v448, 4294901760
        %v808 = vsub.f32 %v448, %v807
        %809 = vmatpush.msra.mxu0 %v808
        %v810 = vand.u32 %v447, 4294901760
        %v811 = vsub.f32 %v447, %v810
        %812 = vmatpush.msra.mxu0 %v811
        %v813 = vand.u32 %v446, 4294901760
        %v814 = vsub.f32 %v446, %v813
        %815 = vmatpush.msra.mxu0 %v814
        %v816 = vand.u32 %v445, 4294901760
        %v817 = vsub.f32 %v445, %v816
        %818 = vmatpush.msra.mxu0 %v817
        %v819 = vand.u32 %v444, 4294901760
        %v820 = vsub.f32 %v444, %v819
        %821 = vmatpush.msra.mxu0 %v820
        %v822 = vand.u32 %v443, 4294901760
        %v823 = vsub.f32 %v443, %v822
        %824 = vmatpush.msra.mxu0 %v823
        %v825 = vand.u32 %v442, 4294901760
        %v826 = vsub.f32 %v442, %v825
        %827 = vmatpush.msra.mxu0 %v826
        %v828 = vand.u32 %v441, 4294901760
        %v829 = vsub.f32 %v441, %v828
        %830 = vmatpush.msra.mxu0 %v829
        %v831 = vand.u32 %v425, 4294901760
        %v832 = vsub.f32 %v425, %v831
        %833 = vmatmul.f32.gmra.mxu0 %v832
        %v834 = vpop.f32.mrf.mxu0
        %v835 = vadd.f32 %v721, %v834
        %v836 = vand.u32 %v426, 4294901760
        %v837 = vsub.f32 %v426, %v836
        %838 = vmatmul.f32.gmra.mxu0 %v837
        %v839 = vpop.f32.mrf.mxu0
        %v840 = vadd.f32 %v725, %v839
        %v841 = vand.u32 %v427, 4294901760
        %v842 = vsub.f32 %v427, %v841
        %843 = vmatmul.f32.gmra.mxu0 %v842
        %v844 = vpop.f32.mrf.mxu0
        %v845 = vadd.f32 %v729, %v844
        %v846 = vand.u32 %v428, 4294901760
        %v847 = vsub.f32 %v428, %v846
        %848 = vmatmul.f32.gmra.mxu0 %v847
        %v849 = vpop.f32.mrf.mxu0
        %v850 = vadd.f32 %v733, %v849
        %v851 = vand.u32 %v429, 4294901760
        %v852 = vsub.f32 %v429, %v851
        %853 = vmatmul.f32.gmra.mxu0 %v852
        %v854 = vpop.f32.mrf.mxu0
        %v855 = vadd.f32 %v737, %v854
        %v856 = vand.u32 %v430, 4294901760
        %v857 = vsub.f32 %v430, %v856
        %858 = vmatmul.f32.gmra.mxu0 %v857
        %v859 = vpop.f32.mrf.mxu0
        %v860 = vadd.f32 %v741, %v859
        %v861 = vand.u32 %v431, 4294901760
        %v862 = vsub.f32 %v431, %v861
        %863 = vmatmul.f32.gmra.mxu0 %v862
        %v864 = vpop.f32.mrf.mxu0
        %v865 = vadd.f32 %v745, %v864
        %v866 = vand.u32 %v432, 4294901760
        %v867 = vsub.f32 %v432, %v866
        %868 = vmatmul.f32.gmra.mxu0 %v867
        %v869 = vpop.f32.mrf.mxu0
        %v870 = vadd.f32 %v749, %v869
        %v871 = vand.u32 %v433, 4294901760
        %v872 = vsub.f32 %v433, %v871
        %873 = vmatmul.f32.gmra.mxu0 %v872
        %v874 = vpop.f32.mrf.mxu0
        %v875 = vadd.f32 %v753, %v874
        %v876 = vand.u32 %v434, 4294901760
        %v877 = vsub.f32 %v434, %v876
        %878 = vmatmul.f32.gmra.mxu0 %v877
        %v879 = vpop.f32.mrf.mxu0
        %v880 = vadd.f32 %v757, %v879
        %v881 = vand.u32 %v435, 4294901760
        %v882 = vsub.f32 %v435, %v881
        %883 = vmatmul.f32.gmra.mxu0 %v882
        %v884 = vpop.f32.mrf.mxu0
        %v885 = vadd.f32 %v761, %v884
        %v886 = vand.u32 %v436, 4294901760
        %v887 = vsub.f32 %v436, %v886
        %888 = vmatmul.f32.gmra.mxu0 %v887
        %v889 = vpop.f32.mrf.mxu0
        %v890 = vadd.f32 %v765, %v889
        %v891 = vand.u32 %v437, 4294901760
        %v892 = vsub.f32 %v437, %v891
        %893 = vmatmul.f32.gmra.mxu0 %v892
        %v894 = vpop.f32.mrf.mxu0
        %v895 = vadd.f32 %v769, %v894
        %v896 = vand.u32 %v438, 4294901760
        %v897 = vsub.f32 %v438, %v896
        %898 = vmatmul.f32.gmra.mxu0 %v897
        %v899 = vpop.f32.mrf.mxu0
        %v900 = vadd.f32 %v773, %v899
        %v901 = vand.u32 %v439, 4294901760
        %v902 = vsub.f32 %v439, %v901
        %903 = vmatmul.f32.gmra.mxu0 %v902
        %v904 = vpop.f32.mrf.mxu0
        %v905 = vadd.f32 %v777, %v904
        %v906 = vand.u32 %v440, 4294901760
        %v907 = vsub.f32 %v440, %v906
        %908 = vmatmul.f32.gmra.mxu0 %v907
        %v909 = vpop.f32.mrf.mxu0
        %v910 = vadd.f32 %v781, %v909
        %911 = vdwg.mxu0
        %v912 = vand.u32 %v456, 4294901760
        %913 = vmatpush.msra.mxu0 %v912
        %v914 = vand.u32 %v455, 4294901760
        %915 = vmatpush.msra.mxu0 %v914
        %v916 = vand.u32 %v454, 4294901760
        %917 = vmatpush.msra.mxu0 %v916
        %v918 = vand.u32 %v453, 4294901760
        %919 = vmatpush.msra.mxu0 %v918
        %v920 = vand.u32 %v452, 4294901760
        %921 = vmatpush.msra.mxu0 %v920
        %v922 = vand.u32 %v451, 4294901760
        %923 = vmatpush.msra.mxu0 %v922
        %v924 = vand.u32 %v450, 4294901760
        %925 = vmatpush.msra.mxu0 %v924
        %v926 = vand.u32 %v449, 4294901760
        %927 = vmatpush.msra.mxu0 %v926
        %v928 = vand.u32 %v448, 4294901760
        %929 = vmatpush.msra.mxu0 %v928
        %v930 = vand.u32 %v447, 4294901760
        %931 = vmatpush.msra.mxu0 %v930
        %v932 = vand.u32 %v446, 4294901760
        %933 = vmatpush.msra.mxu0 %v932
        %v934 = vand.u32 %v445, 4294901760
        %935 = vmatpush.msra.mxu0 %v934
        %v936 = vand.u32 %v444, 4294901760
        %937 = vmatpush.msra.mxu0 %v936
        %v938 = vand.u32 %v443, 4294901760
        %939 = vmatpush.msra.mxu0 %v938
        %v940 = vand.u32 %v442, 4294901760
        %941 = vmatpush.msra.mxu0 %v940
        %v942 = vand.u32 %v441, 4294901760
        %943 = vmatpush.msra.mxu0 %v942
        %v944 = vand.u32 %v425, 4294901760
        %v945 = vsub.f32 %v425, %v944
        %v946 = vand.u32 %v945, 4294901760
        %947 = vmatmul.f32.gmra.mxu0 %v946
        %v948 = vpop.f32.mrf.mxu0
        %v949 = vadd.f32 %v835, %v948
        %v950 = vand.u32 %v426, 4294901760
        %v951 = vsub.f32 %v426, %v950
        %v952 = vand.u32 %v951, 4294901760
        %953 = vmatmul.f32.gmra.mxu0 %v952
        %v954 = vpop.f32.mrf.mxu0
        %v955 = vadd.f32 %v840, %v954
        %v956 = vand.u32 %v427, 4294901760
        %v957 = vsub.f32 %v427, %v956
        %v958 = vand.u32 %v957, 4294901760
        %959 = vmatmul.f32.gmra.mxu0 %v958
        %v960 = vpop.f32.mrf.mxu0
        %v961 = vadd.f32 %v845, %v960
        %v962 = vand.u32 %v428, 4294901760
        %v963 = vsub.f32 %v428, %v962
        %v964 = vand.u32 %v963, 4294901760
        %965 = vmatmul.f32.gmra.mxu0 %v964
        %v966 = vpop.f32.mrf.mxu0
        %v967 = vadd.f32 %v850, %v966
        %v968 = vand.u32 %v429, 4294901760
        %v969 = vsub.f32 %v429, %v968
        %v970 = vand.u32 %v969, 4294901760
        %971 = vmatmul.f32.gmra.mxu0 %v970
        %v972 = vpop.f32.mrf.mxu0
        %v973 = vadd.f32 %v855, %v972
        %v974 = vand.u32 %v430, 4294901760
        %v975 = vsub.f32 %v430, %v974
        %v976 = vand.u32 %v975, 4294901760
        %977 = vmatmul.f32.gmra.mxu0 %v976
        %v978 = vpop.f32.mrf.mxu0
        %v979 = vadd.f32 %v860, %v978
        %v980 = vand.u32 %v431, 4294901760
        %v981 = vsub.f32 %v431, %v980
        %v982 = vand.u32 %v981, 4294901760
        %983 = vmatmul.f32.gmra.mxu0 %v982
        %v984 = vpop.f32.mrf.mxu0
        %v985 = vadd.f32 %v865, %v984
        %v986 = vand.u32 %v432, 4294901760
        %v987 = vsub.f32 %v432, %v986
        %v988 = vand.u32 %v987, 4294901760
        %989 = vmatmul.f32.gmra.mxu0 %v988
        %v990 = vpop.f32.mrf.mxu0
        %v991 = vadd.f32 %v870, %v990
        %v992 = vand.u32 %v433, 4294901760
        %v993 = vsub.f32 %v433, %v992
        %v994 = vand.u32 %v993, 4294901760
        %995 = vmatmul.f32.gmra.mxu0 %v994
        %v996 = vpop.f32.mrf.mxu0
        %v997 = vadd.f32 %v875, %v996
        %v998 = vand.u32 %v434, 4294901760
        %v999 = vsub.f32 %v434, %v998
        %v1000 = vand.u32 %v999, 4294901760
        %1001 = vmatmul.f32.gmra.mxu0 %v1000
        %v1002 = vpop.f32.mrf.mxu0
        %v1003 = vadd.f32 %v880, %v1002
        %v1004 = vand.u32 %v435, 4294901760
        %v1005 = vsub.f32 %v435, %v1004
        %v1006 = vand.u32 %v1005, 4294901760
        %1007 = vmatmul.f32.gmra.mxu0 %v1006
        %v1008 = vpop.f32.mrf.mxu0
        %v1009 = vadd.f32 %v885, %v1008
        %v1010 = vand.u32 %v436, 4294901760
        %v1011 = vsub.f32 %v436, %v1010
        %v1012 = vand.u32 %v1011, 4294901760
        %1013 = vmatmul.f32.gmra.mxu0 %v1012
        %v1014 = vpop.f32.mrf.mxu0
        %v1015 = vadd.f32 %v890, %v1014
        %v1016 = vand.u32 %v437, 4294901760
        %v1017 = vsub.f32 %v437, %v1016
        %v1018 = vand.u32 %v1017, 4294901760
        %1019 = vmatmul.f32.gmra.mxu0 %v1018
        %v1020 = vpop.f32.mrf.mxu0
        %v1021 = vadd.f32 %v895, %v1020
        %v1022 = vand.u32 %v438, 4294901760
        %v1023 = vsub.f32 %v438, %v1022
        %v1024 = vand.u32 %v1023, 4294901760
        %1025 = vmatmul.f32.gmra.mxu0 %v1024
        %v1026 = vpop.f32.mrf.mxu0
        %v1027 = vadd.f32 %v900, %v1026
        %v1028 = vand.u32 %v439, 4294901760
        %v1029 = vsub.f32 %v439, %v1028
        %v1030 = vand.u32 %v1029, 4294901760
        %1031 = vmatmul.f32.gmra.mxu0 %v1030
        %v1032 = vpop.f32.mrf.mxu0
        %v1033 = vadd.f32 %v905, %v1032
        %v1034 = vand.u32 %v440, 4294901760
        %v1035 = vsub.f32 %v440, %v1034
        %v1036 = vand.u32 %v1035, 4294901760
        %1037 = vmatmul.f32.gmra.mxu0 %v1036
        %v1038 = vpop.f32.mrf.mxu0
        %v1039 = vadd.f32 %v910, %v1038
        %1040 = vdwg.mxu0
        %v1041 = vand.u32 %v456, 4294901760
        %v1042 = vsub.f32 %v456, %v1041
        %v1043 = vand.u32 %v1042, 4294901760
        %1044 = vmatpush.msra.mxu0 %v1043
        %v1045 = vand.u32 %v455, 4294901760
        %v1046 = vsub.f32 %v455, %v1045
        %v1047 = vand.u32 %v1046, 4294901760
        %1048 = vmatpush.msra.mxu0 %v1047
        %v1049 = vand.u32 %v454, 4294901760
        %v1050 = vsub.f32 %v454, %v1049
        %v1051 = vand.u32 %v1050, 4294901760
        %1052 = vmatpush.msra.mxu0 %v1051
        %v1053 = vand.u32 %v453, 4294901760
        %v1054 = vsub.f32 %v453, %v1053
        %v1055 = vand.u32 %v1054, 4294901760
        %1056 = vmatpush.msra.mxu0 %v1055
        %v1057 = vand.u32 %v452, 4294901760
        %v1058 = vsub.f32 %v452, %v1057
        %v1059 = vand.u32 %v1058, 4294901760
        %1060 = vmatpush.msra.mxu0 %v1059
        %v1061 = vand.u32 %v451, 4294901760
        %v1062 = vsub.f32 %v451, %v1061
        %v1063 = vand.u32 %v1062, 4294901760
        %1064 = vmatpush.msra.mxu0 %v1063
        %v1065 = vand.u32 %v450, 4294901760
        %v1066 = vsub.f32 %v450, %v1065
        %v1067 = vand.u32 %v1066, 4294901760
        %1068 = vmatpush.msra.mxu0 %v1067
        %v1069 = vand.u32 %v449, 4294901760
        %v1070 = vsub.f32 %v449, %v1069
        %v1071 = vand.u32 %v1070, 4294901760
        %1072 = vmatpush.msra.mxu0 %v1071
        %v1073 = vand.u32 %v448, 4294901760
        %v1074 = vsub.f32 %v448, %v1073
        %v1075 = vand.u32 %v1074, 4294901760
        %1076 = vmatpush.msra.mxu0 %v1075
        %v1077 = vand.u32 %v447, 4294901760
        %v1078 = vsub.f32 %v447, %v1077
        %v1079 = vand.u32 %v1078, 4294901760
        %1080 = vmatpush.msra.mxu0 %v1079
        %v1081 = vand.u32 %v446, 4294901760
        %v1082 = vsub.f32 %v446, %v1081
        %v1083 = vand.u32 %v1082, 4294901760
        %1084 = vmatpush.msra.mxu0 %v1083
        %v1085 = vand.u32 %v445, 4294901760
        %v1086 = vsub.f32 %v445, %v1085
        %v1087 = vand.u32 %v1086, 4294901760
        %1088 = vmatpush.msra.mxu0 %v1087
        %v1089 = vand.u32 %v444, 4294901760
        %v1090 = vsub.f32 %v444, %v1089
        %v1091 = vand.u32 %v1090, 4294901760
        %1092 = vmatpush.msra.mxu0 %v1091
        %v1093 = vand.u32 %v443, 4294901760
        %v1094 = vsub.f32 %v443, %v1093
        %v1095 = vand.u32 %v1094, 4294901760
        %1096 = vmatpush.msra.mxu0 %v1095
        %v1097 = vand.u32 %v442, 4294901760
        %v1098 = vsub.f32 %v442, %v1097
        %v1099 = vand.u32 %v1098, 4294901760
        %1100 = vmatpush.msra.mxu0 %v1099
        %v1101 = vand.u32 %v441, 4294901760
        %v1102 = vsub.f32 %v441, %v1101
        %v1103 = vand.u32 %v1102, 4294901760
        %1104 = vmatpush.msra.mxu0 %v1103
        %v1105 = vand.u32 %v425, 4294901760
        %1106 = vmatmul.f32.gmra.mxu0 %v1105
        %v1107 = vpop.f32.mrf.mxu0
        %v1108 = vadd.f32 %v949, %v1107
        %v1109 = vand.u32 %v426, 4294901760
        %1110 = vmatmul.f32.gmra.mxu0 %v1109
        %v1111 = vpop.f32.mrf.mxu0
        %v1112 = vadd.f32 %v955, %v1111
        %v1113 = vand.u32 %v427, 4294901760
        %1114 = vmatmul.f32.gmra.mxu0 %v1113
        %v1115 = vpop.f32.mrf.mxu0
        %v1116 = vadd.f32 %v961, %v1115
        %v1117 = vand.u32 %v428, 4294901760
        %1118 = vmatmul.f32.gmra.mxu0 %v1117
        %v1119 = vpop.f32.mrf.mxu0
        %v1120 = vadd.f32 %v967, %v1119
        %v1121 = vand.u32 %v429, 4294901760
        %1122 = vmatmul.f32.gmra.mxu0 %v1121
        %v1123 = vpop.f32.mrf.mxu0
        %v1124 = vadd.f32 %v973, %v1123
        %v1125 = vand.u32 %v430, 4294901760
        %1126 = vmatmul.f32.gmra.mxu0 %v1125
        %v1127 = vpop.f32.mrf.mxu0
        %v1128 = vadd.f32 %v979, %v1127
        %v1129 = vand.u32 %v431, 4294901760
        %1130 = vmatmul.f32.gmra.mxu0 %v1129
        %v1131 = vpop.f32.mrf.mxu0
        %v1132 = vadd.f32 %v985, %v1131
        %v1133 = vand.u32 %v432, 4294901760
        %1134 = vmatmul.f32.gmra.mxu0 %v1133
        %v1135 = vpop.f32.mrf.mxu0
        %v1136 = vadd.f32 %v991, %v1135
        %v1137 = vand.u32 %v433, 4294901760
        %1138 = vmatmul.f32.gmra.mxu0 %v1137
        %v1139 = vpop.f32.mrf.mxu0
        %v1140 = vadd.f32 %v997, %v1139
        %v1141 = vand.u32 %v434, 4294901760
        %1142 = vmatmul.f32.gmra.mxu0 %v1141
        %v1143 = vpop.f32.mrf.mxu0
        %v1144 = vadd.f32 %v1003, %v1143
        %v1145 = vand.u32 %v435, 4294901760
        %1146 = vmatmul.f32.gmra.mxu0 %v1145
        %v1147 = vpop.f32.mrf.mxu0
        %v1148 = vadd.f32 %v1009, %v1147
        %v1149 = vand.u32 %v436, 4294901760
        %1150 = vmatmul.f32.gmra.mxu0 %v1149
        %v1151 = vpop.f32.mrf.mxu0
        %v1152 = vadd.f32 %v1015, %v1151
        %v1153 = vand.u32 %v437, 4294901760
        %1154 = vmatmul.f32.gmra.mxu0 %v1153
        %v1155 = vpop.f32.mrf.mxu0
        %v1156 = vadd.f32 %v1021, %v1155
        %v1157 = vand.u32 %v438, 4294901760
        %1158 = vmatmul.f32.gmra.mxu0 %v1157
        %v1159 = vpop.f32.mrf.mxu0
        %v1160 = vadd.f32 %v1027, %v1159
        %v1161 = vand.u32 %v439, 4294901760
        %1162 = vmatmul.f32.gmra.mxu0 %v1161
        %v1163 = vpop.f32.mrf.mxu0
        %v1164 = vadd.f32 %v1033, %v1163
        %v1165 = vand.u32 %v440, 4294901760
        %1166 = vmatmul.f32.gmra.mxu0 %v1165
        %v1167 = vpop.f32.mrf.mxu0
        %v1168 = vadd.f32 %v1039, %v1167
        %1169 = vdwg.mxu0
        %v1170 = vand.u32 %v456, 4294901760
        %1171 = vmatpush.msra.mxu0 %v1170
        %v1172 = vand.u32 %v455, 4294901760
        %1173 = vmatpush.msra.mxu0 %v1172
        %v1174 = vand.u32 %v454, 4294901760
        %1175 = vmatpush.msra.mxu0 %v1174
        %v1176 = vand.u32 %v453, 4294901760
        %1177 = vmatpush.msra.mxu0 %v1176
        %v1178 = vand.u32 %v452, 4294901760
        %1179 = vmatpush.msra.mxu0 %v1178
        %v1180 = vand.u32 %v451, 4294901760
        %1181 = vmatpush.msra.mxu0 %v1180
        %v1182 = vand.u32 %v450, 4294901760
        %1183 = vmatpush.msra.mxu0 %v1182
        %v1184 = vand.u32 %v449, 4294901760
        %1185 = vmatpush.msra.mxu0 %v1184
        %v1186 = vand.u32 %v448, 4294901760
        %1187 = vmatpush.msra.mxu0 %v1186
        %v1188 = vand.u32 %v447, 4294901760
        %1189 = vmatpush.msra.mxu0 %v1188
        %v1190 = vand.u32 %v446, 4294901760
        %1191 = vmatpush.msra.mxu0 %v1190
        %v1192 = vand.u32 %v445, 4294901760
        %1193 = vmatpush.msra.mxu0 %v1192
        %v1194 = vand.u32 %v444, 4294901760
        %1195 = vmatpush.msra.mxu0 %v1194
        %v1196 = vand.u32 %v443, 4294901760
        %1197 = vmatpush.msra.mxu0 %v1196
        %v1198 = vand.u32 %v442, 4294901760
        %1199 = vmatpush.msra.mxu0 %v1198
        %v1200 = vand.u32 %v441, 4294901760
        %1201 = vmatpush.msra.mxu0 %v1200
        %v1202 = vand.u32 %v425, 4294901760
        %1203 = vmatmul.f32.gmra.mxu0 %v1202
        %v1204 = vpop.f32.mrf.mxu0
        %v1205 = vadd.f32 %v1108, %v1204
        %v1206 = vand.u32 %v426, 4294901760
        %1207 = vmatmul.f32.gmra.mxu0 %v1206
        %v1208 = vpop.f32.mrf.mxu0
        %v1209 = vadd.f32 %v1112, %v1208
        %v1210 = vand.u32 %v427, 4294901760
        %1211 = vmatmul.f32.gmra.mxu0 %v1210
        %v1212 = vpop.f32.mrf.mxu0
        %v1213 = vadd.f32 %v1116, %v1212
        %v1214 = vand.u32 %v428, 4294901760
        %1215 = vmatmul.f32.gmra.mxu0 %v1214
        %v1216 = vpop.f32.mrf.mxu0
        %v1217 = vadd.f32 %v1120, %v1216
        %v1218 = vand.u32 %v429, 4294901760
        %1219 = vmatmul.f32.gmra.mxu0 %v1218
        %v1220 = vpop.f32.mrf.mxu0
        %v1221 = vadd.f32 %v1124, %v1220
        %v1222 = vand.u32 %v430, 4294901760
        %1223 = vmatmul.f32.gmra.mxu0 %v1222
        %v1224 = vpop.f32.mrf.mxu0
        %v1225 = vadd.f32 %v1128, %v1224
        %v1226 = vand.u32 %v431, 4294901760
        %1227 = vmatmul.f32.gmra.mxu0 %v1226
        %v1228 = vpop.f32.mrf.mxu0
        %v1229 = vadd.f32 %v1132, %v1228
        %v1230 = vand.u32 %v432, 4294901760
        %1231 = vmatmul.f32.gmra.mxu0 %v1230
        %v1232 = vpop.f32.mrf.mxu0
        %v1233 = vadd.f32 %v1136, %v1232
        %v1234 = vand.u32 %v433, 4294901760
        %1235 = vmatmul.f32.gmra.mxu0 %v1234
        %v1236 = vpop.f32.mrf.mxu0
        %v1237 = vadd.f32 %v1140, %v1236
        %v1238 = vand.u32 %v434, 4294901760
        %1239 = vmatmul.f32.gmra.mxu0 %v1238
        %v1240 = vpop.f32.mrf.mxu0
        %v1241 = vadd.f32 %v1144, %v1240
        %v1242 = vand.u32 %v435, 4294901760
        %1243 = vmatmul.f32.gmra.mxu0 %v1242
        %v1244 = vpop.f32.mrf.mxu0
        %v1245 = vadd.f32 %v1148, %v1244
        %v1246 = vand.u32 %v436, 4294901760
        %1247 = vmatmul.f32.gmra.mxu0 %v1246
        %v1248 = vpop.f32.mrf.mxu0
        %v1249 = vadd.f32 %v1152, %v1248
        %v1250 = vand.u32 %v437, 4294901760
        %1251 = vmatmul.f32.gmra.mxu0 %v1250
        %v1252 = vpop.f32.mrf.mxu0
        %v1253 = vadd.f32 %v1156, %v1252
        %v1254 = vand.u32 %v438, 4294901760
        %1255 = vmatmul.f32.gmra.mxu0 %v1254
        %v1256 = vpop.f32.mrf.mxu0
        %v1257 = vadd.f32 %v1160, %v1256
        %v1258 = vand.u32 %v439, 4294901760
        %1259 = vmatmul.f32.gmra.mxu0 %v1258
        %v1260 = vpop.f32.mrf.mxu0
        %v1261 = vadd.f32 %v1164, %v1260
        %v1262 = vand.u32 %v440, 4294901760
        %1263 = vmatmul.f32.gmra.mxu0 %v1262
        %v1264 = vpop.f32.mrf.mxu0
        %v1265 = vadd.f32 %v1168, %v1264
        %1266 = vdwg.mxu0
        %1267 = vst [vmem:[%s406] sm:$0xff] %v1205
        %1268 = vst [vmem:[%s406 + $0x8] sm:$0xff] %v1209
        %1269 = vst [vmem:[%s406 + $0x10] sm:$0xff] %v1213
        %1270 = vst [vmem:[%s406 + $0x18] sm:$0xff] %v1217
        %1271 = vst [vmem:[%s406 + $0x20] sm:$0xff] %v1221
        %1272 = vst [vmem:[%s406 + $0x28] sm:$0xff] %v1225
        %1273 = vst [vmem:[%s406 + $0x30] sm:$0xff] %v1229
        %1274 = vst [vmem:[%s406 + $0x38] sm:$0xff] %v1233
        %1275 = vst [vmem:[%s406 + $0x40] sm:$0xff] %v1237
        %1276 = vst [vmem:[%s406 + $0x48] sm:$0xff] %v1241
        %1277 = vst [vmem:[%s406 + $0x50] sm:$0xff] %v1245
        %1278 = vst [vmem:[%s406 + $0x58] sm:$0xff] %v1249
        %1279 = vst [vmem:[%s406 + $0x60] sm:$0xff] %v1253
        %1280 = vst [vmem:[%s406 + $0x68] sm:$0xff] %v1257
        %1281 = vst [vmem:[%s406 + $0x70] sm:$0xff] %v1261
        %1282 = vst [vmem:[%s406 + $0x78] sm:$0xff] %v1265
        %v1283 = vld [vmem:[#allocation7] sm:$0xff]
        %v1284 = vld [vmem:[#allocation7 + $0x8] sm:$0xff]
        %v1285 = vld [vmem:[#allocation7 + $0x10] sm:$0xff]
        %v1286 = vld [vmem:[#allocation7 + $0x18] sm:$0xff]
        %v1287 = vld [vmem:[#allocation7 + $0x20] sm:$0xff]
        %v1288 = vld [vmem:[#allocation7 + $0x28] sm:$0xff]
        %v1289 = vld [vmem:[#allocation7 + $0x30] sm:$0xff]
        %v1290 = vld [vmem:[#allocation7 + $0x38] sm:$0xff]
        %v1291 = vld [vmem:[#allocation7 + $0x40] sm:$0xff]
        %v1292 = vld [vmem:[#allocation7 + $0x48] sm:$0xff]
        %v1293 = vld [vmem:[#allocation7 + $0x50] sm:$0xff]
        %v1294 = vld [vmem:[#allocation7 + $0x58] sm:$0xff]
        %v1295 = vld [vmem:[#allocation7 + $0x60] sm:$0xff]
        %v1296 = vld [vmem:[#allocation7 + $0x68] sm:$0xff]
        %v1297 = vld [vmem:[#allocation7 + $0x70] sm:$0xff]
        %v1298 = vld [vmem:[#allocation7 + $0x78] sm:$0xff]
        %v1299 = vld [vmem:[%s5] sm:$0x1]
        %v1301 = vperm.slane %v1299, 0
        %v1303 = vand.u32 %v1298, 4294901760
        %1304 = vmatpush.msra.mxu0 %v1303
        %v1305 = vand.u32 %v1297, 4294901760
        %1306 = vmatpush.msra.mxu0 %v1305
        %v1307 = vand.u32 %v1296, 4294901760
        %1308 = vmatpush.msra.mxu0 %v1307
        %v1309 = vand.u32 %v1295, 4294901760
        %1310 = vmatpush.msra.mxu0 %v1309
        %v1311 = vand.u32 %v1294, 4294901760
        %1312 = vmatpush.msra.mxu0 %v1311
        %v1313 = vand.u32 %v1293, 4294901760
        %1314 = vmatpush.msra.mxu0 %v1313
        %v1315 = vand.u32 %v1292, 4294901760
        %1316 = vmatpush.msra.mxu0 %v1315
        %v1317 = vand.u32 %v1291, 4294901760
        %1318 = vmatpush.msra.mxu0 %v1317
        %v1319 = vand.u32 %v1290, 4294901760
        %1320 = vmatpush.msra.mxu0 %v1319
        %v1321 = vand.u32 %v1289, 4294901760
        %1322 = vmatpush.msra.mxu0 %v1321
        %v1323 = vand.u32 %v1288, 4294901760
        %1324 = vmatpush.msra.mxu0 %v1323
        %v1325 = vand.u32 %v1287, 4294901760
        %1326 = vmatpush.msra.mxu0 %v1325
        %v1327 = vand.u32 %v1286, 4294901760
        %1328 = vmatpush.msra.mxu0 %v1327
        %v1329 = vand.u32 %v1285, 4294901760
        %1330 = vmatpush.msra.mxu0 %v1329
        %v1331 = vand.u32 %v1284, 4294901760
        %1332 = vmatpush.msra.mxu0 %v1331
        %v1333 = vand.u32 %v1283, 4294901760
        %1334 = vmatpush.msra.mxu0 %v1333
        %v1335 = vand.u32 %v425, 4294901760
        %v1336 = vsub.f32 %v425, %v1335
        %v1337 = vand.u32 %v1336, 4294901760
        %v1338 = vsub.f32 %v1336, %v1337
        %v1339 = vand.u32 %v1338, 4294901760
        %1340 = vmatmul.f32.gmra.mxu0 %v1339
        %v1341 = vpop.f32.mrf.mxu0
        %v1342 = vadd.f32 %v1301, %v1341
        %v1343 = vand.u32 %v426, 4294901760
        %v1344 = vsub.f32 %v426, %v1343
        %v1345 = vand.u32 %v1344, 4294901760
        %v1346 = vsub.f32 %v1344, %v1345
        %v1347 = vand.u32 %v1346, 4294901760
        %1348 = vmatmul.f32.gmra.mxu0 %v1347
        %v1349 = vpop.f32.mrf.mxu0
        %v1350 = vadd.f32 %v1301, %v1349
        %v1351 = vand.u32 %v427, 4294901760
        %v1352 = vsub.f32 %v427, %v1351
        %v1353 = vand.u32 %v1352, 4294901760
        %v1354 = vsub.f32 %v1352, %v1353
        %v1355 = vand.u32 %v1354, 4294901760
        %1356 = vmatmul.f32.gmra.mxu0 %v1355
        %v1357 = vpop.f32.mrf.mxu0
        %v1358 = vadd.f32 %v1301, %v1357
        %v1359 = vand.u32 %v428, 4294901760
        %v1360 = vsub.f32 %v428, %v1359
        %v1361 = vand.u32 %v1360, 4294901760
        %v1362 = vsub.f32 %v1360, %v1361
        %v1363 = vand.u32 %v1362, 4294901760
        %1364 = vmatmul.f32.gmra.mxu0 %v1363
        %v1365 = vpop.f32.mrf.mxu0
        %v1366 = vadd.f32 %v1301, %v1365
        %v1367 = vand.u32 %v429, 4294901760
        %v1368 = vsub.f32 %v429, %v1367
        %v1369 = vand.u32 %v1368, 4294901760
        %v1370 = vsub.f32 %v1368, %v1369
        %v1371 = vand.u32 %v1370, 4294901760
        %1372 = vmatmul.f32.gmra.mxu0 %v1371
        %v1373 = vpop.f32.mrf.mxu0
        %v1374 = vadd.f32 %v1301, %v1373
        %v1375 = vand.u32 %v430, 4294901760
        %v1376 = vsub.f32 %v430, %v1375
        %v1377 = vand.u32 %v1376, 4294901760
        %v1378 = vsub.f32 %v1376, %v1377
        %v1379 = vand.u32 %v1378, 4294901760
        %1380 = vmatmul.f32.gmra.mxu0 %v1379
        %v1381 = vpop.f32.mrf.mxu0
        %v1382 = vadd.f32 %v1301, %v1381
        %v1383 = vand.u32 %v431, 4294901760
        %v1384 = vsub.f32 %v431, %v1383
        %v1385 = vand.u32 %v1384, 4294901760
        %v1386 = vsub.f32 %v1384, %v1385
        %v1387 = vand.u32 %v1386, 4294901760
        %1388 = vmatmul.f32.gmra.mxu0 %v1387
        %v1389 = vpop.f32.mrf.mxu0
        %v1390 = vadd.f32 %v1301, %v1389
        %v1391 = vand.u32 %v432, 4294901760
        %v1392 = vsub.f32 %v432, %v1391
        %v1393 = vand.u32 %v1392, 4294901760
        %v1394 = vsub.f32 %v1392, %v1393
        %v1395 = vand.u32 %v1394, 4294901760
        %1396 = vmatmul.f32.gmra.mxu0 %v1395
        %v1397 = vpop.f32.mrf.mxu0
        %v1398 = vadd.f32 %v1301, %v1397
        %v1399 = vand.u32 %v433, 4294901760
        %v1400 = vsub.f32 %v433, %v1399
        %v1401 = vand.u32 %v1400, 4294901760
        %v1402 = vsub.f32 %v1400, %v1401
        %v1403 = vand.u32 %v1402, 4294901760
        %1404 = vmatmul.f32.gmra.mxu0 %v1403
        %v1405 = vpop.f32.mrf.mxu0
        %v1406 = vadd.f32 %v1301, %v1405
        %v1407 = vand.u32 %v434, 4294901760
        %v1408 = vsub.f32 %v434, %v1407
        %v1409 = vand.u32 %v1408, 4294901760
        %v1410 = vsub.f32 %v1408, %v1409
        %v1411 = vand.u32 %v1410, 4294901760
        %1412 = vmatmul.f32.gmra.mxu0 %v1411
        %v1413 = vpop.f32.mrf.mxu0
        %v1414 = vadd.f32 %v1301, %v1413
        %v1415 = vand.u32 %v435, 4294901760
        %v1416 = vsub.f32 %v435, %v1415
        %v1417 = vand.u32 %v1416, 4294901760
        %v1418 = vsub.f32 %v1416, %v1417
        %v1419 = vand.u32 %v1418, 4294901760
        %1420 = vmatmul.f32.gmra.mxu0 %v1419
        %v1421 = vpop.f32.mrf.mxu0
        %v1422 = vadd.f32 %v1301, %v1421
        %v1423 = vand.u32 %v436, 4294901760
        %v1424 = vsub.f32 %v436, %v1423
        %v1425 = vand.u32 %v1424, 4294901760
        %v1426 = vsub.f32 %v1424, %v1425
        %v1427 = vand.u32 %v1426, 4294901760
        %1428 = vmatmul.f32.gmra.mxu0 %v1427
        %v1429 = vpop.f32.mrf.mxu0
        %v1430 = vadd.f32 %v1301, %v1429
        %v1431 = vand.u32 %v437, 4294901760
        %v1432 = vsub.f32 %v437, %v1431
        %v1433 = vand.u32 %v1432, 4294901760
        %v1434 = vsub.f32 %v1432, %v1433
        %v1435 = vand.u32 %v1434, 4294901760
        %1436 = vmatmul.f32.gmra.mxu0 %v1435
        %v1437 = vpop.f32.mrf.mxu0
        %v1438 = vadd.f32 %v1301, %v1437
        %v1439 = vand.u32 %v438, 4294901760
        %v1440 = vsub.f32 %v438, %v1439
        %v1441 = vand.u32 %v1440, 4294901760
        %v1442 = vsub.f32 %v1440, %v1441
        %v1443 = vand.u32 %v1442, 4294901760
        %1444 = vmatmul.f32.gmra.mxu0 %v1443
        %v1445 = vpop.f32.mrf.mxu0
        %v1446 = vadd.f32 %v1301, %v1445
        %v1447 = vand.u32 %v439, 4294901760
        %v1448 = vsub.f32 %v439, %v1447
        %v1449 = vand.u32 %v1448, 4294901760
        %v1450 = vsub.f32 %v1448, %v1449
        %v1451 = vand.u32 %v1450, 4294901760
        %1452 = vmatmul.f32.gmra.mxu0 %v1451
        %v1453 = vpop.f32.mrf.mxu0
        %v1454 = vadd.f32 %v1301, %v1453
        %v1455 = vand.u32 %v440, 4294901760
        %v1456 = vsub.f32 %v440, %v1455
        %v1457 = vand.u32 %v1456, 4294901760
        %v1458 = vsub.f32 %v1456, %v1457
        %v1459 = vand.u32 %v1458, 4294901760
        %1460 = vmatmul.f32.gmra.mxu0 %v1459
        %v1461 = vpop.f32.mrf.mxu0
        %v1462 = vadd.f32 %v1301, %v1461
        %1463 = vdwg.mxu0
        %v1464 = vand.u32 %v1298, 4294901760
        %v1465 = vsub.f32 %v1298, %v1464
        %v1466 = vand.u32 %v1465, 4294901760
        %v1467 = vsub.f32 %v1465, %v1466
        %v1468 = vand.u32 %v1467, 4294901760
        %1469 = vmatpush.msra.mxu0 %v1468
        %v1470 = vand.u32 %v1297, 4294901760
        %v1471 = vsub.f32 %v1297, %v1470
        %v1472 = vand.u32 %v1471, 4294901760
        %v1473 = vsub.f32 %v1471, %v1472
        %v1474 = vand.u32 %v1473, 4294901760
        %1475 = vmatpush.msra.mxu0 %v1474
        %v1476 = vand.u32 %v1296, 4294901760
        %v1477 = vsub.f32 %v1296, %v1476
        %v1478 = vand.u32 %v1477, 4294901760
        %v1479 = vsub.f32 %v1477, %v1478
        %v1480 = vand.u32 %v1479, 4294901760
        %1481 = vmatpush.msra.mxu0 %v1480
        %v1482 = vand.u32 %v1295, 4294901760
        %v1483 = vsub.f32 %v1295, %v1482
        %v1484 = vand.u32 %v1483, 4294901760
        %v1485 = vsub.f32 %v1483, %v1484
        %v1486 = vand.u32 %v1485, 4294901760
        %1487 = vmatpush.msra.mxu0 %v1486
        %v1488 = vand.u32 %v1294, 4294901760
        %v1489 = vsub.f32 %v1294, %v1488
        %v1490 = vand.u32 %v1489, 4294901760
        %v1491 = vsub.f32 %v1489, %v1490
        %v1492 = vand.u32 %v1491, 4294901760
        %1493 = vmatpush.msra.mxu0 %v1492
        %v1494 = vand.u32 %v1293, 4294901760
        %v1495 = vsub.f32 %v1293, %v1494
        %v1496 = vand.u32 %v1495, 4294901760
        %v1497 = vsub.f32 %v1495, %v1496
        %v1498 = vand.u32 %v1497, 4294901760
        %1499 = vmatpush.msra.mxu0 %v1498
        %v1500 = vand.u32 %v1292, 4294901760
        %v1501 = vsub.f32 %v1292, %v1500
        %v1502 = vand.u32 %v1501, 4294901760
        %v1503 = vsub.f32 %v1501, %v1502
        %v1504 = vand.u32 %v1503, 4294901760
        %1505 = vmatpush.msra.mxu0 %v1504
        %v1506 = vand.u32 %v1291, 4294901760
        %v1507 = vsub.f32 %v1291, %v1506
        %v1508 = vand.u32 %v1507, 4294901760
        %v1509 = vsub.f32 %v1507, %v1508
        %v1510 = vand.u32 %v1509, 4294901760
        %1511 = vmatpush.msra.mxu0 %v1510
        %v1512 = vand.u32 %v1290, 4294901760
        %v1513 = vsub.f32 %v1290, %v1512
        %v1514 = vand.u32 %v1513, 4294901760
        %v1515 = vsub.f32 %v1513, %v1514
        %v1516 = vand.u32 %v1515, 4294901760
        %1517 = vmatpush.msra.mxu0 %v1516
        %v1518 = vand.u32 %v1289, 4294901760
        %v1519 = vsub.f32 %v1289, %v1518
        %v1520 = vand.u32 %v1519, 4294901760
        %v1521 = vsub.f32 %v1519, %v1520
        %v1522 = vand.u32 %v1521, 4294901760
        %1523 = vmatpush.msra.mxu0 %v1522
        %v1524 = vand.u32 %v1288, 4294901760
        %v1525 = vsub.f32 %v1288, %v1524
        %v1526 = vand.u32 %v1525, 4294901760
        %v1527 = vsub.f32 %v1525, %v1526
        %v1528 = vand.u32 %v1527, 4294901760
        %1529 = vmatpush.msra.mxu0 %v1528
        %v1530 = vand.u32 %v1287, 4294901760
        %v1531 = vsub.f32 %v1287, %v1530
        %v1532 = vand.u32 %v1531, 4294901760
        %v1533 = vsub.f32 %v1531, %v1532
        %v1534 = vand.u32 %v1533, 4294901760
        %1535 = vmatpush.msra.mxu0 %v1534
        %v1536 = vand.u32 %v1286, 4294901760
        %v1537 = vsub.f32 %v1286, %v1536
        %v1538 = vand.u32 %v1537, 4294901760
        %v1539 = vsub.f32 %v1537, %v1538
        %v1540 = vand.u32 %v1539, 4294901760
        %1541 = vmatpush.msra.mxu0 %v1540
        %v1542 = vand.u32 %v1285, 4294901760
        %v1543 = vsub.f32 %v1285, %v1542
        %v1544 = vand.u32 %v1543, 4294901760
        %v1545 = vsub.f32 %v1543, %v1544
        %v1546 = vand.u32 %v1545, 4294901760
        %1547 = vmatpush.msra.mxu0 %v1546
        %v1548 = vand.u32 %v1284, 4294901760
        %v1549 = vsub.f32 %v1284, %v1548
        %v1550 = vand.u32 %v1549, 4294901760
        %v1551 = vsub.f32 %v1549, %v1550
        %v1552 = vand.u32 %v1551, 4294901760
        %1553 = vmatpush.msra.mxu0 %v1552
        %v1554 = vand.u32 %v1283, 4294901760
        %v1555 = vsub.f32 %v1283, %v1554
        %v1556 = vand.u32 %v1555, 4294901760
        %v1557 = vsub.f32 %v1555, %v1556
        %v1558 = vand.u32 %v1557, 4294901760
        %1559 = vmatpush.msra.mxu0 %v1558
        %v1560 = vand.u32 %v425, 4294901760
        %1561 = vmatmul.f32.gmra.mxu0 %v1560
        %v1562 = vpop.f32.mrf.mxu0
        %v1563 = vadd.f32 %v1342, %v1562
        %v1564 = vand.u32 %v426, 4294901760
        %1565 = vmatmul.f32.gmra.mxu0 %v1564
        %v1566 = vpop.f32.mrf.mxu0
        %v1567 = vadd.f32 %v1350, %v1566
        %v1568 = vand.u32 %v427, 4294901760
        %1569 = vmatmul.f32.gmra.mxu0 %v1568
        %v1570 = vpop.f32.mrf.mxu0
        %v1571 = vadd.f32 %v1358, %v1570
        %v1572 = vand.u32 %v428, 4294901760
        %1573 = vmatmul.f32.gmra.mxu0 %v1572
        %v1574 = vpop.f32.mrf.mxu0
        %v1575 = vadd.f32 %v1366, %v1574
        %v1576 = vand.u32 %v429, 4294901760
        %1577 = vmatmul.f32.gmra.mxu0 %v1576
        %v1578 = vpop.f32.mrf.mxu0
        %v1579 = vadd.f32 %v1374, %v1578
        %v1580 = vand.u32 %v430, 4294901760
        %1581 = vmatmul.f32.gmra.mxu0 %v1580
        %v1582 = vpop.f32.mrf.mxu0
        %v1583 = vadd.f32 %v1382, %v1582
        %v1584 = vand.u32 %v431, 4294901760
        %1585 = vmatmul.f32.gmra.mxu0 %v1584
        %v1586 = vpop.f32.mrf.mxu0
        %v1587 = vadd.f32 %v1390, %v1586
        %v1588 = vand.u32 %v432, 4294901760
        %1589 = vmatmul.f32.gmra.mxu0 %v1588
        %v1590 = vpop.f32.mrf.mxu0
        %v1591 = vadd.f32 %v1398, %v1590
        %v1592 = vand.u32 %v433, 4294901760
        %1593 = vmatmul.f32.gmra.mxu0 %v1592
        %v1594 = vpop.f32.mrf.mxu0
        %v1595 = vadd.f32 %v1406, %v1594
        %v1596 = vand.u32 %v434, 4294901760
        %1597 = vmatmul.f32.gmra.mxu0 %v1596
        %v1598 = vpop.f32.mrf.mxu0
        %v1599 = vadd.f32 %v1414, %v1598
        %v1600 = vand.u32 %v435, 4294901760
        %1601 = vmatmul.f32.gmra.mxu0 %v1600
        %v1602 = vpop.f32.mrf.mxu0
        %v1603 = vadd.f32 %v1422, %v1602
        %v1604 = vand.u32 %v436, 4294901760
        %1605 = vmatmul.f32.gmra.mxu0 %v1604
        %v1606 = vpop.f32.mrf.mxu0
        %v1607 = vadd.f32 %v1430, %v1606
        %v1608 = vand.u32 %v437, 4294901760
        %1609 = vmatmul.f32.gmra.mxu0 %v1608
        %v1610 = vpop.f32.mrf.mxu0
        %v1611 = vadd.f32 %v1438, %v1610
        %v1612 = vand.u32 %v438, 4294901760
        %1613 = vmatmul.f32.gmra.mxu0 %v1612
        %v1614 = vpop.f32.mrf.mxu0
        %v1615 = vadd.f32 %v1446, %v1614
        %v1616 = vand.u32 %v439, 4294901760
        %1617 = vmatmul.f32.gmra.mxu0 %v1616
        %v1618 = vpop.f32.mrf.mxu0
        %v1619 = vadd.f32 %v1454, %v1618
        %v1620 = vand.u32 %v440, 4294901760
        %1621 = vmatmul.f32.gmra.mxu0 %v1620
        %v1622 = vpop.f32.mrf.mxu0
        %v1623 = vadd.f32 %v1462, %v1622
        %1624 = vdwg.mxu0
        %v1625 = vand.u32 %v1298, 4294901760
        %v1626 = vsub.f32 %v1298, %v1625
        %1627 = vmatpush.msra.mxu0 %v1626
        %v1628 = vand.u32 %v1297, 4294901760
        %v1629 = vsub.f32 %v1297, %v1628
        %1630 = vmatpush.msra.mxu0 %v1629
        %v1631 = vand.u32 %v1296, 4294901760
        %v1632 = vsub.f32 %v1296, %v1631
        %1633 = vmatpush.msra.mxu0 %v1632
        %v1634 = vand.u32 %v1295, 4294901760
        %v1635 = vsub.f32 %v1295, %v1634
        %1636 = vmatpush.msra.mxu0 %v1635
        %v1637 = vand.u32 %v1294, 4294901760
        %v1638 = vsub.f32 %v1294, %v1637
        %1639 = vmatpush.msra.mxu0 %v1638
        %v1640 = vand.u32 %v1293, 4294901760
        %v1641 = vsub.f32 %v1293, %v1640
        %1642 = vmatpush.msra.mxu0 %v1641
        %v1643 = vand.u32 %v1292, 4294901760
        %v1644 = vsub.f32 %v1292, %v1643
        %1645 = vmatpush.msra.mxu0 %v1644
        %v1646 = vand.u32 %v1291, 4294901760
        %v1647 = vsub.f32 %v1291, %v1646
        %1648 = vmatpush.msra.mxu0 %v1647
        %v1649 = vand.u32 %v1290, 4294901760
        %v1650 = vsub.f32 %v1290, %v1649
        %1651 = vmatpush.msra.mxu0 %v1650
        %v1652 = vand.u32 %v1289, 4294901760
        %v1653 = vsub.f32 %v1289, %v1652
        %1654 = vmatpush.msra.mxu0 %v1653
        %v1655 = vand.u32 %v1288, 4294901760
        %v1656 = vsub.f32 %v1288, %v1655
        %1657 = vmatpush.msra.mxu0 %v1656
        %v1658 = vand.u32 %v1287, 4294901760
        %v1659 = vsub.f32 %v1287, %v1658
        %1660 = vmatpush.msra.mxu0 %v1659
        %v1661 = vand.u32 %v1286, 4294901760
        %v1662 = vsub.f32 %v1286, %v1661
        %1663 = vmatpush.msra.mxu0 %v1662
        %v1664 = vand.u32 %v1285, 4294901760
        %v1665 = vsub.f32 %v1285, %v1664
        %1666 = vmatpush.msra.mxu0 %v1665
        %v1667 = vand.u32 %v1284, 4294901760
        %v1668 = vsub.f32 %v1284, %v1667
        %1669 = vmatpush.msra.mxu0 %v1668
        %v1670 = vand.u32 %v1283, 4294901760
        %v1671 = vsub.f32 %v1283, %v1670
        %1672 = vmatpush.msra.mxu0 %v1671
        %v1673 = vand.u32 %v425, 4294901760
        %v1674 = vsub.f32 %v425, %v1673
        %1675 = vmatmul.f32.gmra.mxu0 %v1674
        %v1676 = vpop.f32.mrf.mxu0
        %v1677 = vadd.f32 %v1563, %v1676
        %v1678 = vand.u32 %v426, 4294901760
        %v1679 = vsub.f32 %v426, %v1678
        %1680 = vmatmul.f32.gmra.mxu0 %v1679
        %v1681 = vpop.f32.mrf.mxu0
        %v1682 = vadd.f32 %v1567, %v1681
        %v1683 = vand.u32 %v427, 4294901760
        %v1684 = vsub.f32 %v427, %v1683
        %1685 = vmatmul.f32.gmra.mxu0 %v1684
        %v1686 = vpop.f32.mrf.mxu0
        %v1687 = vadd.f32 %v1571, %v1686
        %v1688 = vand.u32 %v428, 4294901760
        %v1689 = vsub.f32 %v428, %v1688
        %1690 = vmatmul.f32.gmra.mxu0 %v1689
        %v1691 = vpop.f32.mrf.mxu0
        %v1692 = vadd.f32 %v1575, %v1691
        %v1693 = vand.u32 %v429, 4294901760
        %v1694 = vsub.f32 %v429, %v1693
        %1695 = vmatmul.f32.gmra.mxu0 %v1694
        %v1696 = vpop.f32.mrf.mxu0
        %v1697 = vadd.f32 %v1579, %v1696
        %v1698 = vand.u32 %v430, 4294901760
        %v1699 = vsub.f32 %v430, %v1698
        %1700 = vmatmul.f32.gmra.mxu0 %v1699
        %v1701 = vpop.f32.mrf.mxu0
        %v1702 = vadd.f32 %v1583, %v1701
        %v1703 = vand.u32 %v431, 4294901760
        %v1704 = vsub.f32 %v431, %v1703
        %1705 = vmatmul.f32.gmra.mxu0 %v1704
        %v1706 = vpop.f32.mrf.mxu0
        %v1707 = vadd.f32 %v1587, %v1706
        %v1708 = vand.u32 %v432, 4294901760
        %v1709 = vsub.f32 %v432, %v1708
        %1710 = vmatmul.f32.gmra.mxu0 %v1709
        %v1711 = vpop.f32.mrf.mxu0
        %v1712 = vadd.f32 %v1591, %v1711
        %v1713 = vand.u32 %v433, 4294901760
        %v1714 = vsub.f32 %v433, %v1713
        %1715 = vmatmul.f32.gmra.mxu0 %v1714
        %v1716 = vpop.f32.mrf.mxu0
        %v1717 = vadd.f32 %v1595, %v1716
        %v1718 = vand.u32 %v434, 4294901760
        %v1719 = vsub.f32 %v434, %v1718
        %1720 = vmatmul.f32.gmra.mxu0 %v1719
        %v1721 = vpop.f32.mrf.mxu0
        %v1722 = vadd.f32 %v1599, %v1721
        %v1723 = vand.u32 %v435, 4294901760
        %v1724 = vsub.f32 %v435, %v1723
        %1725 = vmatmul.f32.gmra.mxu0 %v1724
        %v1726 = vpop.f32.mrf.mxu0
        %v1727 = vadd.f32 %v1603, %v1726
        %v1728 = vand.u32 %v436, 4294901760
        %v1729 = vsub.f32 %v436, %v1728
        %1730 = vmatmul.f32.gmra.mxu0 %v1729
        %v1731 = vpop.f32.mrf.mxu0
        %v1732 = vadd.f32 %v1607, %v1731
        %v1733 = vand.u32 %v437, 4294901760
        %v1734 = vsub.f32 %v437, %v1733
        %1735 = vmatmul.f32.gmra.mxu0 %v1734
        %v1736 = vpop.f32.mrf.mxu0
        %v1737 = vadd.f32 %v1611, %v1736
        %v1738 = vand.u32 %v438, 4294901760
        %v1739 = vsub.f32 %v438, %v1738
        %1740 = vmatmul.f32.gmra.mxu0 %v1739
        %v1741 = vpop.f32.mrf.mxu0
        %v1742 = vadd.f32 %v1615, %v1741
        %v1743 = vand.u32 %v439, 4294901760
        %v1744 = vsub.f32 %v439, %v1743
        %1745 = vmatmul.f32.gmra.mxu0 %v1744
        %v1746 = vpop.f32.mrf.mxu0
        %v1747 = vadd.f32 %v1619, %v1746
        %v1748 = vand.u32 %v440, 4294901760
        %v1749 = vsub.f32 %v440, %v1748
        %1750 = vmatmul.f32.gmra.mxu0 %v1749
        %v1751 = vpop.f32.mrf.mxu0
        %v1752 = vadd.f32 %v1623, %v1751
        %1753 = vdwg.mxu0
        %v1754 = vand.u32 %v1298, 4294901760
        %1755 = vmatpush.msra.mxu0 %v1754
        %v1756 = vand.u32 %v1297, 4294901760
        %1757 = vmatpush.msra.mxu0 %v1756
        %v1758 = vand.u32 %v1296, 4294901760
        %1759 = vmatpush.msra.mxu0 %v1758
        %v1760 = vand.u32 %v1295, 4294901760
        %1761 = vmatpush.msra.mxu0 %v1760
        %v1762 = vand.u32 %v1294, 4294901760
        %1763 = vmatpush.msra.mxu0 %v1762
        %v1764 = vand.u32 %v1293, 4294901760
        %1765 = vmatpush.msra.mxu0 %v1764
        %v1766 = vand.u32 %v1292, 4294901760
        %1767 = vmatpush.msra.mxu0 %v1766
        %v1768 = vand.u32 %v1291, 4294901760
        %1769 = vmatpush.msra.mxu0 %v1768
        %v1770 = vand.u32 %v1290, 4294901760
        %1771 = vmatpush.msra.mxu0 %v1770
        %v1772 = vand.u32 %v1289, 4294901760
        %1773 = vmatpush.msra.mxu0 %v1772
        %v1774 = vand.u32 %v1288, 4294901760
        %1775 = vmatpush.msra.mxu0 %v1774
        %v1776 = vand.u32 %v1287, 4294901760
        %1777 = vmatpush.msra.mxu0 %v1776
        %v1778 = vand.u32 %v1286, 4294901760
        %1779 = vmatpush.msra.mxu0 %v1778
        %v1780 = vand.u32 %v1285, 4294901760
        %1781 = vmatpush.msra.mxu0 %v1780
        %v1782 = vand.u32 %v1284, 4294901760
        %1783 = vmatpush.msra.mxu0 %v1782
        %v1784 = vand.u32 %v1283, 4294901760
        %1785 = vmatpush.msra.mxu0 %v1784
        %v1786 = vand.u32 %v425, 4294901760
        %v1787 = vsub.f32 %v425, %v1786
        %v1788 = vand.u32 %v1787, 4294901760
        %1789 = vmatmul.f32.gmra.mxu0 %v1788
        %v1790 = vpop.f32.mrf.mxu0
        %v1791 = vadd.f32 %v1677, %v1790
        %v1792 = vand.u32 %v426, 4294901760
        %v1793 = vsub.f32 %v426, %v1792
        %v1794 = vand.u32 %v1793, 4294901760
        %1795 = vmatmul.f32.gmra.mxu0 %v1794
        %v1796 = vpop.f32.mrf.mxu0
        %v1797 = vadd.f32 %v1682, %v1796
        %v1798 = vand.u32 %v427, 4294901760
        %v1799 = vsub.f32 %v427, %v1798
        %v1800 = vand.u32 %v1799, 4294901760
        %1801 = vmatmul.f32.gmra.mxu0 %v1800
        %v1802 = vpop.f32.mrf.mxu0
        %v1803 = vadd.f32 %v1687, %v1802
        %v1804 = vand.u32 %v428, 4294901760
        %v1805 = vsub.f32 %v428, %v1804
        %v1806 = vand.u32 %v1805, 4294901760
        %1807 = vmatmul.f32.gmra.mxu0 %v1806
        %v1808 = vpop.f32.mrf.mxu0
        %v1809 = vadd.f32 %v1692, %v1808
        %v1810 = vand.u32 %v429, 4294901760
        %v1811 = vsub.f32 %v429, %v1810
        %v1812 = vand.u32 %v1811, 4294901760
        %1813 = vmatmul.f32.gmra.mxu0 %v1812
        %v1814 = vpop.f32.mrf.mxu0
        %v1815 = vadd.f32 %v1697, %v1814
        %v1816 = vand.u32 %v430, 4294901760
        %v1817 = vsub.f32 %v430, %v1816
        %v1818 = vand.u32 %v1817, 4294901760
        %1819 = vmatmul.f32.gmra.mxu0 %v1818
        %v1820 = vpop.f32.mrf.mxu0
        %v1821 = vadd.f32 %v1702, %v1820
        %v1822 = vand.u32 %v431, 4294901760
        %v1823 = vsub.f32 %v431, %v1822
        %v1824 = vand.u32 %v1823, 4294901760
        %1825 = vmatmul.f32.gmra.mxu0 %v1824
        %v1826 = vpop.f32.mrf.mxu0
        %v1827 = vadd.f32 %v1707, %v1826
        %v1828 = vand.u32 %v432, 4294901760
        %v1829 = vsub.f32 %v432, %v1828
        %v1830 = vand.u32 %v1829, 4294901760
        %1831 = vmatmul.f32.gmra.mxu0 %v1830
        %v1832 = vpop.f32.mrf.mxu0
        %v1833 = vadd.f32 %v1712, %v1832
        %v1834 = vand.u32 %v433, 4294901760
        %v1835 = vsub.f32 %v433, %v1834
        %v1836 = vand.u32 %v1835, 4294901760
        %1837 = vmatmul.f32.gmra.mxu0 %v1836
        %v1838 = vpop.f32.mrf.mxu0
        %v1839 = vadd.f32 %v1717, %v1838
        %v1840 = vand.u32 %v434, 4294901760
        %v1841 = vsub.f32 %v434, %v1840
        %v1842 = vand.u32 %v1841, 4294901760
        %1843 = vmatmul.f32.gmra.mxu0 %v1842
        %v1844 = vpop.f32.mrf.mxu0
        %v1845 = vadd.f32 %v1722, %v1844
        %v1846 = vand.u32 %v435, 4294901760
        %v1847 = vsub.f32 %v435, %v1846
        %v1848 = vand.u32 %v1847, 4294901760
        %1849 = vmatmul.f32.gmra.mxu0 %v1848
        %v1850 = vpop.f32.mrf.mxu0
        %v1851 = vadd.f32 %v1727, %v1850
        %v1852 = vand.u32 %v436, 4294901760
        %v1853 = vsub.f32 %v436, %v1852
        %v1854 = vand.u32 %v1853, 4294901760
        %1855 = vmatmul.f32.gmra.mxu0 %v1854
        %v1856 = vpop.f32.mrf.mxu0
        %v1857 = vadd.f32 %v1732, %v1856
        %v1858 = vand.u32 %v437, 4294901760
        %v1859 = vsub.f32 %v437, %v1858
        %v1860 = vand.u32 %v1859, 4294901760
        %1861 = vmatmul.f32.gmra.mxu0 %v1860
        %v1862 = vpop.f32.mrf.mxu0
        %v1863 = vadd.f32 %v1737, %v1862
        %v1864 = vand.u32 %v438, 4294901760
        %v1865 = vsub.f32 %v438, %v1864
        %v1866 = vand.u32 %v1865, 4294901760
        %1867 = vmatmul.f32.gmra.mxu0 %v1866
        %v1868 = vpop.f32.mrf.mxu0
        %v1869 = vadd.f32 %v1742, %v1868
        %v1870 = vand.u32 %v439, 4294901760
        %v1871 = vsub.f32 %v439, %v1870
        %v1872 = vand.u32 %v1871, 4294901760
        %1873 = vmatmul.f32.gmra.mxu0 %v1872
        %v1874 = vpop.f32.mrf.mxu0
        %v1875 = vadd.f32 %v1747, %v1874
        %v1876 = vand.u32 %v440, 4294901760
        %v1877 = vsub.f32 %v440, %v1876
        %v1878 = vand.u32 %v1877, 4294901760
        %1879 = vmatmul.f32.gmra.mxu0 %v1878
        %v1880 = vpop.f32.mrf.mxu0
        %v1881 = vadd.f32 %v1752, %v1880
        %1882 = vdwg.mxu0
        %v1883 = vand.u32 %v1298, 4294901760
        %v1884 = vsub.f32 %v1298, %v1883
        %v1885 = vand.u32 %v1884, 4294901760
        %1886 = vmatpush.msra.mxu0 %v1885
        %v1887 = vand.u32 %v1297, 4294901760
        %v1888 = vsub.f32 %v1297, %v1887
        %v1889 = vand.u32 %v1888, 4294901760
        %1890 = vmatpush.msra.mxu0 %v1889
        %v1891 = vand.u32 %v1296, 4294901760
        %v1892 = vsub.f32 %v1296, %v1891
        %v1893 = vand.u32 %v1892, 4294901760
        %1894 = vmatpush.msra.mxu0 %v1893
        %v1895 = vand.u32 %v1295, 4294901760
        %v1896 = vsub.f32 %v1295, %v1895
        %v1897 = vand.u32 %v1896, 4294901760
        %1898 = vmatpush.msra.mxu0 %v1897
        %v1899 = vand.u32 %v1294, 4294901760
        %v1900 = vsub.f32 %v1294, %v1899
        %v1901 = vand.u32 %v1900, 4294901760
        %1902 = vmatpush.msra.mxu0 %v1901
        %v1903 = vand.u32 %v1293, 4294901760
        %v1904 = vsub.f32 %v1293, %v1903
        %v1905 = vand.u32 %v1904, 4294901760
        %1906 = vmatpush.msra.mxu0 %v1905
        %v1907 = vand.u32 %v1292, 4294901760
        %v1908 = vsub.f32 %v1292, %v1907
        %v1909 = vand.u32 %v1908, 4294901760
        %1910 = vmatpush.msra.mxu0 %v1909
        %v1911 = vand.u32 %v1291, 4294901760
        %v1912 = vsub.f32 %v1291, %v1911
        %v1913 = vand.u32 %v1912, 4294901760
        %1914 = vmatpush.msra.mxu0 %v1913
        %v1915 = vand.u32 %v1290, 4294901760
        %v1916 = vsub.f32 %v1290, %v1915
        %v1917 = vand.u32 %v1916, 4294901760
        %1918 = vmatpush.msra.mxu0 %v1917
        %v1919 = vand.u32 %v1289, 4294901760
        %v1920 = vsub.f32 %v1289, %v1919
        %v1921 = vand.u32 %v1920, 4294901760
        %1922 = vmatpush.msra.mxu0 %v1921
        %v1923 = vand.u32 %v1288, 4294901760
        %v1924 = vsub.f32 %v1288, %v1923
        %v1925 = vand.u32 %v1924, 4294901760
        %1926 = vmatpush.msra.mxu0 %v1925
        %v1927 = vand.u32 %v1287, 4294901760
        %v1928 = vsub.f32 %v1287, %v1927
        %v1929 = vand.u32 %v1928, 4294901760
        %1930 = vmatpush.msra.mxu0 %v1929
        %v1931 = vand.u32 %v1286, 4294901760
        %v1932 = vsub.f32 %v1286, %v1931
        %v1933 = vand.u32 %v1932, 4294901760
        %1934 = vmatpush.msra.mxu0 %v1933
        %v1935 = vand.u32 %v1285, 4294901760
        %v1936 = vsub.f32 %v1285, %v1935
        %v1937 = vand.u32 %v1936, 4294901760
        %1938 = vmatpush.msra.mxu0 %v1937
        %v1939 = vand.u32 %v1284, 4294901760
        %v1940 = vsub.f32 %v1284, %v1939
        %v1941 = vand.u32 %v1940, 4294901760
        %1942 = vmatpush.msra.mxu0 %v1941
        %v1943 = vand.u32 %v1283, 4294901760
        %v1944 = vsub.f32 %v1283, %v1943
        %v1945 = vand.u32 %v1944, 4294901760
        %1946 = vmatpush.msra.mxu0 %v1945
        %v1947 = vand.u32 %v425, 4294901760
        %1948 = vmatmul.f32.gmra.mxu0 %v1947
        %v1949 = vpop.f32.mrf.mxu0
        %v1950 = vadd.f32 %v1791, %v1949
        %v1951 = vand.u32 %v426, 4294901760
        %1952 = vmatmul.f32.gmra.mxu0 %v1951
        %v1953 = vpop.f32.mrf.mxu0
        %v1954 = vadd.f32 %v1797, %v1953
        %v1955 = vand.u32 %v427, 4294901760
        %1956 = vmatmul.f32.gmra.mxu0 %v1955
        %v1957 = vpop.f32.mrf.mxu0
        %v1958 = vadd.f32 %v1803, %v1957
        %v1959 = vand.u32 %v428, 4294901760
        %1960 = vmatmul.f32.gmra.mxu0 %v1959
        %v1961 = vpop.f32.mrf.mxu0
        %v1962 = vadd.f32 %v1809, %v1961
        %v1963 = vand.u32 %v429, 4294901760
        %1964 = vmatmul.f32.gmra.mxu0 %v1963
        %v1965 = vpop.f32.mrf.mxu0
        %v1966 = vadd.f32 %v1815, %v1965
        %v1967 = vand.u32 %v430, 4294901760
        %1968 = vmatmul.f32.gmra.mxu0 %v1967
        %v1969 = vpop.f32.mrf.mxu0
        %v1970 = vadd.f32 %v1821, %v1969
        %v1971 = vand.u32 %v431, 4294901760
        %1972 = vmatmul.f32.gmra.mxu0 %v1971
        %v1973 = vpop.f32.mrf.mxu0
        %v1974 = vadd.f32 %v1827, %v1973
        %v1975 = vand.u32 %v432, 4294901760
        %1976 = vmatmul.f32.gmra.mxu0 %v1975
        %v1977 = vpop.f32.mrf.mxu0
        %v1978 = vadd.f32 %v1833, %v1977
        %v1979 = vand.u32 %v433, 4294901760
        %1980 = vmatmul.f32.gmra.mxu0 %v1979
        %v1981 = vpop.f32.mrf.mxu0
        %v1982 = vadd.f32 %v1839, %v1981
        %v1983 = vand.u32 %v434, 4294901760
        %1984 = vmatmul.f32.gmra.mxu0 %v1983
        %v1985 = vpop.f32.mrf.mxu0
        %v1986 = vadd.f32 %v1845, %v1985
        %v1987 = vand.u32 %v435, 4294901760
        %1988 = vmatmul.f32.gmra.mxu0 %v1987
        %v1989 = vpop.f32.mrf.mxu0
        %v1990 = vadd.f32 %v1851, %v1989
        %v1991 = vand.u32 %v436, 4294901760
        %1992 = vmatmul.f32.gmra.mxu0 %v1991
        %v1993 = vpop.f32.mrf.mxu0
        %v1994 = vadd.f32 %v1857, %v1993
        %v1995 = vand.u32 %v437, 4294901760
        %1996 = vmatmul.f32.gmra.mxu0 %v1995
        %v1997 = vpop.f32.mrf.mxu0
        %v1998 = vadd.f32 %v1863, %v1997
        %v1999 = vand.u32 %v438, 4294901760
        %2000 = vmatmul.f32.gmra.mxu0 %v1999
        %v2001 = vpop.f32.mrf.mxu0
        %v2002 = vadd.f32 %v1869, %v2001
        %v2003 = vand.u32 %v439, 4294901760
        %2004 = vmatmul.f32.gmra.mxu0 %v2003
        %v2005 = vpop.f32.mrf.mxu0
        %v2006 = vadd.f32 %v1875, %v2005
        %v2007 = vand.u32 %v440, 4294901760
        %2008 = vmatmul.f32.gmra.mxu0 %v2007
        %v2009 = vpop.f32.mrf.mxu0
        %v2010 = vadd.f32 %v1881, %v2009
        %2011 = vdwg.mxu0
        %v2012 = vand.u32 %v1298, 4294901760
        %2013 = vmatpush.msra.mxu0 %v2012
        %v2014 = vand.u32 %v1297, 4294901760
        %2015 = vmatpush.msra.mxu0 %v2014
        %v2016 = vand.u32 %v1296, 4294901760
        %2017 = vmatpush.msra.mxu0 %v2016
        %v2018 = vand.u32 %v1295, 4294901760
        %2019 = vmatpush.msra.mxu0 %v2018
        %v2020 = vand.u32 %v1294, 4294901760
        %2021 = vmatpush.msra.mxu0 %v2020
        %v2022 = vand.u32 %v1293, 4294901760
        %2023 = vmatpush.msra.mxu0 %v2022
        %v2024 = vand.u32 %v1292, 4294901760
        %2025 = vmatpush.msra.mxu0 %v2024
        %v2026 = vand.u32 %v1291, 4294901760
        %2027 = vmatpush.msra.mxu0 %v2026
        %v2028 = vand.u32 %v1290, 4294901760
        %2029 = vmatpush.msra.mxu0 %v2028
        %v2030 = vand.u32 %v1289, 4294901760
        %2031 = vmatpush.msra.mxu0 %v2030
        %v2032 = vand.u32 %v1288, 4294901760
        %2033 = vmatpush.msra.mxu0 %v2032
        %v2034 = vand.u32 %v1287, 4294901760
        %2035 = vmatpush.msra.mxu0 %v2034
        %v2036 = vand.u32 %v1286, 4294901760
        %2037 = vmatpush.msra.mxu0 %v2036
        %v2038 = vand.u32 %v1285, 4294901760
        %2039 = vmatpush.msra.mxu0 %v2038
        %v2040 = vand.u32 %v1284, 4294901760
        %2041 = vmatpush.msra.mxu0 %v2040
        %v2042 = vand.u32 %v1283, 4294901760
        %2043 = vmatpush.msra.mxu0 %v2042
        %v2044 = vand.u32 %v425, 4294901760
        %2045 = vmatmul.f32.gmra.mxu0 %v2044
        %v2046 = vpop.f32.mrf.mxu0
        %v2047 = vadd.f32 %v1950, %v2046
        %v2048 = vand.u32 %v426, 4294901760
        %2049 = vmatmul.f32.gmra.mxu0 %v2048
        %v2050 = vpop.f32.mrf.mxu0
        %v2051 = vadd.f32 %v1954, %v2050
        %v2052 = vand.u32 %v427, 4294901760
        %2053 = vmatmul.f32.gmra.mxu0 %v2052
        %v2054 = vpop.f32.mrf.mxu0
        %v2055 = vadd.f32 %v1958, %v2054
        %v2056 = vand.u32 %v428, 4294901760
        %2057 = vmatmul.f32.gmra.mxu0 %v2056
        %v2058 = vpop.f32.mrf.mxu0
        %v2059 = vadd.f32 %v1962, %v2058
        %v2060 = vand.u32 %v429, 4294901760
        %2061 = vmatmul.f32.gmra.mxu0 %v2060
        %v2062 = vpop.f32.mrf.mxu0
        %v2063 = vadd.f32 %v1966, %v2062
        %v2064 = vand.u32 %v430, 4294901760
        %2065 = vmatmul.f32.gmra.mxu0 %v2064
        %v2066 = vpop.f32.mrf.mxu0
        %v2067 = vadd.f32 %v1970, %v2066
        %v2068 = vand.u32 %v431, 4294901760
        %2069 = vmatmul.f32.gmra.mxu0 %v2068
        %v2070 = vpop.f32.mrf.mxu0
        %v2071 = vadd.f32 %v1974, %v2070
        %v2072 = vand.u32 %v432, 4294901760
        %2073 = vmatmul.f32.gmra.mxu0 %v2072
        %v2074 = vpop.f32.mrf.mxu0
        %v2075 = vadd.f32 %v1978, %v2074
        %v2076 = vand.u32 %v433, 4294901760
        %2077 = vmatmul.f32.gmra.mxu0 %v2076
        %v2078 = vpop.f32.mrf.mxu0
        %v2079 = vadd.f32 %v1982, %v2078
        %v2080 = vand.u32 %v434, 4294901760
        %2081 = vmatmul.f32.gmra.mxu0 %v2080
        %v2082 = vpop.f32.mrf.mxu0
        %v2083 = vadd.f32 %v1986, %v2082
        %v2084 = vand.u32 %v435, 4294901760
        %2085 = vmatmul.f32.gmra.mxu0 %v2084
        %v2086 = vpop.f32.mrf.mxu0
        %v2087 = vadd.f32 %v1990, %v2086
        %v2088 = vand.u32 %v436, 4294901760
        %2089 = vmatmul.f32.gmra.mxu0 %v2088
        %v2090 = vpop.f32.mrf.mxu0
        %v2091 = vadd.f32 %v1994, %v2090
        %v2092 = vand.u32 %v437, 4294901760
        %2093 = vmatmul.f32.gmra.mxu0 %v2092
        %v2094 = vpop.f32.mrf.mxu0
        %v2095 = vadd.f32 %v1998, %v2094
        %v2096 = vand.u32 %v438, 4294901760
        %2097 = vmatmul.f32.gmra.mxu0 %v2096
        %v2098 = vpop.f32.mrf.mxu0
        %v2099 = vadd.f32 %v2002, %v2098
        %v2100 = vand.u32 %v439, 4294901760
        %2101 = vmatmul.f32.gmra.mxu0 %v2100
        %v2102 = vpop.f32.mrf.mxu0
        %v2103 = vadd.f32 %v2006, %v2102
        %v2104 = vand.u32 %v440, 4294901760
        %2105 = vmatmul.f32.gmra.mxu0 %v2104
        %v2106 = vpop.f32.mrf.mxu0
        %v2107 = vadd.f32 %v2010, %v2106
        %2108 = vdwg.mxu0
        %2109 = vst [vmem:[%s413] sm:$0xff] %v2047
        %2110 = vst [vmem:[%s413 + $0x8] sm:$0xff] %v2051
        %2111 = vst [vmem:[%s413 + $0x10] sm:$0xff] %v2055
        %2112 = vst [vmem:[%s413 + $0x18] sm:$0xff] %v2059
        %2113 = vst [vmem:[%s413 + $0x20] sm:$0xff] %v2063
        %2114 = vst [vmem:[%s413 + $0x28] sm:$0xff] %v2067
        %2115 = vst [vmem:[%s413 + $0x30] sm:$0xff] %v2071
        %2116 = vst [vmem:[%s413 + $0x38] sm:$0xff] %v2075
        %2117 = vst [vmem:[%s413 + $0x40] sm:$0xff] %v2079
        %2118 = vst [vmem:[%s413 + $0x48] sm:$0xff] %v2083
        %2119 = vst [vmem:[%s413 + $0x50] sm:$0xff] %v2087
        %2120 = vst [vmem:[%s413 + $0x58] sm:$0xff] %v2091
        %2121 = vst [vmem:[%s413 + $0x60] sm:$0xff] %v2095
        %2122 = vst [vmem:[%s413 + $0x68] sm:$0xff] %v2099
        %2123 = vst [vmem:[%s413 + $0x70] sm:$0xff] %v2103
        %2124 = vst [vmem:[%s413 + $0x78] sm:$0xff] %v2107
        %v2125 = vld [vmem:[#allocation8] sm:$0xff]
        %v2126 = vld [vmem:[#allocation8 + $0x8] sm:$0xff]
        %v2127 = vld [vmem:[#allocation8 + $0x10] sm:$0xff]
        %v2128 = vld [vmem:[#allocation8 + $0x18] sm:$0xff]
        %v2129 = vld [vmem:[#allocation8 + $0x20] sm:$0xff]
        %v2130 = vld [vmem:[#allocation8 + $0x28] sm:$0xff]
        %v2131 = vld [vmem:[#allocation8 + $0x30] sm:$0xff]
        %v2132 = vld [vmem:[#allocation8 + $0x38] sm:$0xff]
        %v2133 = vld [vmem:[#allocation8 + $0x40] sm:$0xff]
        %v2134 = vld [vmem:[#allocation8 + $0x48] sm:$0xff]
        %v2135 = vld [vmem:[#allocation8 + $0x50] sm:$0xff]
        %v2136 = vld [vmem:[#allocation8 + $0x58] sm:$0xff]
        %v2137 = vld [vmem:[#allocation8 + $0x60] sm:$0xff]
        %v2138 = vld [vmem:[#allocation8 + $0x68] sm:$0xff]
        %v2139 = vld [vmem:[#allocation8 + $0x70] sm:$0xff]
        %v2140 = vld [vmem:[#allocation8 + $0x78] sm:$0xff]
        %v2141 = vld [vmem:[%s6] sm:$0x1]
        %v2143 = vperm.slane %v2141, 0
        %v2145 = vand.u32 %v2140, 4294901760
        %2146 = vmatpush.msra.mxu0 %v2145
        %v2147 = vand.u32 %v2139, 4294901760
        %2148 = vmatpush.msra.mxu0 %v2147
        %v2149 = vand.u32 %v2138, 4294901760
        %2150 = vmatpush.msra.mxu0 %v2149
        %v2151 = vand.u32 %v2137, 4294901760
        %2152 = vmatpush.msra.mxu0 %v2151
        %v2153 = vand.u32 %v2136, 4294901760
        %2154 = vmatpush.msra.mxu0 %v2153
        %v2155 = vand.u32 %v2135, 4294901760
        %2156 = vmatpush.msra.mxu0 %v2155
        %v2157 = vand.u32 %v2134, 4294901760
        %2158 = vmatpush.msra.mxu0 %v2157
        %v2159 = vand.u32 %v2133, 4294901760
        %2160 = vmatpush.msra.mxu0 %v2159
        %v2161 = vand.u32 %v2132, 4294901760
        %2162 = vmatpush.msra.mxu0 %v2161
        %v2163 = vand.u32 %v2131, 4294901760
        %2164 = vmatpush.msra.mxu0 %v2163
        %v2165 = vand.u32 %v2130, 4294901760
        %2166 = vmatpush.msra.mxu0 %v2165
        %v2167 = vand.u32 %v2129, 4294901760
        %2168 = vmatpush.msra.mxu0 %v2167
        %v2169 = vand.u32 %v2128, 4294901760
        %2170 = vmatpush.msra.mxu0 %v2169
        %v2171 = vand.u32 %v2127, 4294901760
        %2172 = vmatpush.msra.mxu0 %v2171
        %v2173 = vand.u32 %v2126, 4294901760
        %2174 = vmatpush.msra.mxu0 %v2173
        %v2175 = vand.u32 %v2125, 4294901760
        %2176 = vmatpush.msra.mxu0 %v2175
        %v2177 = vand.u32 %v425, 4294901760
        %v2178 = vsub.f32 %v425, %v2177
        %v2179 = vand.u32 %v2178, 4294901760
        %v2180 = vsub.f32 %v2178, %v2179
        %v2181 = vand.u32 %v2180, 4294901760
        %2182 = vmatmul.f32.gmra.mxu0 %v2181
        %v2183 = vpop.f32.mrf.mxu0
        %v2184 = vadd.f32 %v2143, %v2183
        %v2185 = vand.u32 %v426, 4294901760
        %v2186 = vsub.f32 %v426, %v2185
        %v2187 = vand.u32 %v2186, 4294901760
        %v2188 = vsub.f32 %v2186, %v2187
        %v2189 = vand.u32 %v2188, 4294901760
        %2190 = vmatmul.f32.gmra.mxu0 %v2189
        %v2191 = vpop.f32.mrf.mxu0
        %v2192 = vadd.f32 %v2143, %v2191
        %v2193 = vand.u32 %v427, 4294901760
        %v2194 = vsub.f32 %v427, %v2193
        %v2195 = vand.u32 %v2194, 4294901760
        %v2196 = vsub.f32 %v2194, %v2195
        %v2197 = vand.u32 %v2196, 4294901760
        %2198 = vmatmul.f32.gmra.mxu0 %v2197
        %v2199 = vpop.f32.mrf.mxu0
        %v2200 = vadd.f32 %v2143, %v2199
        %v2201 = vand.u32 %v428, 4294901760
        %v2202 = vsub.f32 %v428, %v2201
        %v2203 = vand.u32 %v2202, 4294901760
        %v2204 = vsub.f32 %v2202, %v2203
        %v2205 = vand.u32 %v2204, 4294901760
        %2206 = vmatmul.f32.gmra.mxu0 %v2205
        %v2207 = vpop.f32.mrf.mxu0
        %v2208 = vadd.f32 %v2143, %v2207
        %v2209 = vand.u32 %v429, 4294901760
        %v2210 = vsub.f32 %v429, %v2209
        %v2211 = vand.u32 %v2210, 4294901760
        %v2212 = vsub.f32 %v2210, %v2211
        %v2213 = vand.u32 %v2212, 4294901760
        %2214 = vmatmul.f32.gmra.mxu0 %v2213
        %v2215 = vpop.f32.mrf.mxu0
        %v2216 = vadd.f32 %v2143, %v2215
        %v2217 = vand.u32 %v430, 4294901760
        %v2218 = vsub.f32 %v430, %v2217
        %v2219 = vand.u32 %v2218, 4294901760
        %v2220 = vsub.f32 %v2218, %v2219
        %v2221 = vand.u32 %v2220, 4294901760
        %2222 = vmatmul.f32.gmra.mxu0 %v2221
        %v2223 = vpop.f32.mrf.mxu0
        %v2224 = vadd.f32 %v2143, %v2223
        %v2225 = vand.u32 %v431, 4294901760
        %v2226 = vsub.f32 %v431, %v2225
        %v2227 = vand.u32 %v2226, 4294901760
        %v2228 = vsub.f32 %v2226, %v2227
        %v2229 = vand.u32 %v2228, 4294901760
        %2230 = vmatmul.f32.gmra.mxu0 %v2229
        %v2231 = vpop.f32.mrf.mxu0
        %v2232 = vadd.f32 %v2143, %v2231
        %v2233 = vand.u32 %v432, 4294901760
        %v2234 = vsub.f32 %v432, %v2233
        %v2235 = vand.u32 %v2234, 4294901760
        %v2236 = vsub.f32 %v2234, %v2235
        %v2237 = vand.u32 %v2236, 4294901760
        %2238 = vmatmul.f32.gmra.mxu0 %v2237
        %v2239 = vpop.f32.mrf.mxu0
        %v2240 = vadd.f32 %v2143, %v2239
        %v2241 = vand.u32 %v433, 4294901760
        %v2242 = vsub.f32 %v433, %v2241
        %v2243 = vand.u32 %v2242, 4294901760
        %v2244 = vsub.f32 %v2242, %v2243
        %v2245 = vand.u32 %v2244, 4294901760
        %2246 = vmatmul.f32.gmra.mxu0 %v2245
        %v2247 = vpop.f32.mrf.mxu0
        %v2248 = vadd.f32 %v2143, %v2247
        %v2249 = vand.u32 %v434, 4294901760
        %v2250 = vsub.f32 %v434, %v2249
        %v2251 = vand.u32 %v2250, 4294901760
        %v2252 = vsub.f32 %v2250, %v2251
        %v2253 = vand.u32 %v2252, 4294901760
        %2254 = vmatmul.f32.gmra.mxu0 %v2253
        %v2255 = vpop.f32.mrf.mxu0
        %v2256 = vadd.f32 %v2143, %v2255
        %v2257 = vand.u32 %v435, 4294901760
        %v2258 = vsub.f32 %v435, %v2257
        %v2259 = vand.u32 %v2258, 4294901760
        %v2260 = vsub.f32 %v2258, %v2259
        %v2261 = vand.u32 %v2260, 4294901760
        %2262 = vmatmul.f32.gmra.mxu0 %v2261
        %v2263 = vpop.f32.mrf.mxu0
        %v2264 = vadd.f32 %v2143, %v2263
        %v2265 = vand.u32 %v436, 4294901760
        %v2266 = vsub.f32 %v436, %v2265
        %v2267 = vand.u32 %v2266, 4294901760
        %v2268 = vsub.f32 %v2266, %v2267
        %v2269 = vand.u32 %v2268, 4294901760
        %2270 = vmatmul.f32.gmra.mxu0 %v2269
        %v2271 = vpop.f32.mrf.mxu0
        %v2272 = vadd.f32 %v2143, %v2271
        %v2273 = vand.u32 %v437, 4294901760
        %v2274 = vsub.f32 %v437, %v2273
        %v2275 = vand.u32 %v2274, 4294901760
        %v2276 = vsub.f32 %v2274, %v2275
        %v2277 = vand.u32 %v2276, 4294901760
        %2278 = vmatmul.f32.gmra.mxu0 %v2277
        %v2279 = vpop.f32.mrf.mxu0
        %v2280 = vadd.f32 %v2143, %v2279
        %v2281 = vand.u32 %v438, 4294901760
        %v2282 = vsub.f32 %v438, %v2281
        %v2283 = vand.u32 %v2282, 4294901760
        %v2284 = vsub.f32 %v2282, %v2283
        %v2285 = vand.u32 %v2284, 4294901760
        %2286 = vmatmul.f32.gmra.mxu0 %v2285
        %v2287 = vpop.f32.mrf.mxu0
        %v2288 = vadd.f32 %v2143, %v2287
        %v2289 = vand.u32 %v439, 4294901760
        %v2290 = vsub.f32 %v439, %v2289
        %v2291 = vand.u32 %v2290, 4294901760
        %v2292 = vsub.f32 %v2290, %v2291
        %v2293 = vand.u32 %v2292, 4294901760
        %2294 = vmatmul.f32.gmra.mxu0 %v2293
        %v2295 = vpop.f32.mrf.mxu0
        %v2296 = vadd.f32 %v2143, %v2295
        %v2297 = vand.u32 %v440, 4294901760
        %v2298 = vsub.f32 %v440, %v2297
        %v2299 = vand.u32 %v2298, 4294901760
        %v2300 = vsub.f32 %v2298, %v2299
        %v2301 = vand.u32 %v2300, 4294901760
        %2302 = vmatmul.f32.gmra.mxu0 %v2301
        %v2303 = vpop.f32.mrf.mxu0
        %v2304 = vadd.f32 %v2143, %v2303
        %2305 = vdwg.mxu0
        %v2306 = vand.u32 %v2140, 4294901760
        %v2307 = vsub.f32 %v2140, %v2306
        %v2308 = vand.u32 %v2307, 4294901760
        %v2309 = vsub.f32 %v2307, %v2308
        %v2310 = vand.u32 %v2309, 4294901760
        %2311 = vmatpush.msra.mxu0 %v2310
        %v2312 = vand.u32 %v2139, 4294901760
        %v2313 = vsub.f32 %v2139, %v2312
        %v2314 = vand.u32 %v2313, 4294901760
        %v2315 = vsub.f32 %v2313, %v2314
        %v2316 = vand.u32 %v2315, 4294901760
        %2317 = vmatpush.msra.mxu0 %v2316
        %v2318 = vand.u32 %v2138, 4294901760
        %v2319 = vsub.f32 %v2138, %v2318
        %v2320 = vand.u32 %v2319, 4294901760
        %v2321 = vsub.f32 %v2319, %v2320
        %v2322 = vand.u32 %v2321, 4294901760
        %2323 = vmatpush.msra.mxu0 %v2322
        %v2324 = vand.u32 %v2137, 4294901760
        %v2325 = vsub.f32 %v2137, %v2324
        %v2326 = vand.u32 %v2325, 4294901760
        %v2327 = vsub.f32 %v2325, %v2326
        %v2328 = vand.u32 %v2327, 4294901760
        %2329 = vmatpush.msra.mxu0 %v2328
        %v2330 = vand.u32 %v2136, 4294901760
        %v2331 = vsub.f32 %v2136, %v2330
        %v2332 = vand.u32 %v2331, 4294901760
        %v2333 = vsub.f32 %v2331, %v2332
        %v2334 = vand.u32 %v2333, 4294901760
        %2335 = vmatpush.msra.mxu0 %v2334
        %v2336 = vand.u32 %v2135, 4294901760
        %v2337 = vsub.f32 %v2135, %v2336
        %v2338 = vand.u32 %v2337, 4294901760
        %v2339 = vsub.f32 %v2337, %v2338
        %v2340 = vand.u32 %v2339, 4294901760
        %2341 = vmatpush.msra.mxu0 %v2340
        %v2342 = vand.u32 %v2134, 4294901760
        %v2343 = vsub.f32 %v2134, %v2342
        %v2344 = vand.u32 %v2343, 4294901760
        %v2345 = vsub.f32 %v2343, %v2344
        %v2346 = vand.u32 %v2345, 4294901760
        %2347 = vmatpush.msra.mxu0 %v2346
        %v2348 = vand.u32 %v2133, 4294901760
        %v2349 = vsub.f32 %v2133, %v2348
        %v2350 = vand.u32 %v2349, 4294901760
        %v2351 = vsub.f32 %v2349, %v2350
        %v2352 = vand.u32 %v2351, 4294901760
        %2353 = vmatpush.msra.mxu0 %v2352
        %v2354 = vand.u32 %v2132, 4294901760
        %v2355 = vsub.f32 %v2132, %v2354
        %v2356 = vand.u32 %v2355, 4294901760
        %v2357 = vsub.f32 %v2355, %v2356
        %v2358 = vand.u32 %v2357, 4294901760
        %2359 = vmatpush.msra.mxu0 %v2358
        %v2360 = vand.u32 %v2131, 4294901760
        %v2361 = vsub.f32 %v2131, %v2360
        %v2362 = vand.u32 %v2361, 4294901760
        %v2363 = vsub.f32 %v2361, %v2362
        %v2364 = vand.u32 %v2363, 4294901760
        %2365 = vmatpush.msra.mxu0 %v2364
        %v2366 = vand.u32 %v2130, 4294901760
        %v2367 = vsub.f32 %v2130, %v2366
        %v2368 = vand.u32 %v2367, 4294901760
        %v2369 = vsub.f32 %v2367, %v2368
        %v2370 = vand.u32 %v2369, 4294901760
        %2371 = vmatpush.msra.mxu0 %v2370
        %v2372 = vand.u32 %v2129, 4294901760
        %v2373 = vsub.f32 %v2129, %v2372
        %v2374 = vand.u32 %v2373, 4294901760
        %v2375 = vsub.f32 %v2373, %v2374
        %v2376 = vand.u32 %v2375, 4294901760
        %2377 = vmatpush.msra.mxu0 %v2376
        %v2378 = vand.u32 %v2128, 4294901760
        %v2379 = vsub.f32 %v2128, %v2378
        %v2380 = vand.u32 %v2379, 4294901760
        %v2381 = vsub.f32 %v2379, %v2380
        %v2382 = vand.u32 %v2381, 4294901760
        %2383 = vmatpush.msra.mxu0 %v2382
        %v2384 = vand.u32 %v2127, 4294901760
        %v2385 = vsub.f32 %v2127, %v2384
        %v2386 = vand.u32 %v2385, 4294901760
        %v2387 = vsub.f32 %v2385, %v2386
        %v2388 = vand.u32 %v2387, 4294901760
        %2389 = vmatpush.msra.mxu0 %v2388
        %v2390 = vand.u32 %v2126, 4294901760
        %v2391 = vsub.f32 %v2126, %v2390
        %v2392 = vand.u32 %v2391, 4294901760
        %v2393 = vsub.f32 %v2391, %v2392
        %v2394 = vand.u32 %v2393, 4294901760
        %2395 = vmatpush.msra.mxu0 %v2394
        %v2396 = vand.u32 %v2125, 4294901760
        %v2397 = vsub.f32 %v2125, %v2396
        %v2398 = vand.u32 %v2397, 4294901760
        %v2399 = vsub.f32 %v2397, %v2398
        %v2400 = vand.u32 %v2399, 4294901760
        %2401 = vmatpush.msra.mxu0 %v2400
        %v2402 = vand.u32 %v425, 4294901760
        %2403 = vmatmul.f32.gmra.mxu0 %v2402
        %v2404 = vpop.f32.mrf.mxu0
        %v2405 = vadd.f32 %v2184, %v2404
        %v2406 = vand.u32 %v426, 4294901760
        %2407 = vmatmul.f32.gmra.mxu0 %v2406
        %v2408 = vpop.f32.mrf.mxu0
        %v2409 = vadd.f32 %v2192, %v2408
        %v2410 = vand.u32 %v427, 4294901760
        %2411 = vmatmul.f32.gmra.mxu0 %v2410
        %v2412 = vpop.f32.mrf.mxu0
        %v2413 = vadd.f32 %v2200, %v2412
        %v2414 = vand.u32 %v428, 4294901760
        %2415 = vmatmul.f32.gmra.mxu0 %v2414
        %v2416 = vpop.f32.mrf.mxu0
        %v2417 = vadd.f32 %v2208, %v2416
        %v2418 = vand.u32 %v429, 4294901760
        %2419 = vmatmul.f32.gmra.mxu0 %v2418
        %v2420 = vpop.f32.mrf.mxu0
        %v2421 = vadd.f32 %v2216, %v2420
        %v2422 = vand.u32 %v430, 4294901760
        %2423 = vmatmul.f32.gmra.mxu0 %v2422
        %v2424 = vpop.f32.mrf.mxu0
        %v2425 = vadd.f32 %v2224, %v2424
        %v2426 = vand.u32 %v431, 4294901760
        %2427 = vmatmul.f32.gmra.mxu0 %v2426
        %v2428 = vpop.f32.mrf.mxu0
        %v2429 = vadd.f32 %v2232, %v2428
        %v2430 = vand.u32 %v432, 4294901760
        %2431 = vmatmul.f32.gmra.mxu0 %v2430
        %v2432 = vpop.f32.mrf.mxu0
        %v2433 = vadd.f32 %v2240, %v2432
        %v2434 = vand.u32 %v433, 4294901760
        %2435 = vmatmul.f32.gmra.mxu0 %v2434
        %v2436 = vpop.f32.mrf.mxu0
        %v2437 = vadd.f32 %v2248, %v2436
        %v2438 = vand.u32 %v434, 4294901760
        %2439 = vmatmul.f32.gmra.mxu0 %v2438
        %v2440 = vpop.f32.mrf.mxu0
        %v2441 = vadd.f32 %v2256, %v2440
        %v2442 = vand.u32 %v435, 4294901760
        %2443 = vmatmul.f32.gmra.mxu0 %v2442
        %v2444 = vpop.f32.mrf.mxu0
        %v2445 = vadd.f32 %v2264, %v2444
        %v2446 = vand.u32 %v436, 4294901760
        %2447 = vmatmul.f32.gmra.mxu0 %v2446
        %v2448 = vpop.f32.mrf.mxu0
        %v2449 = vadd.f32 %v2272, %v2448
        %v2450 = vand.u32 %v437, 4294901760
        %2451 = vmatmul.f32.gmra.mxu0 %v2450
        %v2452 = vpop.f32.mrf.mxu0
        %v2453 = vadd.f32 %v2280, %v2452
        %v2454 = vand.u32 %v438, 4294901760
        %2455 = vmatmul.f32.gmra.mxu0 %v2454
        %v2456 = vpop.f32.mrf.mxu0
        %v2457 = vadd.f32 %v2288, %v2456
        %v2458 = vand.u32 %v439, 4294901760
        %2459 = vmatmul.f32.gmra.mxu0 %v2458
        %v2460 = vpop.f32.mrf.mxu0
        %v2461 = vadd.f32 %v2296, %v2460
        %v2462 = vand.u32 %v440, 4294901760
        %2463 = vmatmul.f32.gmra.mxu0 %v2462
        %v2464 = vpop.f32.mrf.mxu0
        %v2465 = vadd.f32 %v2304, %v2464
        %2466 = vdwg.mxu0
        %v2467 = vand.u32 %v2140, 4294901760
        %v2468 = vsub.f32 %v2140, %v2467
        %2469 = vmatpush.msra.mxu0 %v2468
        %v2470 = vand.u32 %v2139, 4294901760
        %v2471 = vsub.f32 %v2139, %v2470
        %2472 = vmatpush.msra.mxu0 %v2471
        %v2473 = vand.u32 %v2138, 4294901760
        %v2474 = vsub.f32 %v2138, %v2473
        %2475 = vmatpush.msra.mxu0 %v2474
        %v2476 = vand.u32 %v2137, 4294901760
        %v2477 = vsub.f32 %v2137, %v2476
        %2478 = vmatpush.msra.mxu0 %v2477
        %v2479 = vand.u32 %v2136, 4294901760
        %v2480 = vsub.f32 %v2136, %v2479
        %2481 = vmatpush.msra.mxu0 %v2480
        %v2482 = vand.u32 %v2135, 4294901760
        %v2483 = vsub.f32 %v2135, %v2482
        %2484 = vmatpush.msra.mxu0 %v2483
        %v2485 = vand.u32 %v2134, 4294901760
        %v2486 = vsub.f32 %v2134, %v2485
        %2487 = vmatpush.msra.mxu0 %v2486
        %v2488 = vand.u32 %v2133, 4294901760
        %v2489 = vsub.f32 %v2133, %v2488
        %2490 = vmatpush.msra.mxu0 %v2489
        %v2491 = vand.u32 %v2132, 4294901760
        %v2492 = vsub.f32 %v2132, %v2491
        %2493 = vmatpush.msra.mxu0 %v2492
        %v2494 = vand.u32 %v2131, 4294901760
        %v2495 = vsub.f32 %v2131, %v2494
        %2496 = vmatpush.msra.mxu0 %v2495
        %v2497 = vand.u32 %v2130, 4294901760
        %v2498 = vsub.f32 %v2130, %v2497
        %2499 = vmatpush.msra.mxu0 %v2498
        %v2500 = vand.u32 %v2129, 4294901760
        %v2501 = vsub.f32 %v2129, %v2500
        %2502 = vmatpush.msra.mxu0 %v2501
        %v2503 = vand.u32 %v2128, 4294901760
        %v2504 = vsub.f32 %v2128, %v2503
        %2505 = vmatpush.msra.mxu0 %v2504
        %v2506 = vand.u32 %v2127, 4294901760
        %v2507 = vsub.f32 %v2127, %v2506
        %2508 = vmatpush.msra.mxu0 %v2507
        %v2509 = vand.u32 %v2126, 4294901760
        %v2510 = vsub.f32 %v2126, %v2509
        %2511 = vmatpush.msra.mxu0 %v2510
        %v2512 = vand.u32 %v2125, 4294901760
        %v2513 = vsub.f32 %v2125, %v2512
        %2514 = vmatpush.msra.mxu0 %v2513
        %v2515 = vand.u32 %v425, 4294901760
        %v2516 = vsub.f32 %v425, %v2515
        %2517 = vmatmul.f32.gmra.mxu0 %v2516
        %v2518 = vpop.f32.mrf.mxu0
        %v2519 = vadd.f32 %v2405, %v2518
        %v2520 = vand.u32 %v426, 4294901760
        %v2521 = vsub.f32 %v426, %v2520
        %2522 = vmatmul.f32.gmra.mxu0 %v2521
        %v2523 = vpop.f32.mrf.mxu0
        %v2524 = vadd.f32 %v2409, %v2523
        %v2525 = vand.u32 %v427, 4294901760
        %v2526 = vsub.f32 %v427, %v2525
        %2527 = vmatmul.f32.gmra.mxu0 %v2526
        %v2528 = vpop.f32.mrf.mxu0
        %v2529 = vadd.f32 %v2413, %v2528
        %v2530 = vand.u32 %v428, 4294901760
        %v2531 = vsub.f32 %v428, %v2530
        %2532 = vmatmul.f32.gmra.mxu0 %v2531
        %v2533 = vpop.f32.mrf.mxu0
        %v2534 = vadd.f32 %v2417, %v2533
        %v2535 = vand.u32 %v429, 4294901760
        %v2536 = vsub.f32 %v429, %v2535
        %2537 = vmatmul.f32.gmra.mxu0 %v2536
        %v2538 = vpop.f32.mrf.mxu0
        %v2539 = vadd.f32 %v2421, %v2538
        %v2540 = vand.u32 %v430, 4294901760
        %v2541 = vsub.f32 %v430, %v2540
        %2542 = vmatmul.f32.gmra.mxu0 %v2541
        %v2543 = vpop.f32.mrf.mxu0
        %v2544 = vadd.f32 %v2425, %v2543
        %v2545 = vand.u32 %v431, 4294901760
        %v2546 = vsub.f32 %v431, %v2545
        %2547 = vmatmul.f32.gmra.mxu0 %v2546
        %v2548 = vpop.f32.mrf.mxu0
        %v2549 = vadd.f32 %v2429, %v2548
        %v2550 = vand.u32 %v432, 4294901760
        %v2551 = vsub.f32 %v432, %v2550
        %2552 = vmatmul.f32.gmra.mxu0 %v2551
        %v2553 = vpop.f32.mrf.mxu0
        %v2554 = vadd.f32 %v2433, %v2553
        %v2555 = vand.u32 %v433, 4294901760
        %v2556 = vsub.f32 %v433, %v2555
        %2557 = vmatmul.f32.gmra.mxu0 %v2556
        %v2558 = vpop.f32.mrf.mxu0
        %v2559 = vadd.f32 %v2437, %v2558
        %v2560 = vand.u32 %v434, 4294901760
        %v2561 = vsub.f32 %v434, %v2560
        %2562 = vmatmul.f32.gmra.mxu0 %v2561
        %v2563 = vpop.f32.mrf.mxu0
        %v2564 = vadd.f32 %v2441, %v2563
        %v2565 = vand.u32 %v435, 4294901760
        %v2566 = vsub.f32 %v435, %v2565
        %2567 = vmatmul.f32.gmra.mxu0 %v2566
        %v2568 = vpop.f32.mrf.mxu0
        %v2569 = vadd.f32 %v2445, %v2568
        %v2570 = vand.u32 %v436, 4294901760
        %v2571 = vsub.f32 %v436, %v2570
        %2572 = vmatmul.f32.gmra.mxu0 %v2571
        %v2573 = vpop.f32.mrf.mxu0
        %v2574 = vadd.f32 %v2449, %v2573
        %v2575 = vand.u32 %v437, 4294901760
        %v2576 = vsub.f32 %v437, %v2575
        %2577 = vmatmul.f32.gmra.mxu0 %v2576
        %v2578 = vpop.f32.mrf.mxu0
        %v2579 = vadd.f32 %v2453, %v2578
        %v2580 = vand.u32 %v438, 4294901760
        %v2581 = vsub.f32 %v438, %v2580
        %2582 = vmatmul.f32.gmra.mxu0 %v2581
        %v2583 = vpop.f32.mrf.mxu0
        %v2584 = vadd.f32 %v2457, %v2583
        %v2585 = vand.u32 %v439, 4294901760
        %v2586 = vsub.f32 %v439, %v2585
        %2587 = vmatmul.f32.gmra.mxu0 %v2586
        %v2588 = vpop.f32.mrf.mxu0
        %v2589 = vadd.f32 %v2461, %v2588
        %v2590 = vand.u32 %v440, 4294901760
        %v2591 = vsub.f32 %v440, %v2590
        %2592 = vmatmul.f32.gmra.mxu0 %v2591
        %v2593 = vpop.f32.mrf.mxu0
        %v2594 = vadd.f32 %v2465, %v2593
        %2595 = vdwg.mxu0
        %v2596 = vand.u32 %v2140, 4294901760
        %2597 = vmatpush.msra.mxu0 %v2596
        %v2598 = vand.u32 %v2139, 4294901760
        %2599 = vmatpush.msra.mxu0 %v2598
        %v2600 = vand.u32 %v2138, 4294901760
        %2601 = vmatpush.msra.mxu0 %v2600
        %v2602 = vand.u32 %v2137, 4294901760
        %2603 = vmatpush.msra.mxu0 %v2602
        %v2604 = vand.u32 %v2136, 4294901760
        %2605 = vmatpush.msra.mxu0 %v2604
        %v2606 = vand.u32 %v2135, 4294901760
        %2607 = vmatpush.msra.mxu0 %v2606
        %v2608 = vand.u32 %v2134, 4294901760
        %2609 = vmatpush.msra.mxu0 %v2608
        %v2610 = vand.u32 %v2133, 4294901760
        %2611 = vmatpush.msra.mxu0 %v2610
        %v2612 = vand.u32 %v2132, 4294901760
        %2613 = vmatpush.msra.mxu0 %v2612
        %v2614 = vand.u32 %v2131, 4294901760
        %2615 = vmatpush.msra.mxu0 %v2614
        %v2616 = vand.u32 %v2130, 4294901760
        %2617 = vmatpush.msra.mxu0 %v2616
        %v2618 = vand.u32 %v2129, 4294901760
        %2619 = vmatpush.msra.mxu0 %v2618
        %v2620 = vand.u32 %v2128, 4294901760
        %2621 = vmatpush.msra.mxu0 %v2620
        %v2622 = vand.u32 %v2127, 4294901760
        %2623 = vmatpush.msra.mxu0 %v2622
        %v2624 = vand.u32 %v2126, 4294901760
        %2625 = vmatpush.msra.mxu0 %v2624
        %v2626 = vand.u32 %v2125, 4294901760
        %2627 = vmatpush.msra.mxu0 %v2626
        %v2628 = vand.u32 %v425, 4294901760
        %v2629 = vsub.f32 %v425, %v2628
        %v2630 = vand.u32 %v2629, 4294901760
        %2631 = vmatmul.f32.gmra.mxu0 %v2630
        %v2632 = vpop.f32.mrf.mxu0
        %v2633 = vadd.f32 %v2519, %v2632
        %v2634 = vand.u32 %v426, 4294901760
        %v2635 = vsub.f32 %v426, %v2634
        %v2636 = vand.u32 %v2635, 4294901760
        %2637 = vmatmul.f32.gmra.mxu0 %v2636
        %v2638 = vpop.f32.mrf.mxu0
        %v2639 = vadd.f32 %v2524, %v2638
        %v2640 = vand.u32 %v427, 4294901760
        %v2641 = vsub.f32 %v427, %v2640
        %v2642 = vand.u32 %v2641, 4294901760
        %2643 = vmatmul.f32.gmra.mxu0 %v2642
        %v2644 = vpop.f32.mrf.mxu0
        %v2645 = vadd.f32 %v2529, %v2644
        %v2646 = vand.u32 %v428, 4294901760
        %v2647 = vsub.f32 %v428, %v2646
        %v2648 = vand.u32 %v2647, 4294901760
        %2649 = vmatmul.f32.gmra.mxu0 %v2648
        %v2650 = vpop.f32.mrf.mxu0
        %v2651 = vadd.f32 %v2534, %v2650
        %v2652 = vand.u32 %v429, 4294901760
        %v2653 = vsub.f32 %v429, %v2652
        %v2654 = vand.u32 %v2653, 4294901760
        %2655 = vmatmul.f32.gmra.mxu0 %v2654
        %v2656 = vpop.f32.mrf.mxu0
        %v2657 = vadd.f32 %v2539, %v2656
        %v2658 = vand.u32 %v430, 4294901760
        %v2659 = vsub.f32 %v430, %v2658
        %v2660 = vand.u32 %v2659, 4294901760
        %2661 = vmatmul.f32.gmra.mxu0 %v2660
        %v2662 = vpop.f32.mrf.mxu0
        %v2663 = vadd.f32 %v2544, %v2662
        %v2664 = vand.u32 %v431, 4294901760
        %v2665 = vsub.f32 %v431, %v2664
        %v2666 = vand.u32 %v2665, 4294901760
        %2667 = vmatmul.f32.gmra.mxu0 %v2666
        %v2668 = vpop.f32.mrf.mxu0
        %v2669 = vadd.f32 %v2549, %v2668
        %v2670 = vand.u32 %v432, 4294901760
        %v2671 = vsub.f32 %v432, %v2670
        %v2672 = vand.u32 %v2671, 4294901760
        %2673 = vmatmul.f32.gmra.mxu0 %v2672
        %v2674 = vpop.f32.mrf.mxu0
        %v2675 = vadd.f32 %v2554, %v2674
        %v2676 = vand.u32 %v433, 4294901760
        %v2677 = vsub.f32 %v433, %v2676
        %v2678 = vand.u32 %v2677, 4294901760
        %2679 = vmatmul.f32.gmra.mxu0 %v2678
        %v2680 = vpop.f32.mrf.mxu0
        %v2681 = vadd.f32 %v2559, %v2680
        %v2682 = vand.u32 %v434, 4294901760
        %v2683 = vsub.f32 %v434, %v2682
        %v2684 = vand.u32 %v2683, 4294901760
        %2685 = vmatmul.f32.gmra.mxu0 %v2684
        %v2686 = vpop.f32.mrf.mxu0
        %v2687 = vadd.f32 %v2564, %v2686
        %v2688 = vand.u32 %v435, 4294901760
        %v2689 = vsub.f32 %v435, %v2688
        %v2690 = vand.u32 %v2689, 4294901760
        %2691 = vmatmul.f32.gmra.mxu0 %v2690
        %v2692 = vpop.f32.mrf.mxu0
        %v2693 = vadd.f32 %v2569, %v2692
        %v2694 = vand.u32 %v436, 4294901760
        %v2695 = vsub.f32 %v436, %v2694
        %v2696 = vand.u32 %v2695, 4294901760
        %2697 = vmatmul.f32.gmra.mxu0 %v2696
        %v2698 = vpop.f32.mrf.mxu0
        %v2699 = vadd.f32 %v2574, %v2698
        %v2700 = vand.u32 %v437, 4294901760
        %v2701 = vsub.f32 %v437, %v2700
        %v2702 = vand.u32 %v2701, 4294901760
        %2703 = vmatmul.f32.gmra.mxu0 %v2702
        %v2704 = vpop.f32.mrf.mxu0
        %v2705 = vadd.f32 %v2579, %v2704
        %v2706 = vand.u32 %v438, 4294901760
        %v2707 = vsub.f32 %v438, %v2706
        %v2708 = vand.u32 %v2707, 4294901760
        %2709 = vmatmul.f32.gmra.mxu0 %v2708
        %v2710 = vpop.f32.mrf.mxu0
        %v2711 = vadd.f32 %v2584, %v2710
        %v2712 = vand.u32 %v439, 4294901760
        %v2713 = vsub.f32 %v439, %v2712
        %v2714 = vand.u32 %v2713, 4294901760
        %2715 = vmatmul.f32.gmra.mxu0 %v2714
        %v2716 = vpop.f32.mrf.mxu0
        %v2717 = vadd.f32 %v2589, %v2716
        %v2718 = vand.u32 %v440, 4294901760
        %v2719 = vsub.f32 %v440, %v2718
        %v2720 = vand.u32 %v2719, 4294901760
        %2721 = vmatmul.f32.gmra.mxu0 %v2720
        %v2722 = vpop.f32.mrf.mxu0
        %v2723 = vadd.f32 %v2594, %v2722
        %2724 = vdwg.mxu0
        %v2725 = vand.u32 %v2140, 4294901760
        %v2726 = vsub.f32 %v2140, %v2725
        %v2727 = vand.u32 %v2726, 4294901760
        %2728 = vmatpush.msra.mxu0 %v2727
        %v2729 = vand.u32 %v2139, 4294901760
        %v2730 = vsub.f32 %v2139, %v2729
        %v2731 = vand.u32 %v2730, 4294901760
        %2732 = vmatpush.msra.mxu0 %v2731
        %v2733 = vand.u32 %v2138, 4294901760
        %v2734 = vsub.f32 %v2138, %v2733
        %v2735 = vand.u32 %v2734, 4294901760
        %2736 = vmatpush.msra.mxu0 %v2735
        %v2737 = vand.u32 %v2137, 4294901760
        %v2738 = vsub.f32 %v2137, %v2737
        %v2739 = vand.u32 %v2738, 4294901760
        %2740 = vmatpush.msra.mxu0 %v2739
        %v2741 = vand.u32 %v2136, 4294901760
        %v2742 = vsub.f32 %v2136, %v2741
        %v2743 = vand.u32 %v2742, 4294901760
        %2744 = vmatpush.msra.mxu0 %v2743
        %v2745 = vand.u32 %v2135, 4294901760
        %v2746 = vsub.f32 %v2135, %v2745
        %v2747 = vand.u32 %v2746, 4294901760
        %2748 = vmatpush.msra.mxu0 %v2747
        %v2749 = vand.u32 %v2134, 4294901760
        %v2750 = vsub.f32 %v2134, %v2749
        %v2751 = vand.u32 %v2750, 4294901760
        %2752 = vmatpush.msra.mxu0 %v2751
        %v2753 = vand.u32 %v2133, 4294901760
        %v2754 = vsub.f32 %v2133, %v2753
        %v2755 = vand.u32 %v2754, 4294901760
        %2756 = vmatpush.msra.mxu0 %v2755
        %v2757 = vand.u32 %v2132, 4294901760
        %v2758 = vsub.f32 %v2132, %v2757
        %v2759 = vand.u32 %v2758, 4294901760
        %2760 = vmatpush.msra.mxu0 %v2759
        %v2761 = vand.u32 %v2131, 4294901760
        %v2762 = vsub.f32 %v2131, %v2761
        %v2763 = vand.u32 %v2762, 4294901760
        %2764 = vmatpush.msra.mxu0 %v2763
        %v2765 = vand.u32 %v2130, 4294901760
        %v2766 = vsub.f32 %v2130, %v2765
        %v2767 = vand.u32 %v2766, 4294901760
        %2768 = vmatpush.msra.mxu0 %v2767
        %v2769 = vand.u32 %v2129, 4294901760
        %v2770 = vsub.f32 %v2129, %v2769
        %v2771 = vand.u32 %v2770, 4294901760
        %2772 = vmatpush.msra.mxu0 %v2771
        %v2773 = vand.u32 %v2128, 4294901760
        %v2774 = vsub.f32 %v2128, %v2773
        %v2775 = vand.u32 %v2774, 4294901760
        %2776 = vmatpush.msra.mxu0 %v2775
        %v2777 = vand.u32 %v2127, 4294901760
        %v2778 = vsub.f32 %v2127, %v2777
        %v2779 = vand.u32 %v2778, 4294901760
        %2780 = vmatpush.msra.mxu0 %v2779
        %v2781 = vand.u32 %v2126, 4294901760
        %v2782 = vsub.f32 %v2126, %v2781
        %v2783 = vand.u32 %v2782, 4294901760
        %2784 = vmatpush.msra.mxu0 %v2783
        %v2785 = vand.u32 %v2125, 4294901760
        %v2786 = vsub.f32 %v2125, %v2785
        %v2787 = vand.u32 %v2786, 4294901760
        %2788 = vmatpush.msra.mxu0 %v2787
        %v2789 = vand.u32 %v425, 4294901760
        %2790 = vmatmul.f32.gmra.mxu0 %v2789
        %v2791 = vpop.f32.mrf.mxu0
        %v2792 = vadd.f32 %v2633, %v2791
        %v2793 = vand.u32 %v426, 4294901760
        %2794 = vmatmul.f32.gmra.mxu0 %v2793
        %v2795 = vpop.f32.mrf.mxu0
        %v2796 = vadd.f32 %v2639, %v2795
        %v2797 = vand.u32 %v427, 4294901760
        %2798 = vmatmul.f32.gmra.mxu0 %v2797
        %v2799 = vpop.f32.mrf.mxu0
        %v2800 = vadd.f32 %v2645, %v2799
        %v2801 = vand.u32 %v428, 4294901760
        %2802 = vmatmul.f32.gmra.mxu0 %v2801
        %v2803 = vpop.f32.mrf.mxu0
        %v2804 = vadd.f32 %v2651, %v2803
        %v2805 = vand.u32 %v429, 4294901760
        %2806 = vmatmul.f32.gmra.mxu0 %v2805
        %v2807 = vpop.f32.mrf.mxu0
        %v2808 = vadd.f32 %v2657, %v2807
        %v2809 = vand.u32 %v430, 4294901760
        %2810 = vmatmul.f32.gmra.mxu0 %v2809
        %v2811 = vpop.f32.mrf.mxu0
        %v2812 = vadd.f32 %v2663, %v2811
        %v2813 = vand.u32 %v431, 4294901760
        %2814 = vmatmul.f32.gmra.mxu0 %v2813
        %v2815 = vpop.f32.mrf.mxu0
        %v2816 = vadd.f32 %v2669, %v2815
        %v2817 = vand.u32 %v432, 4294901760
        %2818 = vmatmul.f32.gmra.mxu0 %v2817
        %v2819 = vpop.f32.mrf.mxu0
        %v2820 = vadd.f32 %v2675, %v2819
        %v2821 = vand.u32 %v433, 4294901760
        %2822 = vmatmul.f32.gmra.mxu0 %v2821
        %v2823 = vpop.f32.mrf.mxu0
        %v2824 = vadd.f32 %v2681, %v2823
        %v2825 = vand.u32 %v434, 4294901760
        %2826 = vmatmul.f32.gmra.mxu0 %v2825
        %v2827 = vpop.f32.mrf.mxu0
        %v2828 = vadd.f32 %v2687, %v2827
        %v2829 = vand.u32 %v435, 4294901760
        %2830 = vmatmul.f32.gmra.mxu0 %v2829
        %v2831 = vpop.f32.mrf.mxu0
        %v2832 = vadd.f32 %v2693, %v2831
        %v2833 = vand.u32 %v436, 4294901760
        %2834 = vmatmul.f32.gmra.mxu0 %v2833
        %v2835 = vpop.f32.mrf.mxu0
        %v2836 = vadd.f32 %v2699, %v2835
        %v2837 = vand.u32 %v437, 4294901760
        %2838 = vmatmul.f32.gmra.mxu0 %v2837
        %v2839 = vpop.f32.mrf.mxu0
        %v2840 = vadd.f32 %v2705, %v2839
        %v2841 = vand.u32 %v438, 4294901760
        %2842 = vmatmul.f32.gmra.mxu0 %v2841
        %v2843 = vpop.f32.mrf.mxu0
        %v2844 = vadd.f32 %v2711, %v2843
        %v2845 = vand.u32 %v439, 4294901760
        %2846 = vmatmul.f32.gmra.mxu0 %v2845
        %v2847 = vpop.f32.mrf.mxu0
        %v2848 = vadd.f32 %v2717, %v2847
        %v2849 = vand.u32 %v440, 4294901760
        %2850 = vmatmul.f32.gmra.mxu0 %v2849
        %v2851 = vpop.f32.mrf.mxu0
        %v2852 = vadd.f32 %v2723, %v2851
        %2853 = vdwg.mxu0
        %v2854 = vand.u32 %v2140, 4294901760
        %2855 = vmatpush.msra.mxu0 %v2854
        %v2856 = vand.u32 %v2139, 4294901760
        %2857 = vmatpush.msra.mxu0 %v2856
        %v2858 = vand.u32 %v2138, 4294901760
        %2859 = vmatpush.msra.mxu0 %v2858
        %v2860 = vand.u32 %v2137, 4294901760
        %2861 = vmatpush.msra.mxu0 %v2860
        %v2862 = vand.u32 %v2136, 4294901760
        %2863 = vmatpush.msra.mxu0 %v2862
        %v2864 = vand.u32 %v2135, 4294901760
        %2865 = vmatpush.msra.mxu0 %v2864
        %v2866 = vand.u32 %v2134, 4294901760
        %2867 = vmatpush.msra.mxu0 %v2866
        %v2868 = vand.u32 %v2133, 4294901760
        %2869 = vmatpush.msra.mxu0 %v2868
        %v2870 = vand.u32 %v2132, 4294901760
        %2871 = vmatpush.msra.mxu0 %v2870
        %v2872 = vand.u32 %v2131, 4294901760
        %2873 = vmatpush.msra.mxu0 %v2872
        %v2874 = vand.u32 %v2130, 4294901760
        %2875 = vmatpush.msra.mxu0 %v2874
        %v2876 = vand.u32 %v2129, 4294901760
        %2877 = vmatpush.msra.mxu0 %v2876
        %v2878 = vand.u32 %v2128, 4294901760
        %2879 = vmatpush.msra.mxu0 %v2878
        %v2880 = vand.u32 %v2127, 4294901760
        %2881 = vmatpush.msra.mxu0 %v2880
        %v2882 = vand.u32 %v2126, 4294901760
        %2883 = vmatpush.msra.mxu0 %v2882
        %v2884 = vand.u32 %v2125, 4294901760
        %2885 = vmatpush.msra.mxu0 %v2884
        %v2886 = vand.u32 %v425, 4294901760
        %2887 = vmatmul.f32.gmra.mxu0 %v2886
        %v2888 = vpop.f32.mrf.mxu0
        %v2889 = vadd.f32 %v2792, %v2888
        %v2890 = vand.u32 %v426, 4294901760
        %2891 = vmatmul.f32.gmra.mxu0 %v2890
        %v2892 = vpop.f32.mrf.mxu0
        %v2893 = vadd.f32 %v2796, %v2892
        %v2894 = vand.u32 %v427, 4294901760
        %2895 = vmatmul.f32.gmra.mxu0 %v2894
        %v2896 = vpop.f32.mrf.mxu0
        %v2897 = vadd.f32 %v2800, %v2896
        %v2898 = vand.u32 %v428, 4294901760
        %2899 = vmatmul.f32.gmra.mxu0 %v2898
        %v2900 = vpop.f32.mrf.mxu0
        %v2901 = vadd.f32 %v2804, %v2900
        %v2902 = vand.u32 %v429, 4294901760
        %2903 = vmatmul.f32.gmra.mxu0 %v2902
        %v2904 = vpop.f32.mrf.mxu0
        %v2905 = vadd.f32 %v2808, %v2904
        %v2906 = vand.u32 %v430, 4294901760
        %2907 = vmatmul.f32.gmra.mxu0 %v2906
        %v2908 = vpop.f32.mrf.mxu0
        %v2909 = vadd.f32 %v2812, %v2908
        %v2910 = vand.u32 %v431, 4294901760
        %2911 = vmatmul.f32.gmra.mxu0 %v2910
        %v2912 = vpop.f32.mrf.mxu0
        %v2913 = vadd.f32 %v2816, %v2912
        %v2914 = vand.u32 %v432, 4294901760
        %2915 = vmatmul.f32.gmra.mxu0 %v2914
        %v2916 = vpop.f32.mrf.mxu0
        %v2917 = vadd.f32 %v2820, %v2916
        %v2918 = vand.u32 %v433, 4294901760
        %2919 = vmatmul.f32.gmra.mxu0 %v2918
        %v2920 = vpop.f32.mrf.mxu0
        %v2921 = vadd.f32 %v2824, %v2920
        %v2922 = vand.u32 %v434, 4294901760
        %2923 = vmatmul.f32.gmra.mxu0 %v2922
        %v2924 = vpop.f32.mrf.mxu0
        %v2925 = vadd.f32 %v2828, %v2924
        %v2926 = vand.u32 %v435, 4294901760
        %2927 = vmatmul.f32.gmra.mxu0 %v2926
        %v2928 = vpop.f32.mrf.mxu0
        %v2929 = vadd.f32 %v2832, %v2928
        %v2930 = vand.u32 %v436, 4294901760
        %2931 = vmatmul.f32.gmra.mxu0 %v2930
        %v2932 = vpop.f32.mrf.mxu0
        %v2933 = vadd.f32 %v2836, %v2932
        %v2934 = vand.u32 %v437, 4294901760
        %2935 = vmatmul.f32.gmra.mxu0 %v2934
        %v2936 = vpop.f32.mrf.mxu0
        %v2937 = vadd.f32 %v2840, %v2936
        %v2938 = vand.u32 %v438, 4294901760
        %2939 = vmatmul.f32.gmra.mxu0 %v2938
        %v2940 = vpop.f32.mrf.mxu0
        %v2941 = vadd.f32 %v2844, %v2940
        %v2942 = vand.u32 %v439, 4294901760
        %2943 = vmatmul.f32.gmra.mxu0 %v2942
        %v2944 = vpop.f32.mrf.mxu0
        %v2945 = vadd.f32 %v2848, %v2944
        %v2946 = vand.u32 %v440, 4294901760
        %2947 = vmatmul.f32.gmra.mxu0 %v2946
        %v2948 = vpop.f32.mrf.mxu0
        %v2949 = vadd.f32 %v2852, %v2948
        %2950 = vdwg.mxu0
        %2951 = vst [vmem:[%s420] sm:$0xff] %v2889
        %2952 = vst [vmem:[%s420 + $0x8] sm:$0xff] %v2893
        %2953 = vst [vmem:[%s420 + $0x10] sm:$0xff] %v2897
        %2954 = vst [vmem:[%s420 + $0x18] sm:$0xff] %v2901
        %2955 = vst [vmem:[%s420 + $0x20] sm:$0xff] %v2905
        %2956 = vst [vmem:[%s420 + $0x28] sm:$0xff] %v2909
        %2957 = vst [vmem:[%s420 + $0x30] sm:$0xff] %v2913
        %2958 = vst [vmem:[%s420 + $0x38] sm:$0xff] %v2917
        %2959 = vst [vmem:[%s420 + $0x40] sm:$0xff] %v2921
        %2960 = vst [vmem:[%s420 + $0x48] sm:$0xff] %v2925
        %2961 = vst [vmem:[%s420 + $0x50] sm:$0xff] %v2929
        %2962 = vst [vmem:[%s420 + $0x58] sm:$0xff] %v2933
        %2963 = vst [vmem:[%s420 + $0x60] sm:$0xff] %v2937
        %2964 = vst [vmem:[%s420 + $0x68] sm:$0xff] %v2941
        %2965 = vst [vmem:[%s420 + $0x70] sm:$0xff] %v2945
        %2966 = vst [vmem:[%s420 + $0x78] sm:$0xff] %v2949
        %s2967 = sand.u32 %s192, 1
        %s2968 = scalar_lea.sflag [#allocation4], %s2967
        %s2969 = sand.u32 %s192, 1
        %s2970 = smul.addr %s2969, 128
        %s2971 = scalar_lea.vmem [#allocation10], %s2970
        %s2972 = sand.u32 %s32, 1
        %s2973 = scalar_lea.sflag [#allocation12], %s2972
        %s2974 = sand.u32 %s218, 1
        %s2975 = smul.addr %s2974, 128
        %s2976 = scalar_lea.vmem [#allocation11], %s2975
        %s2977 = sand.u32 %s32, 1
        %s2978 = scalar_lea.sflag [#allocation12], %s2977
        %s2979 = sand.u32 %s244, 1
        %s2980 = smul.addr %s2979, 128
        %s2981 = scalar_lea.vmem [#allocation13], %s2980
        // Predicated region
        $region65: #{tpu_custom_call.1} parent=47 // pred_check
          %p2982 = pneg %p202
        $region66: #{tpu_custom_call.1} parent=47 // pred_check_branch
          %2984 = sbr.rel (%p2982) target = $region68
        $region67: #{tpu_custom_call.1} parent=47 // pred_region
          %s2985 = smul.u32 16, %s32
          %2987 = vsyncadd %s2968, 0
          %s2988 = smul.addr %s2985, 8
          %s2989 = scalar_lea.hbm %s7, %s2988
          %s2990 = sshll.u32 %s2971, 4
          %s2991 = int_to_ptr.vmem [resolvable:$true] %s2990
          %s2992 = sshll.u32 %s2989, 4
          %s2993 = int_to_ptr.hbm [resolvable:$true] %s2992
          %2998 = dma.vmem_to_hbm [thread:$0]  %s2991, 2048, %s2993, %s2968, 128, 128, 8
        $region68: #{tpu_custom_call.1} parent=47 // pred_fallthru
          _
        // Predicated region
        $region69: #{tpu_custom_call.1} parent=47 // pred_check
          %p2999 = pneg %p228
        $region70: #{tpu_custom_call.1} parent=47 // pred_check_branch
          %3001 = sbr.rel (%p2999) target = $region72
        $region71: #{tpu_custom_call.1} parent=47 // pred_region
          %s3002 = smul.u32 16, %s32
          %3004 = vsyncadd %s2973, 0
          %s3005 = smul.addr %s3002, 8
          %s3006 = scalar_lea.hbm %s8, %s3005
          %s3007 = sshll.u32 %s2976, 4
          %s3008 = int_to_ptr.vmem [resolvable:$true] %s3007
          %s3009 = sshll.u32 %s3006, 4
          %s3010 = int_to_ptr.hbm [resolvable:$true] %s3009
          %3015 = dma.vmem_to_hbm [thread:$0]  %s3008, 2048, %s3010, %s2973, 128, 128, 8
        $region72: #{tpu_custom_call.1} parent=47 // pred_fallthru
          _
        // Predicated region
        $region73: #{tpu_custom_call.1} parent=47 // pred_check
          %p3016 = pneg %p254
        $region74: #{tpu_custom_call.1} parent=47 // pred_check_branch
          %3018 = sbr.rel (%p3016) target = $region76
        $region75: #{tpu_custom_call.1} parent=47 // pred_region
          %s3019 = smul.u32 16, %s32
          %3021 = vsyncadd %s2978, 0
          %s3022 = smul.addr %s3019, 8
          %s3023 = scalar_lea.hbm %s9, %s3022
          %s3024 = sshll.u32 %s2981, 4
          %s3025 = int_to_ptr.vmem [resolvable:$true] %s3024
          %s3026 = sshll.u32 %s3023, 4
          %s3027 = int_to_ptr.hbm [resolvable:$true] %s3026
          %3032 = dma.vmem_to_hbm [thread:$0]  %s3025, 2048, %s3027, %s2978, 128, 128, 8
        $region76: #{tpu_custom_call.1} parent=47 // pred_fallthru
          _
      $region48: #{tpu_custom_call.1} parent=5 // pred_fallthru
        _
      %p3033 = scmp.le.s32.totalorder 2, %s27
      // Predicated region
      $region77: #{tpu_custom_call.1} parent=5 // pred_check
        %p3034 = pneg %p3033
      $region78: #{tpu_custom_call.1} parent=5 // pred_check_branch
        %3036 = sbr.rel (%p3034) target = $region80
      $region79: #{tpu_custom_call.1} parent=5 // pred_region
        %s3037 = ssub.s32 %s27, 2
        // Predicated region
        $region81: #{tpu_custom_call.1} parent=79 // pred_check
          %p3038 = pneg %p208
        $region82: #{tpu_custom_call.1} parent=79 // pred_check_branch
          %3040 = sbr.rel (%p3038) target = $region84
        $region83: #{tpu_custom_call.1} parent=79 // pred_region
          %s3041 = sand.u32 %s193, 1
          %s3042 = scalar_lea.sflag [#allocation4], %s3041
          %s3043 = sand.u32 %s193, 1
          %s3044 = smul.addr %s3043, 128
          %s3045 = scalar_lea.vmem [#allocation10], %s3044
          %3047 = dma.done %s3042, 2048
        $region84: #{tpu_custom_call.1} parent=79 // pred_fallthru
          _
        // Predicated region
        $region85: #{tpu_custom_call.1} parent=79 // pred_check
          %p3048 = pneg %p234
        $region86: #{tpu_custom_call.1} parent=79 // pred_check_branch
          %3050 = sbr.rel (%p3048) target = $region88
        $region87: #{tpu_custom_call.1} parent=79 // pred_region
          %s3051 = sand.u32 %s33, 1
          %s3052 = scalar_lea.sflag [#allocation12], %s3051
          %s3053 = sand.u32 %s219, 1
          %s3054 = smul.addr %s3053, 128
          %s3055 = scalar_lea.vmem [#allocation11], %s3054
          %3057 = dma.done %s3052, 2048
        $region88: #{tpu_custom_call.1} parent=79 // pred_fallthru
          _
        // Predicated region
        $region89: #{tpu_custom_call.1} parent=79 // pred_check
          %p3058 = pneg %p260
        $region90: #{tpu_custom_call.1} parent=79 // pred_check_branch
          %3060 = sbr.rel (%p3058) target = $region92
        $region91: #{tpu_custom_call.1} parent=79 // pred_region
          %s3061 = sand.u32 %s33, 1
          %s3062 = scalar_lea.sflag [#allocation12], %s3061
          %s3063 = sand.u32 %s245, 1
          %s3064 = smul.addr %s3063, 128
          %s3065 = scalar_lea.vmem [#allocation13], %s3064
          %3067 = dma.done %s3062, 2048
        $region92: #{tpu_custom_call.1} parent=79 // pred_fallthru
          _
      $region80: #{tpu_custom_call.1} parent=5 // pred_fallthru
        _
    $region6: #{tpu_custom_call.1} parent=1 // loop_footer
      %s31 = sadd.s32 1, %s27
    $region7: #{tpu_custom_call.1} parent=1 // loop_footer_branch
      %26 = sbr.rel target = $region3
    $region8: #{tpu_custom_call.1} parent=1 // loop_exit
      _
    %3068 = vsyncpa [#allocation3], 1
    %s3069 = scalar_lea.sflag [#allocation3], 1
    %3070 = vsyncpa %s3069, 1
    %3071 = vsyncpa [#allocation6], 1
    %3072 = vsyncpa [#allocation9], 1
    %3073 = vsyncpa [#allocation4], 1
    %s3074 = scalar_lea.sflag [#allocation4], 1
    %3075 = vsyncpa %s3074, 1
    %3076 = vsyncpa [#allocation12], 1
    %s3077 = scalar_lea.sflag [#allocation12], 1
    %3078 = vsyncpa %s3077, 1

</llo_original>
